<compile_context>
chip_gen: v7x
topology: tpu7x:2x2x1
jax: 0.10.0
libtpu: 0.0.40
codegen_flags: <defaults>
</compile_context>

<pallas_src>
import jax
import jax.numpy as jnp
from jax import lax
from jax.experimental import pallas as pl
from jax.experimental.pallas import tpu as pltpu


# ---------------------------------------------------------------------------
# Pallas kernels
# ---------------------------------------------------------------------------
def _conv_relu_pool_kernel(p_ref, wt_ref, b_ref, o_ref):
    """Fused Conv3x3 (im2col matmul) + bias + ReLU + MaxPool3x3(stride 3),
    transposed so pooled positions are the lane axis.

    p_ref : (K, 9*TT)  patch columns; column = (pool offset d, position t),
                       rows = the 3x3xCin conv patch in (kh, kw, cin) order.
    wt_ref: (Cout, K)  conv weight, transposed.
    b_ref : (Cout, 1)  conv bias.
    o_ref : (Cout, TT) pooled activation columns (channel-major).
    """
    tt = o_ref.shape[1]
    n_off = p_ref.shape[1] // tt                     # 9 pool-window offsets
    # One long MXU stream over all 9 pool offsets (review item 2).
    y = jnp.dot(wt_ref[...], p_ref[...], preferred_element_type=jnp.float32)
    m = y[:, 0:tt]
    for d in range(1, n_off):                        # lane-tile-aligned slices -> VPU max
        m = jnp.maximum(m, y[:, d * tt:(d + 1) * tt])
    # max_d relu(x_d + b) == relu(max_d(x_d) + b): bias/ReLU hoisted out of the max.
    o_ref[...] = jnp.maximum(m + b_ref[...], 0.0)


def _conv_pool_linear_softmax_kernel(p_ref, w_ref, b_ref, wl_ref, bl_ref, o_ref):
    """Stage-3 fused kernel: Conv+ReLU+Pool -> Linear(576,10) -> Softmax.

    p_ref : (9*T3, K)  patches, rows ordered (pool offset d, spatial pos, batch).
    w_ref : (K, C)     conv weight; b_ref: (1, C) conv bias.
    wl_ref: (9*C, NC)  Linear weight permuted to (pos, channel)-major rows.
    bl_ref: (1, NC)    Linear bias.
    o_ref : (B, NC)    softmax probabilities.
    """
    bsz, _ = o_ref.shape
    t3 = p_ref.shape[0] // 9
    npos = t3 // bsz
    # Conv for all 9 pool offsets in one MXU stream, then pool via VPU max.
    y = jnp.dot(p_ref[...], w_ref[...], preferred_element_type=jnp.float32)
    m = y[0:t3, :]
    for d in range(1, 9):
        m = jnp.maximum(m, y[d * t3:(d + 1) * t3, :])
    feat = jnp.maximum(m + b_ref[...], 0.0)          # (T3, C), rows (pos, b)

    # Single (B, 576) @ (576, NC) dot (review item 7): one small in-kernel
    # relayout of feat instead of 9 tiny per-position matmuls.
    x = jnp.concatenate(
        [feat[pos * bsz:(pos + 1) * bsz, :] for pos in range(npos)], axis=1)
    logits = jnp.dot(x, wl_ref[...], preferred_element_type=jnp.float32)
    logits = logits + bl_ref[...]

    mx = jnp.max(logits, axis=-1, keepdims=True)
    e = jnp.exp(logits - mx)
    s = jnp.sum(e, axis=-1, keepdims=True)
    inv = pl.reciprocal(s, approx=True)
    inv = inv * (2.0 - s * inv)                      # one Newton step -> ~f32 exact
    o_ref[...] = e * inv


# ---------------------------------------------------------------------------
# JAX glue + Pallas wrappers
# ---------------------------------------------------------------------------
def _conv_stage_patches(xc, hp, wp, tt, ntiles):
    """Transposed pool-window im2col for one conv stage.

    xc: (Cin, B, H, W) channel-major activation.
    Returns (ntiles, 9*Cin, 9*tt) f32: for tile i the columns are ordered
    (pool-window offset d = dh*3+dw, local position); positions are (b, ph, pw)
    row-major, zero-padded to ntiles*tt; rows are the 3x3xCin conv patch
    flattened (kh, kw, cin) (matching w.reshape(9*Cin, Cout)).
    """
    cin, bsz, _, _ = xc.shape
    t_total = bsz * hp * wp
    t_pad = ntiles * tt
    cache = {}

    def plane(rh, rw):                               # (Cin, t_pad) shifted/subsampled plane
        if (rh, rw) not in cache:
            p = xc[:, :, rh:rh + 3 * hp:3, rw:rw + 3 * wp:3].reshape(cin, t_total)
            if t_pad > t_total:
                p = jnp.pad(p, ((0, 0), (0, t_pad - t_total)))
            cache[(rh, rw)] = p
        return cache[(rh, rw)]

    tiles = []
    for i in range(ntiles):
        cols = []
        for dh in range(3):
            for dw in range(3):
                taps = [plane(dh + kh, dw + kw)[:, i * tt:(i + 1) * tt]
                        for kh in range(3) for kw in range(3)]
                cols.append(jnp.concatenate(taps, axis=0))      # (9*Cin, tt)
        tiles.append(jnp.concatenate(cols, axis=1))             # (9*Cin, 9*tt)
    return jnp.stack(tiles, axis=0)                              # (ntiles, 9*Cin, 9*tt)


def conv_relu_pool(xc, w, b, *, row_blocks=4):
    """One pipe: Conv2d(3x3, VALID) -> ReLU -> MaxPool2d(3), channel-major.

    xc: (Cin, B, H, W) -> (Cout, B, hp, wp).
    """
    cin, bsz, hgt, wid = xc.shape
    cout = w.shape[-1]
    hp, wp = (hgt - 2) // 3, (wid - 2) // 3
    t_total = bsz * hp * wp
    k = 9 * cin
    # Lane-dense tiles in multiples of 128; row_blocks=4 gives v7x's two
    # TensorCores two pipelined steps each (item 3) while tiles stay large
    # (>=640 lanes for stage 1) so per-step overhead stays amortized.
    ntiles = max(1, min(row_blocks, pl.cdiv(t_total, 128)))
    tt = 128 * pl.cdiv(pl.cdiv(t_total, ntiles), 128)
    ntiles = pl.cdiv(t_total, tt)
    patches = _conv_stage_patches(xc, hp, wp, tt, ntiles)        # (ntiles, K, 9*tt)
    wt = jnp.transpose(w.reshape(k, cout))                       # (Cout, K)

    out = pl.pallas_call(
        _conv_relu_pool_kernel,
        out_shape=jax.ShapeDtypeStruct((cout, ntiles * tt), jnp.float32),
        grid=(ntiles,),
        in_specs=[
            pl.BlockSpec((None, k, 9 * tt), lambda i: (i, 0, 0)),
            pl.BlockSpec((cout, k), lambda i: (0, 0)),
            pl.BlockSpec((cout, 1), lambda i: (0, 0)),
        ],
        out_specs=pl.BlockSpec((cout, tt), lambda i: (0, i)),
        compiler_params=pltpu.CompilerParams(dimension_semantics=("parallel",)),
    )(patches, wt, b.reshape(cout, 1))
    return out[:, :t_total].reshape(cout, bsz, hp, wp)


def conv_pool_linear_softmax(xc, w, b, w_lin, b_lin):
    """Last pipe fused with the predictor: Conv+ReLU+Pool -> Linear -> Softmax.

    xc: (Cin, B, H, W) channel-major -> (B, num_classes) probabilities.
    """
    cin, bsz, hgt, wid = xc.shape
    cout = w.shape[-1]
    hp, wp = (hgt - 2) // 3, (wid - 2) // 3
    npos = hp * wp
    t3 = npos * bsz
    k = 9 * cin
    nc = w_lin.shape[-1]

    cache = {}

    def plane(rh, rw):                               # (Cin, T3), positions (ph, pw, b)
        if (rh, rw) not in cache:
            p = xc[:, :, rh:rh + 3 * hp:3, rw:rw + 3 * wp:3]
            cache[(rh, rw)] = jnp.transpose(p, (0, 2, 3, 1)).reshape(cin, t3)
        return cache[(rh, rw)]

    blocks = []
    for dh in range(3):
        for dw in range(3):
            blk = jnp.concatenate([plane(dh + kh, dw + kw)
                                   for kh in range(3) for kw in range(3)], axis=0)
            blocks.append(blk.T)                                 # (T3, K)
    patches = jnp.concatenate(blocks, axis=0)                    # (9*T3, K)

    # PyTorch flattens NCHW: feature index = c*npos + pos.  The kernel flattens
    # feat (pos-major rows) to x[b, pos*Cout + c], so permute the Linear weight.
    wlp = (w_lin.reshape(cout, npos, nc)
           .transpose(1, 0, 2)
           .reshape(npos * cout, nc))

    vmem = pltpu.MemorySpace.VMEM                    # explicit residency (item 8)
    return pl.pallas_call(
        _conv_pool_linear_softmax_kernel,
        out_shape=jax.ShapeDtypeStruct((bsz, nc), jnp.float32),
        in_specs=[pl.BlockSpec(memory_space=vmem)] * 5,
        out_specs=pl.BlockSpec(memory_space=vmem),
    )(patches, w.reshape(k, cout), b.reshape(1, cout), wlp, b_lin.reshape(1, nc))


# ---------------------------------------------------------------------------
# Model
# ---------------------------------------------------------------------------
def init_params(key, num_classes=10):
    ks = jax.random.split(key, 8)
    convs = []
    chans = [(3, 8), (8, 32), (32, 64)]
    for idx, (cin, cout) in enumerate(chans):
        w = 0.1 * jax.random.normal(ks[2 * idx], (3, 3, cin, cout), jnp.float32)
        b = 0.1 * jax.random.normal(ks[2 * idx + 1], (cout,), jnp.float32)
        convs.append((w, b))
    w_lin = 0.05 * jax.random.normal(ks[6], (576, num_classes), jnp.float32)
    b_lin = 0.05 * jax.random.normal(ks[7], (num_classes,), jnp.float32)
    return {"convs": convs, "w_lin": w_lin, "b_lin": b_lin}


@jax.jit
def forward_pallas(x_nchw, params):
    xc = jnp.transpose(x_nchw, (1, 0, 2, 3))         # NCHW -> channel-major (C, B, H, W)
    (w1, b1), (w2, b2), (w3, b3) = params["convs"]
    xc = conv_relu_pool(xc, w1, b1)                  # (8,  B, 35, 35)
    xc = conv_relu_pool(xc, w2, b2)                  # (32, B, 11, 11)
    return conv_pool_linear_softmax(xc, w3, b3, params["w_lin"], params["b_lin"])


def forward_reference(x_nchw, params):
    """Pure-JAX reference for correctness checking."""
    x = jnp.transpose(x_nchw, (0, 2, 3, 1))
    for w, b in params["convs"]:
        x = lax.conv_general_dilated(
            x, w, (1, 1), "VALID",
            dimension_numbers=("NHWC", "HWIO", "NHWC"))
        x = jnp.maximum(x + b, 0.0)
        x = lax.reduce_window(x, -jnp.inf, lax.max,
                              (1, 3, 3, 1), (1, 3, 3, 1), "VALID")
    bsz = x.shape[0]
    feats = jnp.transpose(x, (0, 3, 1, 2)).reshape(bsz, -1)   # PyTorch view(B,-1) order
    logits = feats @ params["w_lin"] + params["b_lin"]
    return jax.nn.softmax(logits, axis=1)


if __name__ == "__main__":
    key = jax.random.PRNGKey(0)
    k_x, k_p = jax.random.split(key)
    # Linear(576, 10) forces a 3x3x64 feature map after the three pipes;
    # the smallest compatible input is 107x107 (107->105->35->33->11->9->3).
    x = jax.random.normal(k_x, (2, 3, 107, 107), jnp.float32)   # NCHW, batch=2
    params = init_params(k_p, num_classes=10)

    out = jax.block_until_ready(forward_pallas(x, params))
    assert out.shape == (2, 10)

    ref = forward_reference(x, params)
    assert jnp.allclose(out, ref, atol=2e-3), "Pallas output mismatch vs reference"
    assert jnp.allclose(jnp.sum(out, axis=1), 1.0, atol=2e-3)

    print("KERNEL_OK")
</pallas_src>

<mosaic_0001>
module attributes {stable_mosaic.version = 11 : i64} {
  func.func @_conv_relu_pool_kernel(%arg0: i32, %arg1: memref<1x27x5760xf32, #tpu.memory_space<vmem>>, %arg2: memref<8x27xf32, #tpu.memory_space<vmem>>, %arg3: memref<8x1xf32, #tpu.memory_space<vmem>>, %arg4: memref<8x640xf32, #tpu.memory_space<vmem>>) attributes {dimension_semantics = [#tpu.dimension_semantics<parallel>], iteration_bounds = array<i64: 4>, scalar_prefetch = 0 : i64, scratch_operands = 0 : i64, tpu.core_type = #tpu.core_type<tc>, window_params = [{transform_indices = @transform_0, window_bounds = array<i64: 1, 27, 5760>}, {pipeline_mode = #tpu.pipeline_mode<synchronous>, transform_indices = @transform_1, window_bounds = array<i64: 8, 27>}, {pipeline_mode = #tpu.pipeline_mode<synchronous>, transform_indices = @transform_2, window_bounds = array<i64: 8, 1>}, {transform_indices = @transform_3, window_bounds = array<i64: 8, 640>}]} {
    %c0 = arith.constant 0 : index
    %c0_0 = arith.constant 0 : index
    %0 = vector.load %arg2[%c0, %c0_0] : memref<8x27xf32, #tpu.memory_space<vmem>>, vector<8x27xf32>
    %c0_1 = arith.constant 0 : index
    %c0_2 = arith.constant 0 : index
    %c0_3 = arith.constant 0 : index
    %1 = vector.load %arg1[%c0_1, %c0_2, %c0_3] : memref<1x27x5760xf32, #tpu.memory_space<vmem>>, vector<1x27x5760xf32>
    %2 = vector.shape_cast %1 : vector<1x27x5760xf32> to vector<27x5760xf32>
    %cst = arith.constant dense<0.000000e+00> : vector<8x5760xf32>
    %3 = tpu.matmul %0, %2, %cst {dimension_numbers = #tpu.dot_dimension_numbers<[1], [0], [0], [1], [0, 0, 1, 1], [], []>} : vector<8x27xf32>, vector<27x5760xf32>, vector<8x5760xf32> -> vector<8x5760xf32>
    %4 = vector.extract_strided_slice %3 {offsets = [0, 0], sizes = [8, 640], strides = [1, 1]} : vector<8x5760xf32> to vector<8x640xf32>
    %5 = vector.extract_strided_slice %3 {offsets = [0, 640], sizes = [8, 640], strides = [1, 1]} : vector<8x5760xf32> to vector<8x640xf32>
    %6 = arith.maximumf %4, %5 : vector<8x640xf32>
    %7 = vector.extract_strided_slice %3 {offsets = [0, 1280], sizes = [8, 640], strides = [1, 1]} : vector<8x5760xf32> to vector<8x640xf32>
    %8 = arith.maximumf %6, %7 : vector<8x640xf32>
    %9 = vector.extract_strided_slice %3 {offsets = [0, 1920], sizes = [8, 640], strides = [1, 1]} : vector<8x5760xf32> to vector<8x640xf32>
    %10 = arith.maximumf %8, %9 : vector<8x640xf32>
    %11 = vector.extract_strided_slice %3 {offsets = [0, 2560], sizes = [8, 640], strides = [1, 1]} : vector<8x5760xf32> to vector<8x640xf32>
    %12 = arith.maximumf %10, %11 : vector<8x640xf32>
    %13 = vector.extract_strided_slice %3 {offsets = [0, 3200], sizes = [8, 640], strides = [1, 1]} : vector<8x5760xf32> to vector<8x640xf32>
    %14 = arith.maximumf %12, %13 : vector<8x640xf32>
    %15 = vector.extract_strided_slice %3 {offsets = [0, 3840], sizes = [8, 640], strides = [1, 1]} : vector<8x5760xf32> to vector<8x640xf32>
    %16 = arith.maximumf %14, %15 : vector<8x640xf32>
    %17 = vector.extract_strided_slice %3 {offsets = [0, 4480], sizes = [8, 640], strides = [1, 1]} : vector<8x5760xf32> to vector<8x640xf32>
    %18 = arith.maximumf %16, %17 : vector<8x640xf32>
    %19 = vector.extract_strided_slice %3 {offsets = [0, 5120], sizes = [8, 640], strides = [1, 1]} : vector<8x5760xf32> to vector<8x640xf32>
    %20 = arith.maximumf %18, %19 : vector<8x640xf32>
    %c0_4 = arith.constant 0 : index
    %c0_5 = arith.constant 0 : index
    %21 = vector.load %arg3[%c0_4, %c0_5] : memref<8x1xf32, #tpu.memory_space<vmem>>, vector<8x1xf32>
    %22 = vector.broadcast %21 : vector<8x1xf32> to vector<8x640xf32>
    %23 = arith.addf %20, %22 : vector<8x640xf32>
    %cst_6 = arith.constant 0.000000e+00 : f32
    %24 = vector.broadcast %cst_6 : f32 to vector<8x640xf32>
    %25 = arith.maximumf %23, %24 : vector<8x640xf32>
    %c0_7 = arith.constant 0 : index
    %c0_8 = arith.constant 0 : index
    %26 = vector.load %arg4[%c0_7, %c0_8] : memref<8x640xf32, #tpu.memory_space<vmem>>, vector<8x640xf32>
    tpu.vector_store %arg4[%c0_7, %c0_8], %25 {strides = array<i32>} : memref<8x640xf32, #tpu.memory_space<vmem>>, vector<8x640xf32>,
    return
  }
  func.func @transform_0(%arg0: i32) -> (i32, i32, i32) {
    %c0_i32 = arith.constant 0 : i32
    %c0_i32_0 = arith.constant 0 : i32
    %c0_i32_1 = arith.constant 0 : i32
    return %arg0, %c0_i32, %c0_i32_0 : i32, i32, i32
  }
  func.func @transform_1(%arg0: i32) -> (i32, i32) {
    %c0_i32 = arith.constant 0 : i32
    %c0_i32_0 = arith.constant 0 : i32
    %c0_i32_1 = arith.constant 0 : i32
    return %c0_i32, %c0_i32_0 : i32, i32
  }
  func.func @transform_2(%arg0: i32) -> (i32, i32) {
    %c0_i32 = arith.constant 0 : i32
    %c0_i32_0 = arith.constant 0 : i32
    %c0_i32_1 = arith.constant 0 : i32
    return %c0_i32, %c0_i32_0 : i32, i32
  }
  func.func @transform_3(%arg0: i32) -> (i32, i32) {
    %c0_i32 = arith.constant 0 : i32
    %c0_i32_0 = arith.constant 0 : i32
    return %c0_i32, %arg0 : i32, i32
  }
}

module attributes {stable_mosaic.version = 11 : i64} {
  func.func @_conv_relu_pool_kernel(%arg0: i32, %arg1: memref<1x72x1152xf32, #tpu.memory_space<vmem>>, %arg2: memref<32x72xf32, #tpu.memory_space<vmem>>, %arg3: memref<32x1xf32, #tpu.memory_space<vmem>>, %arg4: memref<32x128xf32, #tpu.memory_space<vmem>>) attributes {dimension_semantics = [#tpu.dimension_semantics<parallel>], iteration_bounds = array<i64: 2>, scalar_prefetch = 0 : i64, scratch_operands = 0 : i64, tpu.core_type = #tpu.core_type<tc>, window_params = [{transform_indices = @transform_0, window_bounds = array<i64: 1, 72, 1152>}, {pipeline_mode = #tpu.pipeline_mode<synchronous>, transform_indices = @transform_1, window_bounds = array<i64: 32, 72>}, {pipeline_mode = #tpu.pipeline_mode<synchronous>, transform_indices = @transform_2, window_bounds = array<i64: 32, 1>}, {transform_indices = @transform_3, window_bounds = array<i64: 32, 128>}]} {
    %c0 = arith.constant 0 : index
    %c0_0 = arith.constant 0 : index
    %0 = vector.load %arg2[%c0, %c0_0] : memref<32x72xf32, #tpu.memory_space<vmem>>, vector<32x72xf32>
    %c0_1 = arith.constant 0 : index
    %c0_2 = arith.constant 0 : index
    %c0_3 = arith.constant 0 : index
    %1 = vector.load %arg1[%c0_1, %c0_2, %c0_3] : memref<1x72x1152xf32, #tpu.memory_space<vmem>>, vector<1x72x1152xf32>
    %2 = vector.shape_cast %1 : vector<1x72x1152xf32> to vector<72x1152xf32>
    %cst = arith.constant dense<0.000000e+00> : vector<32x1152xf32>
    %3 = tpu.matmul %0, %2, %cst {dimension_numbers = #tpu.dot_dimension_numbers<[1], [0], [0], [1], [0, 0, 1, 1], [], []>} : vector<32x72xf32>, vector<72x1152xf32>, vector<32x1152xf32> -> vector<32x1152xf32>
    %4 = vector.extract_strided_slice %3 {offsets = [0, 0], sizes = [32, 128], strides = [1, 1]} : vector<32x1152xf32> to vector<32x128xf32>
    %5 = vector.extract_strided_slice %3 {offsets = [0, 128], sizes = [32, 128], strides = [1, 1]} : vector<32x1152xf32> to vector<32x128xf32>
    %6 = arith.maximumf %4, %5 : vector<32x128xf32>
    %7 = vector.extract_strided_slice %3 {offsets = [0, 256], sizes = [32, 128], strides = [1, 1]} : vector<32x1152xf32> to vector<32x128xf32>
    %8 = arith.maximumf %6, %7 : vector<32x128xf32>
    %9 = vector.extract_strided_slice %3 {offsets = [0, 384], sizes = [32, 128], strides = [1, 1]} : vector<32x1152xf32> to vector<32x128xf32>
    %10 = arith.maximumf %8, %9 : vector<32x128xf32>
    %11 = vector.extract_strided_slice %3 {offsets = [0, 512], sizes = [32, 128], strides = [1, 1]} : vector<32x1152xf32> to vector<32x128xf32>
    %12 = arith.maximumf %10, %11 : vector<32x128xf32>
    %13 = vector.extract_strided_slice %3 {offsets = [0, 640], sizes = [32, 128], strides = [1, 1]} : vector<32x1152xf32> to vector<32x128xf32>
    %14 = arith.maximumf %12, %13 : vector<32x128xf32>
    %15 = vector.extract_strided_slice %3 {offsets = [0, 768], sizes = [32, 128], strides = [1, 1]} : vector<32x1152xf32> to vector<32x128xf32>
    %16 = arith.maximumf %14, %15 : vector<32x128xf32>
    %17 = vector.extract_strided_slice %3 {offsets = [0, 896], sizes = [32, 128], strides = [1, 1]} : vector<32x1152xf32> to vector<32x128xf32>
    %18 = arith.maximumf %16, %17 : vector<32x128xf32>
    %19 = vector.extract_strided_slice %3 {offsets = [0, 1024], sizes = [32, 128], strides = [1, 1]} : vector<32x1152xf32> to vector<32x128xf32>
    %20 = arith.maximumf %18, %19 : vector<32x128xf32>
    %c0_4 = arith.constant 0 : index
    %c0_5 = arith.constant 0 : index
    %21 = vector.load %arg3[%c0_4, %c0_5] : memref<32x1xf32, #tpu.memory_space<vmem>>, vector<32x1xf32>
    %22 = vector.broadcast %21 : vector<32x1xf32> to vector<32x128xf32>
    %23 = arith.addf %20, %22 : vector<32x128xf32>
    %cst_6 = arith.constant 0.000000e+00 : f32
    %24 = vector.broadcast %cst_6 : f32 to vector<32x128xf32>
    %25 = arith.maximumf %23, %24 : vector<32x128xf32>
    %c0_7 = arith.constant 0 : index
    %c0_8 = arith.constant 0 : index
    %26 = vector.load %arg4[%c0_7, %c0_8] : memref<32x128xf32, #tpu.memory_space<vmem>>, vector<32x128xf32>
    tpu.vector_store %arg4[%c0_7, %c0_8], %25 {strides = array<i32>} : memref<32x128xf32, #tpu.memory_space<vmem>>, vector<32x128xf32>,
    return
  }
  func.func @transform_0(%arg0: i32) -> (i32, i32, i32) {
    %c0_i32 = arith.constant 0 : i32
    %c0_i32_0 = arith.constant 0 : i32
    %c0_i32_1 = arith.constant 0 : i32
    return %arg0, %c0_i32, %c0_i32_0 : i32, i32, i32
  }
  func.func @transform_1(%arg0: i32) -> (i32, i32) {
    %c0_i32 = arith.constant 0 : i32
    %c0_i32_0 = arith.constant 0 : i32
    %c0_i32_1 = arith.constant 0 : i32
    return %c0_i32, %c0_i32_0 : i32, i32
  }
  func.func @transform_2(%arg0: i32) -> (i32, i32) {
    %c0_i32 = arith.constant 0 : i32
    %c0_i32_0 = arith.constant 0 : i32
    %c0_i32_1 = arith.constant 0 : i32
    return %c0_i32, %c0_i32_0 : i32, i32
  }
  func.func @transform_3(%arg0: i32) -> (i32, i32) {
    %c0_i32 = arith.constant 0 : i32
    %c0_i32_0 = arith.constant 0 : i32
    return %c0_i32, %arg0 : i32, i32
  }
}

module attributes {stable_mosaic.version = 11 : i64} {
  func.func @_conv_pool_linear_softmax_kernel(%arg0: memref<162x288xf32, #tpu.memory_space<vmem>>, %arg1: memref<288x64xf32, #tpu.memory_space<vmem>>, %arg2: memref<1x64xf32, #tpu.memory_space<vmem>>, %arg3: memref<576x10xf32, #tpu.memory_space<vmem>>, %arg4: memref<1x10xf32, #tpu.memory_space<vmem>>, %arg5: memref<2x10xf32, #tpu.memory_space<vmem>>) attributes {dimension_semantics = [], scalar_prefetch = 0 : i64, scratch_operands = 0 : i64, tpu.core_type = #tpu.core_type<tc>} {
    %c0 = arith.constant 0 : index
    %c0_0 = arith.constant 0 : index
    %0 = vector.load %arg0[%c0, %c0_0] : memref<162x288xf32, #tpu.memory_space<vmem>>, vector<162x288xf32>
    %c0_1 = arith.constant 0 : index
    %c0_2 = arith.constant 0 : index
    %1 = vector.load %arg1[%c0_1, %c0_2] : memref<288x64xf32, #tpu.memory_space<vmem>>, vector<288x64xf32>
    %cst = arith.constant dense<0.000000e+00> : vector<162x64xf32>
    %2 = tpu.matmul %0, %1, %cst {dimension_numbers = #tpu.dot_dimension_numbers<[1], [0], [0], [1], [0, 0, 1, 1], [], []>} : vector<162x288xf32>, vector<288x64xf32>, vector<162x64xf32> -> vector<162x64xf32>
    %3 = vector.extract_strided_slice %2 {offsets = [0, 0], sizes = [18, 64], strides = [1, 1]} : vector<162x64xf32> to vector<18x64xf32>
    %4 = vector.extract_strided_slice %2 {offsets = [18, 0], sizes = [18, 64], strides = [1, 1]} : vector<162x64xf32> to vector<18x64xf32>
    %5 = arith.maximumf %3, %4 : vector<18x64xf32>
    %6 = vector.extract_strided_slice %2 {offsets = [36, 0], sizes = [18, 64], strides = [1, 1]} : vector<162x64xf32> to vector<18x64xf32>
    %7 = arith.maximumf %5, %6 : vector<18x64xf32>
    %8 = vector.extract_strided_slice %2 {offsets = [54, 0], sizes = [18, 64], strides = [1, 1]} : vector<162x64xf32> to vector<18x64xf32>
    %9 = arith.maximumf %7, %8 : vector<18x64xf32>
    %10 = vector.extract_strided_slice %2 {offsets = [72, 0], sizes = [18, 64], strides = [1, 1]} : vector<162x64xf32> to vector<18x64xf32>
    %11 = arith.maximumf %9, %10 : vector<18x64xf32>
    %12 = vector.extract_strided_slice %2 {offsets = [90, 0], sizes = [18, 64], strides = [1, 1]} : vector<162x64xf32> to vector<18x64xf32>
    %13 = arith.maximumf %11, %12 : vector<18x64xf32>
    %14 = vector.extract_strided_slice %2 {offsets = [108, 0], sizes = [18, 64], strides = [1, 1]} : vector<162x64xf32> to vector<18x64xf32>
    %15 = arith.maximumf %13, %14 : vector<18x64xf32>
    %16 = vector.extract_strided_slice %2 {offsets = [126, 0], sizes = [18, 64], strides = [1, 1]} : vector<162x64xf32> to vector<18x64xf32>
    %17 = arith.maximumf %15, %16 : vector<18x64xf32>
    %18 = vector.extract_strided_slice %2 {offsets = [144, 0], sizes = [18, 64], strides = [1, 1]} : vector<162x64xf32> to vector<18x64xf32>
    %19 = arith.maximumf %17, %18 : vector<18x64xf32>
    %c0_3 = arith.constant 0 : index
    %c0_4 = arith.constant 0 : index
    %20 = vector.load %arg2[%c0_3, %c0_4] : memref<1x64xf32, #tpu.memory_space<vmem>>, vector<1x64xf32>
    %21 = vector.broadcast %20 : vector<1x64xf32> to vector<18x64xf32>
    %22 = arith.addf %19, %21 : vector<18x64xf32>
    %cst_5 = arith.constant 0.000000e+00 : f32
    %23 = vector.broadcast %cst_5 : f32 to vector<18x64xf32>
    %24 = arith.maximumf %22, %23 : vector<18x64xf32>
    %25 = vector.extract_strided_slice %24 {offsets = [0, 0], sizes = [2, 64], strides = [1, 1]} : vector<18x64xf32> to vector<2x64xf32>
    %26 = vector.extract_strided_slice %24 {offsets = [2, 0], sizes = [2, 64], strides = [1, 1]} : vector<18x64xf32> to vector<2x64xf32>
    %27 = vector.extract_strided_slice %24 {offsets = [4, 0], sizes = [2, 64], strides = [1, 1]} : vector<18x64xf32> to vector<2x64xf32>
    %28 = vector.extract_strided_slice %24 {offsets = [6, 0], sizes = [2, 64], strides = [1, 1]} : vector<18x64xf32> to vector<2x64xf32>
    %29 = vector.extract_strided_slice %24 {offsets = [8, 0], sizes = [2, 64], strides = [1, 1]} : vector<18x64xf32> to vector<2x64xf32>
    %30 = vector.extract_strided_slice %24 {offsets = [10, 0], sizes = [2, 64], strides = [1, 1]} : vector<18x64xf32> to vector<2x64xf32>
    %31 = vector.extract_strided_slice %24 {offsets = [12, 0], sizes = [2, 64], strides = [1, 1]} : vector<18x64xf32> to vector<2x64xf32>
    %32 = vector.extract_strided_slice %24 {offsets = [14, 0], sizes = [2, 64], strides = [1, 1]} : vector<18x64xf32> to vector<2x64xf32>
    %33 = vector.extract_strided_slice %24 {offsets = [16, 0], sizes = [2, 64], strides = [1, 1]} : vector<18x64xf32> to vector<2x64xf32>
    %34 = tpu.concatenate %25, %26, %27, %28, %29, %30, %31, %32, %33 in 1 : vector<2x64xf32>, vector<2x64xf32>, vector<2x64xf32>, vector<2x64xf32>, vector<2x64xf32>, vector<2x64xf32>, vector<2x64xf32>, vector<2x64xf32>, vector<2x64xf32> -> vector<2x576xf32>
    %c0_6 = arith.constant 0 : index
    %c0_7 = arith.constant 0 : index
    %35 = vector.load %arg3[%c0_6, %c0_7] : memref<576x10xf32, #tpu.memory_space<vmem>>, vector<576x10xf32>
    %cst_8 = arith.constant dense<0.000000e+00> : vector<2x10xf32>
    %36 = tpu.matmul %34, %35, %cst_8 {dimension_numbers = #tpu.dot_dimension_numbers<[1], [0], [0], [1], [0, 0, 1, 1], [], []>} : vector<2x576xf32>, vector<576x10xf32>, vector<2x10xf32> -> vector<2x10xf32>
    %c0_9 = arith.constant 0 : index
    %c0_10 = arith.constant 0 : index
    %37 = vector.load %arg4[%c0_9, %c0_10] : memref<1x10xf32, #tpu.memory_space<vmem>>, vector<1x10xf32>
    %38 = vector.broadcast %37 : vector<1x10xf32> to vector<2x10xf32>
    %39 = arith.addf %36, %38 : vector<2x10xf32>
    %cst_11 = arith.constant dense<0xFF800000> : vector<2xf32>
    %40 = vector.multi_reduction <maximumf>, %39, %cst_11 [1] : vector<2x10xf32> to vector<2xf32>
    %41 = vector.shape_cast %40 : vector<2xf32> to vector<2x1xf32>
    %42 = vector.broadcast %41 : vector<2x1xf32> to vector<2x10xf32>
    %43 = arith.subf %39, %42 : vector<2x10xf32>
    %44 = math.exp %43 : vector<2x10xf32>
    %cst_12 = arith.constant dense<0.000000e+00> : vector<2xf32>
    %45 = vector.multi_reduction <add>, %44, %cst_12 [1] : vector<2x10xf32> to vector<2xf32>
    %46 = vector.shape_cast %45 : vector<2xf32> to vector<2x1xf32>
    %47 = tpu.reciprocal %46 {approx = true} : vector<2x1xf32> -> vector<2x1xf32>
    %48 = arith.mulf %46, %47 : vector<2x1xf32>
    %cst_13 = arith.constant 2.000000e+00 : f32
    %49 = vector.broadcast %cst_13 : f32 to vector<2x1xf32>
    %50 = arith.subf %49, %48 : vector<2x1xf32>
    %51 = arith.mulf %47, %50 : vector<2x1xf32>
    %52 = vector.broadcast %51 : vector<2x1xf32> to vector<2x10xf32>
    %53 = arith.mulf %44, %52 : vector<2x10xf32>
    %c0_14 = arith.constant 0 : index
    %c0_15 = arith.constant 0 : index
    %54 = vector.load %arg5[%c0_14, %c0_15] : memref<2x10xf32, #tpu.memory_space<vmem>>, vector<2x10xf32>
    tpu.vector_store %arg5[%c0_14, %c0_15], %53 {strides = array<i32>} : memref<2x10xf32, #tpu.memory_space<vmem>>, vector<2x10xf32>,
    return
  }
}

</mosaic_0001>

<llo_original>
// kernel: forward_pallas.3
$region0: #{forward_pallas.3}
  #allocation0 [shape = 'u32[]', space=smem, size = 0x4, offset = 0x4, fixed_abs, tag = 'smem constant byte address 0x4 - core index']
  #allocation1 [shape = 'u32[144,128]{1,0:T(1,128)}', space=vmem, size = 0x12000, scoped, tag = 'internal scratch']
  %s0 = inlined_call_operand.vmem [shape: f32[4,27,5760], index: 0, kind: input, shape index: {}]
  %s1 = inlined_call_operand.vmem [shape: f32[8,27], index: 1, kind: input, shape index: {}]
  %s2 = inlined_call_operand.vmem [shape: f32[8,1], index: 2, kind: input, shape index: {}]
  %s3 = inlined_call_operand.vmem [shape: f32[8,2560], index: 3, kind: output, shape index: {}]
  %s4 = sld [smem:[#allocation0]]
  $region45: #{forward_pallas.3} parent=0
    _
  %s6 = ssub.s32 1, %s4
  %s7 = scalar_select 0, %s6, %s4
  loop: start=0, step=1, limit=6
  $region2: #{forward_pallas.3} parent=0 // loop_pre_header
    _
  $region3: #{forward_pallas.3} parent=0 // loop_header
    %s9 = sphi 0, %s13
    %p10 = scmp.ge.s32.totalorder %s9, 6
    %s19 = sphi 0, %s21
    %s22 = sphi 0, %s19
    %s23 = sphi 0, %s22
    %s39 = sphi 0, %s23
    %s43 = sphi 0, %s43
    %s45 = sphi 0, %s43
    %s46 = sphi 0, %s45
    %s60 = sphi 0, %s46
    %s64 = sphi 0, %s64
    %s66 = sphi 0, %s64
    %s67 = sphi 0, %s66
    %s81 = sphi 0, %s67
    %s87 = sphi 0, %s89
    %s90 = sphi 0, %s87
    %s91 = sphi 0, %s90
    %s107 = sphi 0, %s91
  $region4: #{forward_pallas.3} parent=0 // loop_header_branch
    %12 = sbr.rel (%p10) target = $region8
  $region5: #{forward_pallas.3} parent=0 // loop_body
    %s14 = ssub.s32 %s9, 1
    %s15 = ssub.s32 %s9, 2
    %s16 = sadd.s32 %s9, 1
    %s17 = ssub.s32 %s9, %s16
    %p18 = scmp.eq.s32.totalorder %s17, 0
    %s20 = sadd.s32 %s19, 1
    %s21 = scalar_select %p18, %s19, %s20
    %p24 = pneg %p18
    %p25 = scmp.eq.s32.totalorder %s9, 3
    %p26 = por %p24, %p25
    %p27 = scmp.ne.s32.totalorder %s19, %s22
    %p28 = scmp.eq.s32.totalorder %s9, 0
    %p29 = por %p27, %p28
    %p30 = scmp.ne.s32.totalorder %s19, %s22
    %p31 = scmp.eq.s32.totalorder %s14, 3
    %p32 = por %p30, %p31
    %p33 = scmp.ne.s32.totalorder %s22, %s23
    %p34 = scmp.eq.s32.totalorder %s14, 0
    %p35 = por %p33, %p34
    %p36 = scmp.ne.s32.totalorder %s22, %s23
    %p37 = scmp.eq.s32.totalorder %s15, 3
    %p38 = por %p36, %p37
    %p40 = scmp.ne.s32.totalorder %s23, %s39
    %p41 = scmp.eq.s32.totalorder %s15, 0
    %p42 = por %p40, %p41
    %s44 = sadd.s32 %s43, 1
    %p47 = scmp.eq.s32.totalorder %s9, 3
    %p48 = scmp.ne.s32.totalorder %s43, %s45
    %p49 = scmp.eq.s32.totalorder %s9, 0
    %p50 = por %p48, %p49
    %p51 = scmp.ne.s32.totalorder %s43, %s45
    %p52 = scmp.eq.s32.totalorder %s14, 3
    %p53 = por %p51, %p52
    %p54 = scmp.ne.s32.totalorder %s45, %s46
    %p55 = scmp.eq.s32.totalorder %s14, 0
    %p56 = por %p54, %p55
    %p57 = scmp.ne.s32.totalorder %s45, %s46
    %p58 = scmp.eq.s32.totalorder %s15, 3
    %p59 = por %p57, %p58
    %p61 = scmp.ne.s32.totalorder %s46, %s60
    %p62 = scmp.eq.s32.totalorder %s15, 0
    %p63 = por %p61, %p62
    %s65 = sadd.s32 %s64, 1
    %p68 = scmp.eq.s32.totalorder %s9, 3
    %p69 = scmp.ne.s32.totalorder %s64, %s66
    %p70 = scmp.eq.s32.totalorder %s9, 0
    %p71 = por %p69, %p70
    %p72 = scmp.ne.s32.totalorder %s64, %s66
    %p73 = scmp.eq.s32.totalorder %s14, 3
    %p74 = por %p72, %p73
    %p75 = scmp.ne.s32.totalorder %s66, %s67
    %p76 = scmp.eq.s32.totalorder %s14, 0
    %p77 = por %p75, %p76
    %p78 = scmp.ne.s32.totalorder %s66, %s67
    %p79 = scmp.eq.s32.totalorder %s15, 3
    %p80 = por %p78, %p79
    %p82 = scmp.ne.s32.totalorder %s67, %s81
    %p83 = scmp.eq.s32.totalorder %s15, 0
    %p84 = por %p82, %p83
    %s85 = ssub.s32 %s9, %s16
    %p86 = scmp.eq.s32.totalorder %s85, 0
    %s88 = sadd.s32 %s87, 1
    %s89 = scalar_select %p86, %s87, %s88
    %p92 = pneg %p86
    %p93 = scmp.eq.s32.totalorder %s9, 3
    %p94 = por %p92, %p93
    %p95 = scmp.ne.s32.totalorder %s87, %s90
    %p96 = scmp.eq.s32.totalorder %s9, 0
    %p97 = por %p95, %p96
    %p98 = scmp.ne.s32.totalorder %s87, %s90
    %p99 = scmp.eq.s32.totalorder %s14, 3
    %p100 = por %p98, %p99
    %p101 = scmp.ne.s32.totalorder %s90, %s91
    %p102 = scmp.eq.s32.totalorder %s14, 0
    %p103 = por %p101, %p102
    %p104 = scmp.ne.s32.totalorder %s90, %s91
    %p105 = scmp.eq.s32.totalorder %s15, 3
    %p106 = por %p104, %p105
    %p108 = scmp.ne.s32.totalorder %s91, %s107
    %p109 = scmp.eq.s32.totalorder %s15, 0
    %p110 = por %p108, %p109
    %p111 = scmp.le.s32.totalorder 1, %s9
    %p112 = scmp.lt.s32.totalorder %s9, 5
    %p113 = pnand %p111, %p112
    %p114 = pneg %p113
    // Predicated region
    $region9: #{forward_pallas.3} parent=5 // pred_check
      _
    $region10: #{forward_pallas.3} parent=5 // pred_check_branch
      %116 = sbr.rel (%p113) target = $region12
    $region11: #{forward_pallas.3} parent=5 // pred_region
      %s117 = ssub.s32 %s9, 1
      // Predicated region
      $region13: #{forward_pallas.3} parent=11 // pred_check
        %p118 = pneg %p56
      $region14: #{forward_pallas.3} parent=11 // pred_check_branch
        %120 = sbr.rel (%p118) target = $region16
      $region15: #{forward_pallas.3} parent=11 // pred_region
        _
      $region16: #{forward_pallas.3} parent=11 // pred_fallthru
        _
      // Predicated region
      $region17: #{forward_pallas.3} parent=11 // pred_check
        %p121 = pneg %p77
      $region18: #{forward_pallas.3} parent=11 // pred_check_branch
        %123 = sbr.rel (%p121) target = $region20
      $region19: #{forward_pallas.3} parent=11 // pred_region
        _
      $region20: #{forward_pallas.3} parent=11 // pred_fallthru
        _
    $region12: #{forward_pallas.3} parent=5 // pred_fallthru
      _
    %p124 = scmp.lt.s32.totalorder %s9, 4
    // Predicated region
    $region21: #{forward_pallas.3} parent=5 // pred_check
      %p125 = pneg %p124
    $region22: #{forward_pallas.3} parent=5 // pred_check_branch
      %127 = sbr.rel (%p125) target = $region24
    $region23: #{forward_pallas.3} parent=5 // pred_region
      // Predicated region
      $region25: #{forward_pallas.3} parent=23 // pred_check
        %p128 = pneg %p29
      $region26: #{forward_pallas.3} parent=23 // pred_check_branch
        %130 = sbr.rel (%p128) target = $region28
      $region27: #{forward_pallas.3} parent=23 // pred_region
        %p131 = scmp.lt.s32.totalorder %s9, 3
        %s132 = scalar_select %p131, %s9, 3
        %s133 = smul.addr %s132, 180
        %s134 = smul.addr %s133, 8
        %s135 = scalar_lea.vmem %s0, %s134
      $region28: #{forward_pallas.3} parent=23 // pred_fallthru
        _
    $region24: #{forward_pallas.3} parent=5 // pred_fallthru
      _
    %p136 = scmp.le.s32.totalorder 1, %s9
    %p137 = scmp.lt.s32.totalorder %s9, 5
    %p138 = pnand %p136, %p137
    %p139 = pneg %p138
    // Predicated region
    $region29: #{forward_pallas.3} parent=5 // pred_check
      _
    $region30: #{forward_pallas.3} parent=5 // pred_check_branch
      %141 = sbr.rel (%p138) target = $region32
    $region31: #{forward_pallas.3} parent=5 // pred_region
      %s142 = ssub.s32 %s9, 1
      %p143 = scmp.lt.s32.totalorder %s14, 3
      %s144 = scalar_select %p143, %s14, 3
      %s145 = smul.addr %s144, 180
      %s146 = smul.addr %s145, 8
      %s147 = scalar_lea.vmem %s0, %s146
      %p148 = pneg %p35
      %p149 = pneg %p32
      %p150 = pneg %p56
      %p151 = pneg %p53
      %p152 = pneg %p77
      %p153 = pneg %p74
      %p154 = pneg %p103
      %p155 = pneg %p100
      %s156 = smul.u32 5, %s14
      %p157 = scmp.lt.s32.totalorder %s156, 19
      %s158 = scalar_select %p157, %s156, 19
      %s159 = smul.addr %s158, 8
      %s160 = scalar_lea.vmem %s3, %s159
      %p161 = scmp.lt.s32.totalorder %s14, 3
      %s162 = scalar_select %p161, %s14, 3
      %s163 = smul.addr %s162, 180
      %s164 = smul.addr %s163, 8
      %s165 = scalar_lea.vmem %s0, %s164
      %s166 = smul.u32 5, %s14
      %p167 = scmp.lt.s32.totalorder %s166, 19
      %s168 = scalar_select %p167, %s166, 19
      %s169 = smul.addr %s168, 8
      %s170 = scalar_lea.vmem %s3, %s169
      %s171 = smul.u32 5, %s14
      %v172 = vld [vmem:[%s1] sm:$0xff]
      %v173 = vld [vmem:[%s165] sm:$0xff]
      %v174 = vld [vmem:[%s165 + $0x8] sm:$0xff]
      %v175 = vld [vmem:[%s165 + $0x10] sm:$0xff]
      %v176 = vld [vmem:[%s165 + $0x18] sm:$0xff]
      %v177 = vld [vmem:[%s165 + $0x20] sm:$0xff]
      %v178 = vld [vmem:[%s165 + $0x28] sm:$0xff]
      %v179 = vld [vmem:[%s165 + $0x30] sm:$0xff]
      %v180 = vld [vmem:[%s165 + $0x38] sm:$0xff]
      %v181 = vld [vmem:[%s165 + $0x40] sm:$0xff]
      %v182 = vld [vmem:[%s165 + $0x48] sm:$0xff]
      %v183 = vld [vmem:[%s165 + $0x50] sm:$0xff]
      %v184 = vld [vmem:[%s165 + $0x58] sm:$0xff]
      %v185 = vld [vmem:[%s165 + $0x60] sm:$0xff]
      %v186 = vld [vmem:[%s165 + $0x68] sm:$0xff]
      %v187 = vld [vmem:[%s165 + $0x70] sm:$0xff]
      %v188 = vld [vmem:[%s165 + $0x78] sm:$0xff]
      %v189 = vld [vmem:[%s165 + $0x80] sm:$0xff]
      %v190 = vld [vmem:[%s165 + $0x88] sm:$0xff]
      %v191 = vld [vmem:[%s165 + $0x90] sm:$0xff]
      %v192 = vld [vmem:[%s165 + $0x98] sm:$0xff]
      %v193 = vld [vmem:[%s165 + $0xa0] sm:$0xff]
      %v194 = vld [vmem:[%s165 + $0xa8] sm:$0xff]
      %v195 = vld [vmem:[%s165 + $0xb0] sm:$0xff]
      %v196 = vld [vmem:[%s165 + $0xb8] sm:$0xff]
      %v197 = vld [vmem:[%s165 + $0xc0] sm:$0xff]
      %v198 = vld [vmem:[%s165 + $0xc8] sm:$0xff]
      %v199 = vld [vmem:[%s165 + $0xd0] sm:$0xff]
      %v200 = vld [vmem:[%s165 + $0xd8] sm:$0xff]
      %v201 = vld [vmem:[%s165 + $0xe0] sm:$0xff]
      %v202 = vld [vmem:[%s165 + $0xe8] sm:$0xff]
      %v203 = vld [vmem:[%s165 + $0xf0] sm:$0xff]
      %v204 = vld [vmem:[%s165 + $0xf8] sm:$0xff]
      %v205 = vld [vmem:[%s165 + $0x100] sm:$0xff]
      %v206 = vld [vmem:[%s165 + $0x108] sm:$0xff]
      %v207 = vld [vmem:[%s165 + $0x110] sm:$0xff]
      %v208 = vld [vmem:[%s165 + $0x118] sm:$0xff]
      %v209 = vld [vmem:[%s165 + $0x120] sm:$0xff]
      %v210 = vld [vmem:[%s165 + $0x128] sm:$0xff]
      %v211 = vld [vmem:[%s165 + $0x130] sm:$0xff]
      %v212 = vld [vmem:[%s165 + $0x138] sm:$0xff]
      %v213 = vld [vmem:[%s165 + $0x140] sm:$0xff]
      %v214 = vld [vmem:[%s165 + $0x148] sm:$0xff]
      %v215 = vld [vmem:[%s165 + $0x150] sm:$0xff]
      %v216 = vld [vmem:[%s165 + $0x158] sm:$0xff]
      %v217 = vld [vmem:[%s165 + $0x160] sm:$0xff]
      %v218 = vld [vmem:[%s165 + $0x168] sm:$0xff]
      %v219 = vld [vmem:[%s165 + $0x170] sm:$0xff]
      %v220 = vld [vmem:[%s165 + $0x178] sm:$0xff]
      %v221 = vld [vmem:[%s165 + $0x180] sm:$0xff]
      %v222 = vld [vmem:[%s165 + $0x188] sm:$0xff]
      %v223 = vld [vmem:[%s165 + $0x190] sm:$0xff]
      %v224 = vld [vmem:[%s165 + $0x198] sm:$0xff]
      %v225 = vld [vmem:[%s165 + $0x1a0] sm:$0xff]
      %v226 = vld [vmem:[%s165 + $0x1a8] sm:$0xff]
      %v227 = vld [vmem:[%s165 + $0x1b0] sm:$0xff]
      %v228 = vld [vmem:[%s165 + $0x1b8] sm:$0xff]
      %v229 = vld [vmem:[%s165 + $0x1c0] sm:$0xff]
      %v230 = vld [vmem:[%s165 + $0x1c8] sm:$0xff]
      %v231 = vld [vmem:[%s165 + $0x1d0] sm:$0xff]
      %v232 = vld [vmem:[%s165 + $0x1d8] sm:$0xff]
      %v233 = vld [vmem:[%s165 + $0x1e0] sm:$0xff]
      %v234 = vld [vmem:[%s165 + $0x1e8] sm:$0xff]
      %v235 = vld [vmem:[%s165 + $0x1f0] sm:$0xff]
      %v236 = vld [vmem:[%s165 + $0x1f8] sm:$0xff]
      %v237 = vld [vmem:[%s165 + $0x200] sm:$0xff]
      %v238 = vld [vmem:[%s165 + $0x208] sm:$0xff]
      %v239 = vld [vmem:[%s165 + $0x210] sm:$0xff]
      %v240 = vld [vmem:[%s165 + $0x218] sm:$0xff]
      %v241 = vld [vmem:[%s165 + $0x220] sm:$0xff]
      %v242 = vld [vmem:[%s165 + $0x228] sm:$0xff]
      %v243 = vld [vmem:[%s165 + $0x230] sm:$0xff]
      %v244 = vld [vmem:[%s165 + $0x238] sm:$0xff]
      %v245 = vld [vmem:[%s165 + $0x240] sm:$0xff]
      %v246 = vld [vmem:[%s165 + $0x248] sm:$0xff]
      %v247 = vld [vmem:[%s165 + $0x250] sm:$0xff]
      %v248 = vld [vmem:[%s165 + $0x258] sm:$0xff]
      %v249 = vld [vmem:[%s165 + $0x260] sm:$0xff]
      %v250 = vld [vmem:[%s165 + $0x268] sm:$0xff]
      %v251 = vld [vmem:[%s165 + $0x270] sm:$0xff]
      %v252 = vld [vmem:[%s165 + $0x278] sm:$0xff]
      %v253 = vld [vmem:[%s165 + $0x280] sm:$0xff]
      %v254 = vld [vmem:[%s165 + $0x288] sm:$0xff]
      %v255 = vld [vmem:[%s165 + $0x290] sm:$0xff]
      %v256 = vld [vmem:[%s165 + $0x298] sm:$0xff]
      %v257 = vld [vmem:[%s165 + $0x2a0] sm:$0xff]
      %v258 = vld [vmem:[%s165 + $0x2a8] sm:$0xff]
      %v259 = vld [vmem:[%s165 + $0x2b0] sm:$0xff]
      %v260 = vld [vmem:[%s165 + $0x2b8] sm:$0xff]
      %v261 = vld [vmem:[%s165 + $0x2c0] sm:$0xff]
      %v262 = vld [vmem:[%s165 + $0x2c8] sm:$0xff]
      %v263 = vld [vmem:[%s165 + $0x2d0] sm:$0xff]
      %v264 = vld [vmem:[%s165 + $0x2d8] sm:$0xff]
      %v265 = vld [vmem:[%s165 + $0x2e0] sm:$0xff]
      %v266 = vld [vmem:[%s165 + $0x2e8] sm:$0xff]
      %v267 = vld [vmem:[%s165 + $0x2f0] sm:$0xff]
      %v268 = vld [vmem:[%s165 + $0x2f8] sm:$0xff]
      %v269 = vld [vmem:[%s165 + $0x300] sm:$0xff]
      %v270 = vld [vmem:[%s165 + $0x308] sm:$0xff]
      %v271 = vld [vmem:[%s165 + $0x310] sm:$0xff]
      %v272 = vld [vmem:[%s165 + $0x318] sm:$0xff]
      %v273 = vld [vmem:[%s165 + $0x320] sm:$0xff]
      %v274 = vld [vmem:[%s165 + $0x328] sm:$0xff]
      %v275 = vld [vmem:[%s165 + $0x330] sm:$0xff]
      %v276 = vld [vmem:[%s165 + $0x338] sm:$0xff]
      %v277 = vld [vmem:[%s165 + $0x340] sm:$0xff]
      %v278 = vld [vmem:[%s165 + $0x348] sm:$0xff]
      %v279 = vld [vmem:[%s165 + $0x350] sm:$0xff]
      %v280 = vld [vmem:[%s165 + $0x358] sm:$0xff]
      %v281 = vld [vmem:[%s165 + $0x360] sm:$0xff]
      %v282 = vld [vmem:[%s165 + $0x368] sm:$0xff]
      %v283 = vld [vmem:[%s165 + $0x370] sm:$0xff]
      %v284 = vld [vmem:[%s165 + $0x378] sm:$0xff]
      %v285 = vld [vmem:[%s165 + $0x380] sm:$0xff]
      %v286 = vld [vmem:[%s165 + $0x388] sm:$0xff]
      %v287 = vld [vmem:[%s165 + $0x390] sm:$0xff]
      %v288 = vld [vmem:[%s165 + $0x398] sm:$0xff]
      %v289 = vld [vmem:[%s165 + $0x3a0] sm:$0xff]
      %v290 = vld [vmem:[%s165 + $0x3a8] sm:$0xff]
      %v291 = vld [vmem:[%s165 + $0x3b0] sm:$0xff]
      %v292 = vld [vmem:[%s165 + $0x3b8] sm:$0xff]
      %v293 = vld [vmem:[%s165 + $0x3c0] sm:$0xff]
      %v294 = vld [vmem:[%s165 + $0x3c8] sm:$0xff]
      %v295 = vld [vmem:[%s165 + $0x3d0] sm:$0xff]
      %v296 = vld [vmem:[%s165 + $0x3d8] sm:$0xff]
      %v297 = vld [vmem:[%s165 + $0x3e0] sm:$0xff]
      %v298 = vld [vmem:[%s165 + $0x3e8] sm:$0xff]
      %v299 = vld [vmem:[%s165 + $0x3f0] sm:$0xff]
      %v300 = vld [vmem:[%s165 + $0x3f8] sm:$0xff]
      %v301 = vld [vmem:[%s165 + $0x400] sm:$0xff]
      %v302 = vld [vmem:[%s165 + $0x408] sm:$0xff]
      %v303 = vld [vmem:[%s165 + $0x410] sm:$0xff]
      %v304 = vld [vmem:[%s165 + $0x418] sm:$0xff]
      %v305 = vld [vmem:[%s165 + $0x420] sm:$0xff]
      %v306 = vld [vmem:[%s165 + $0x428] sm:$0xff]
      %v307 = vld [vmem:[%s165 + $0x430] sm:$0xff]
      %v308 = vld [vmem:[%s165 + $0x438] sm:$0x7]
      %v309 = vld [vmem:[%s165 + $0x440] sm:$0x7]
      %v310 = vld [vmem:[%s165 + $0x448] sm:$0x7]
      %v311 = vld [vmem:[%s165 + $0x450] sm:$0x7]
      %v312 = vld [vmem:[%s165 + $0x458] sm:$0x7]
      %v313 = vld [vmem:[%s165 + $0x460] sm:$0x7]
      %v314 = vld [vmem:[%s165 + $0x468] sm:$0x7]
      %v315 = vld [vmem:[%s165 + $0x470] sm:$0x7]
      %v316 = vld [vmem:[%s165 + $0x478] sm:$0x7]
      %v317 = vld [vmem:[%s165 + $0x480] sm:$0x7]
      %v318 = vld [vmem:[%s165 + $0x488] sm:$0x7]
      %v319 = vld [vmem:[%s165 + $0x490] sm:$0x7]
      %v320 = vld [vmem:[%s165 + $0x498] sm:$0x7]
      %v321 = vld [vmem:[%s165 + $0x4a0] sm:$0x7]
      %v322 = vld [vmem:[%s165 + $0x4a8] sm:$0x7]
      %v323 = vld [vmem:[%s165 + $0x4b0] sm:$0x7]
      %v324 = vld [vmem:[%s165 + $0x4b8] sm:$0x7]
      %v325 = vld [vmem:[%s165 + $0x4c0] sm:$0x7]
      %v326 = vld [vmem:[%s165 + $0x4c8] sm:$0x7]
      %v327 = vld [vmem:[%s165 + $0x4d0] sm:$0x7]
      %v328 = vld [vmem:[%s165 + $0x4d8] sm:$0x7]
      %v329 = vld [vmem:[%s165 + $0x4e0] sm:$0x7]
      %v330 = vld [vmem:[%s165 + $0x4e8] sm:$0x7]
      %v331 = vld [vmem:[%s165 + $0x4f0] sm:$0x7]
      %v332 = vld [vmem:[%s165 + $0x4f8] sm:$0x7]
      %v333 = vld [vmem:[%s165 + $0x500] sm:$0x7]
      %v334 = vld [vmem:[%s165 + $0x508] sm:$0x7]
      %v335 = vld [vmem:[%s165 + $0x510] sm:$0x7]
      %v336 = vld [vmem:[%s165 + $0x518] sm:$0x7]
      %v337 = vld [vmem:[%s165 + $0x520] sm:$0x7]
      %v338 = vld [vmem:[%s165 + $0x528] sm:$0x7]
      %v339 = vld [vmem:[%s165 + $0x530] sm:$0x7]
      %v340 = vld [vmem:[%s165 + $0x538] sm:$0x7]
      %v341 = vld [vmem:[%s165 + $0x540] sm:$0x7]
      %v342 = vld [vmem:[%s165 + $0x548] sm:$0x7]
      %v343 = vld [vmem:[%s165 + $0x550] sm:$0x7]
      %v344 = vld [vmem:[%s165 + $0x558] sm:$0x7]
      %v345 = vld [vmem:[%s165 + $0x560] sm:$0x7]
      %v346 = vld [vmem:[%s165 + $0x568] sm:$0x7]
      %v347 = vld [vmem:[%s165 + $0x570] sm:$0x7]
      %v348 = vld [vmem:[%s165 + $0x578] sm:$0x7]
      %v349 = vld [vmem:[%s165 + $0x580] sm:$0x7]
      %v350 = vld [vmem:[%s165 + $0x588] sm:$0x7]
      %v351 = vld [vmem:[%s165 + $0x590] sm:$0x7]
      %v352 = vld [vmem:[%s165 + $0x598] sm:$0x7]
      %vm353 = vcmask 220160
      %v355 = vsel %vm353, %v172, 0
      %vm357 = vcmask 1042432
      %v359 = vsel %vm357, %v308, 0
      %v362 = vsel %vm357, %v309, 0
      %v365 = vsel %vm357, %v310, 0
      %v368 = vsel %vm357, %v311, 0
      %v371 = vsel %vm357, %v312, 0
      %v374 = vsel %vm357, %v313, 0
      %v377 = vsel %vm357, %v314, 0
      %v380 = vsel %vm357, %v315, 0
      %v383 = vsel %vm357, %v316, 0
      %v386 = vsel %vm357, %v317, 0
      %v389 = vsel %vm357, %v318, 0
      %v392 = vsel %vm357, %v319, 0
      %v395 = vsel %vm357, %v320, 0
      %v398 = vsel %vm357, %v321, 0
      %v401 = vsel %vm357, %v322, 0
      %v404 = vsel %vm357, %v323, 0
      %v407 = vsel %vm357, %v324, 0
      %v410 = vsel %vm357, %v325, 0
      %v413 = vsel %vm357, %v326, 0
      %v416 = vsel %vm357, %v327, 0
      %v419 = vsel %vm357, %v328, 0
      %v422 = vsel %vm357, %v329, 0
      %v425 = vsel %vm357, %v330, 0
      %v428 = vsel %vm357, %v331, 0
      %v431 = vsel %vm357, %v332, 0
      %v434 = vsel %vm357, %v333, 0
      %v437 = vsel %vm357, %v334, 0
      %v440 = vsel %vm357, %v335, 0
      %v443 = vsel %vm357, %v336, 0
      %v446 = vsel %vm357, %v337, 0
      %v449 = vsel %vm357, %v338, 0
      %v452 = vsel %vm357, %v339, 0
      %v455 = vsel %vm357, %v340, 0
      %v458 = vsel %vm357, %v341, 0
      %v461 = vsel %vm357, %v342, 0
      %v464 = vsel %vm357, %v343, 0
      %v467 = vsel %vm357, %v344, 0
      %v470 = vsel %vm357, %v345, 0
      %v473 = vsel %vm357, %v346, 0
      %v476 = vsel %vm357, %v347, 0
      %v479 = vsel %vm357, %v348, 0
      %v482 = vsel %vm357, %v349, 0
      %v485 = vsel %vm357, %v350, 0
      %v488 = vsel %vm357, %v351, 0
      %v491 = vsel %vm357, %v352, 0
      %493 = vmatprep.subr.mxu0 %v174
      %494 = vmatpush1.msra.mxu0 %v173
      %495 = vmatprep.subr.mxu0 %v219
      %496 = vmatpush1.msra.mxu0 %v218
      %497 = vmatprep.subr.mxu0 %v264
      %498 = vmatpush1.msra.mxu0 %v263
      %499 = vmatprep.subr.mxu0 %v362
      %500 = vmatpush1.msra.mxu0 %v359
      %501 = vmatprep.subr.mxu0 0.0
      %502 = vmatpush1.msra.mxu0 0.0
      %503 = vmatprep.subr.mxu0 0.0
      %504 = vmatpush1.msra.mxu0 0.0
      %505 = vmatprep.subr.mxu0 0.0
      %506 = vmatpush1.msra.mxu0 0.0
      %507 = vmatprep.subr.mxu0 0.0
      %508 = vmatpush1.msra.mxu0 0.0
      %509 = vmatprep.subr.mxu0 0.0
      %510 = vmatpush1.msra.mxu0 0.0
      %511 = vmatprep.subr.mxu0 0.0
      %512 = vmatpush1.msra.mxu0 0.0
      %513 = vmatprep.subr.mxu0 0.0
      %514 = vmatpush1.msra.mxu0 0.0
      %515 = vmatprep.subr.mxu0 0.0
      %516 = vmatpush1.msra.mxu0 0.0
      %517 = vmatprep.subr.mxu0 0.0
      %518 = vmatpush1.msra.mxu0 0.0
      %519 = vmatprep.subr.mxu0 0.0
      %520 = vmatpush1.msra.mxu0 0.0
      %521 = vmatprep.subr.mxu0 0.0
      %522 = vmatpush1.msra.mxu0 0.0
      %523 = vmatprep.subr.mxu0 0.0
      %524 = vmatpush1.msra.mxu0 0.0
      %525 = vmatprep.subr.mxu0 0.0
      %526 = vmatpush1.msra.mxu0 0.0
      %527 = vmatprep.subr.mxu0 0.0
      %528 = vmatpush1.msra.mxu0 0.0
      %529 = vmatprep.subr.mxu0 0.0
      %530 = vmatpush1.msra.mxu0 0.0
      %531 = vmatprep.subr.mxu0 0.0
      %532 = vmatpush1.msra.mxu0 0.0
      %533 = vmatprep.subr.mxu0 0.0
      %534 = vmatpush1.msra.mxu0 0.0
      %535 = vmatprep.subr.mxu0 0.0
      %536 = vmatpush1.msra.mxu0 0.0
      %537 = vmatprep.subr.mxu0 0.0
      %538 = vmatpush1.msra.mxu0 0.0
      %539 = vmatprep.subr.mxu0 0.0
      %540 = vmatpush1.msra.mxu0 0.0
      %541 = vmatprep.subr.mxu0 0.0
      %542 = vmatpush1.msra.mxu0 0.0
      %543 = vmatprep.subr.mxu0 0.0
      %544 = vmatpush1.msra.mxu0 0.0
      %545 = vmatprep.subr.mxu0 0.0
      %546 = vmatpush1.msra.mxu0 0.0
      %547 = vmatprep.subr.mxu0 0.0
      %548 = vmatpush1.msra.mxu0 0.0
      %549 = vmatprep.subr.mxu0 0.0
      %550 = vmatpush1.msra.mxu0 0.0
      %551 = vmatprep.subr.mxu0 0.0
      %552 = vmatpush1.msra.mxu0 0.0
      %553 = vmatprep.subr.mxu0 0.0
      %554 = vmatpush1.msra.mxu0 0.0
      %555 = vmatprep.subr.mxu0 0.0
      %556 = vmatpush1.msra.mxu0 0.0
      %557 = vmatprep.mubr.f32.mxu0 0.0
      %558 = vmatmul.mubr.f32.gmra.mrb[0].mxu0 %v355
      %v559 = vpop.f32.mrb[0].mxu0
      %v560 = vadd.f32 0.0, %v559
      %v561 = vpop.f32.mrb[0].mxu0
      %v562 = vadd.f32 0.0, %v561
      %563 = vdwg.mxu0
      %564 = vmatprep.subr.mxu0 %v176
      %565 = vmatpush1.msra.mxu0 %v175
      %566 = vmatprep.subr.mxu0 %v221
      %567 = vmatpush1.msra.mxu0 %v220
      %568 = vmatprep.subr.mxu0 %v266
      %569 = vmatpush1.msra.mxu0 %v265
      %570 = vmatprep.subr.mxu0 %v368
      %571 = vmatpush1.msra.mxu0 %v365
      %572 = vmatprep.subr.mxu0 0.0
      %573 = vmatpush1.msra.mxu0 0.0
      %574 = vmatprep.subr.mxu0 0.0
      %575 = vmatpush1.msra.mxu0 0.0
      %576 = vmatprep.subr.mxu0 0.0
      %577 = vmatpush1.msra.mxu0 0.0
      %578 = vmatprep.subr.mxu0 0.0
      %579 = vmatpush1.msra.mxu0 0.0
      %580 = vmatprep.subr.mxu0 0.0
      %581 = vmatpush1.msra.mxu0 0.0
      %582 = vmatprep.subr.mxu0 0.0
      %583 = vmatpush1.msra.mxu0 0.0
      %584 = vmatprep.subr.mxu0 0.0
      %585 = vmatpush1.msra.mxu0 0.0
      %586 = vmatprep.subr.mxu0 0.0
      %587 = vmatpush1.msra.mxu0 0.0
      %588 = vmatprep.subr.mxu0 0.0
      %589 = vmatpush1.msra.mxu0 0.0
      %590 = vmatprep.subr.mxu0 0.0
      %591 = vmatpush1.msra.mxu0 0.0
      %592 = vmatprep.subr.mxu0 0.0
      %593 = vmatpush1.msra.mxu0 0.0
      %594 = vmatprep.subr.mxu0 0.0
      %595 = vmatpush1.msra.mxu0 0.0
      %596 = vmatprep.subr.mxu0 0.0
      %597 = vmatpush1.msra.mxu0 0.0
      %598 = vmatprep.subr.mxu0 0.0
      %599 = vmatpush1.msra.mxu0 0.0
      %600 = vmatprep.subr.mxu0 0.0
      %601 = vmatpush1.msra.mxu0 0.0
      %602 = vmatprep.subr.mxu0 0.0
      %603 = vmatpush1.msra.mxu0 0.0
      %604 = vmatprep.subr.mxu0 0.0
      %605 = vmatpush1.msra.mxu0 0.0
      %606 = vmatprep.subr.mxu0 0.0
      %607 = vmatpush1.msra.mxu0 0.0
      %608 = vmatprep.subr.mxu0 0.0
      %609 = vmatpush1.msra.mxu0 0.0
      %610 = vmatprep.subr.mxu0 0.0
      %611 = vmatpush1.msra.mxu0 0.0
      %612 = vmatprep.subr.mxu0 0.0
      %613 = vmatpush1.msra.mxu0 0.0
      %614 = vmatprep.subr.mxu0 0.0
      %615 = vmatpush1.msra.mxu0 0.0
      %616 = vmatprep.subr.mxu0 0.0
      %617 = vmatpush1.msra.mxu0 0.0
      %618 = vmatprep.subr.mxu0 0.0
      %619 = vmatpush1.msra.mxu0 0.0
      %620 = vmatprep.subr.mxu0 0.0
      %621 = vmatpush1.msra.mxu0 0.0
      %622 = vmatprep.subr.mxu0 0.0
      %623 = vmatpush1.msra.mxu0 0.0
      %624 = vmatprep.subr.mxu0 0.0
      %625 = vmatpush1.msra.mxu0 0.0
      %626 = vmatprep.subr.mxu0 0.0
      %627 = vmatpush1.msra.mxu0 0.0
      %628 = vmatprep.mubr.f32.mxu0 0.0
      %629 = vmatmul.mubr.f32.gmra.mrb[0].mxu0 %v355
      %v630 = vpop.f32.mrb[0].mxu0
      %v631 = vadd.f32 0.0, %v630
      %v632 = vpop.f32.mrb[0].mxu0
      %v633 = vadd.f32 0.0, %v632
      %634 = vdwg.mxu0
      %635 = vmatprep.subr.mxu0 %v178
      %636 = vmatpush1.msra.mxu0 %v177
      %637 = vmatprep.subr.mxu0 %v223
      %638 = vmatpush1.msra.mxu0 %v222
      %639 = vmatprep.subr.mxu0 %v268
      %640 = vmatpush1.msra.mxu0 %v267
      %641 = vmatprep.subr.mxu0 %v374
      %642 = vmatpush1.msra.mxu0 %v371
      %643 = vmatprep.subr.mxu0 0.0
      %644 = vmatpush1.msra.mxu0 0.0
      %645 = vmatprep.subr.mxu0 0.0
      %646 = vmatpush1.msra.mxu0 0.0
      %647 = vmatprep.subr.mxu0 0.0
      %648 = vmatpush1.msra.mxu0 0.0
      %649 = vmatprep.subr.mxu0 0.0
      %650 = vmatpush1.msra.mxu0 0.0
      %651 = vmatprep.subr.mxu0 0.0
      %652 = vmatpush1.msra.mxu0 0.0
      %653 = vmatprep.subr.mxu0 0.0
      %654 = vmatpush1.msra.mxu0 0.0
      %655 = vmatprep.subr.mxu0 0.0
      %656 = vmatpush1.msra.mxu0 0.0
      %657 = vmatprep.subr.mxu0 0.0
      %658 = vmatpush1.msra.mxu0 0.0
      %659 = vmatprep.subr.mxu0 0.0
      %660 = vmatpush1.msra.mxu0 0.0
      %661 = vmatprep.subr.mxu0 0.0
      %662 = vmatpush1.msra.mxu0 0.0
      %663 = vmatprep.subr.mxu0 0.0
      %664 = vmatpush1.msra.mxu0 0.0
      %665 = vmatprep.subr.mxu0 0.0
      %666 = vmatpush1.msra.mxu0 0.0
      %667 = vmatprep.subr.mxu0 0.0
      %668 = vmatpush1.msra.mxu0 0.0
      %669 = vmatprep.subr.mxu0 0.0
      %670 = vmatpush1.msra.mxu0 0.0
      %671 = vmatprep.subr.mxu0 0.0
      %672 = vmatpush1.msra.mxu0 0.0
      %673 = vmatprep.subr.mxu0 0.0
      %674 = vmatpush1.msra.mxu0 0.0
      %675 = vmatprep.subr.mxu0 0.0
      %676 = vmatpush1.msra.mxu0 0.0
      %677 = vmatprep.subr.mxu0 0.0
      %678 = vmatpush1.msra.mxu0 0.0
      %679 = vmatprep.subr.mxu0 0.0
      %680 = vmatpush1.msra.mxu0 0.0
      %681 = vmatprep.subr.mxu0 0.0
      %682 = vmatpush1.msra.mxu0 0.0
      %683 = vmatprep.subr.mxu0 0.0
      %684 = vmatpush1.msra.mxu0 0.0
      %685 = vmatprep.subr.mxu0 0.0
      %686 = vmatpush1.msra.mxu0 0.0
      %687 = vmatprep.subr.mxu0 0.0
      %688 = vmatpush1.msra.mxu0 0.0
      %689 = vmatprep.subr.mxu0 0.0
      %690 = vmatpush1.msra.mxu0 0.0
      %691 = vmatprep.subr.mxu0 0.0
      %692 = vmatpush1.msra.mxu0 0.0
      %693 = vmatprep.subr.mxu0 0.0
      %694 = vmatpush1.msra.mxu0 0.0
      %695 = vmatprep.subr.mxu0 0.0
      %696 = vmatpush1.msra.mxu0 0.0
      %697 = vmatprep.subr.mxu0 0.0
      %698 = vmatpush1.msra.mxu0 0.0
      %699 = vmatprep.mubr.f32.mxu0 0.0
      %700 = vmatmul.mubr.f32.gmra.mrb[0].mxu0 %v355
      %v701 = vpop.f32.mrb[0].mxu0
      %v702 = vadd.f32 0.0, %v701
      %v703 = vpop.f32.mrb[0].mxu0
      %v704 = vadd.f32 0.0, %v703
      %705 = vdwg.mxu0
      %706 = vmatprep.subr.mxu0 %v180
      %707 = vmatpush1.msra.mxu0 %v179
      %708 = vmatprep.subr.mxu0 %v225
      %709 = vmatpush1.msra.mxu0 %v224
      %710 = vmatprep.subr.mxu0 %v270
      %711 = vmatpush1.msra.mxu0 %v269
      %712 = vmatprep.subr.mxu0 %v380
      %713 = vmatpush1.msra.mxu0 %v377
      %714 = vmatprep.subr.mxu0 0.0
      %715 = vmatpush1.msra.mxu0 0.0
      %716 = vmatprep.subr.mxu0 0.0
      %717 = vmatpush1.msra.mxu0 0.0
      %718 = vmatprep.subr.mxu0 0.0
      %719 = vmatpush1.msra.mxu0 0.0
      %720 = vmatprep.subr.mxu0 0.0
      %721 = vmatpush1.msra.mxu0 0.0
      %722 = vmatprep.subr.mxu0 0.0
      %723 = vmatpush1.msra.mxu0 0.0
      %724 = vmatprep.subr.mxu0 0.0
      %725 = vmatpush1.msra.mxu0 0.0
      %726 = vmatprep.subr.mxu0 0.0
      %727 = vmatpush1.msra.mxu0 0.0
      %728 = vmatprep.subr.mxu0 0.0
      %729 = vmatpush1.msra.mxu0 0.0
      %730 = vmatprep.subr.mxu0 0.0
      %731 = vmatpush1.msra.mxu0 0.0
      %732 = vmatprep.subr.mxu0 0.0
      %733 = vmatpush1.msra.mxu0 0.0
      %734 = vmatprep.subr.mxu0 0.0
      %735 = vmatpush1.msra.mxu0 0.0
      %736 = vmatprep.subr.mxu0 0.0
      %737 = vmatpush1.msra.mxu0 0.0
      %738 = vmatprep.subr.mxu0 0.0
      %739 = vmatpush1.msra.mxu0 0.0
      %740 = vmatprep.subr.mxu0 0.0
      %741 = vmatpush1.msra.mxu0 0.0
      %742 = vmatprep.subr.mxu0 0.0
      %743 = vmatpush1.msra.mxu0 0.0
      %744 = vmatprep.subr.mxu0 0.0
      %745 = vmatpush1.msra.mxu0 0.0
      %746 = vmatprep.subr.mxu0 0.0
      %747 = vmatpush1.msra.mxu0 0.0
      %748 = vmatprep.subr.mxu0 0.0
      %749 = vmatpush1.msra.mxu0 0.0
      %750 = vmatprep.subr.mxu0 0.0
      %751 = vmatpush1.msra.mxu0 0.0
      %752 = vmatprep.subr.mxu0 0.0
      %753 = vmatpush1.msra.mxu0 0.0
      %754 = vmatprep.subr.mxu0 0.0
      %755 = vmatpush1.msra.mxu0 0.0
      %756 = vmatprep.subr.mxu0 0.0
      %757 = vmatpush1.msra.mxu0 0.0
      %758 = vmatprep.subr.mxu0 0.0
      %759 = vmatpush1.msra.mxu0 0.0
      %760 = vmatprep.subr.mxu0 0.0
      %761 = vmatpush1.msra.mxu0 0.0
      %762 = vmatprep.subr.mxu0 0.0
      %763 = vmatpush1.msra.mxu0 0.0
      %764 = vmatprep.subr.mxu0 0.0
      %765 = vmatpush1.msra.mxu0 0.0
      %766 = vmatprep.subr.mxu0 0.0
      %767 = vmatpush1.msra.mxu0 0.0
      %768 = vmatprep.subr.mxu0 0.0
      %769 = vmatpush1.msra.mxu0 0.0
      %770 = vmatprep.mubr.f32.mxu0 0.0
      %771 = vmatmul.mubr.f32.gmra.mrb[0].mxu0 %v355
      %v772 = vpop.f32.mrb[0].mxu0
      %v773 = vadd.f32 0.0, %v772
      %v774 = vpop.f32.mrb[0].mxu0
      %v775 = vadd.f32 0.0, %v774
      %776 = vdwg.mxu0
      %777 = vmatprep.subr.mxu0 %v182
      %778 = vmatpush1.msra.mxu0 %v181
      %779 = vmatprep.subr.mxu0 %v227
      %780 = vmatpush1.msra.mxu0 %v226
      %781 = vmatprep.subr.mxu0 %v272
      %782 = vmatpush1.msra.mxu0 %v271
      %783 = vmatprep.subr.mxu0 %v386
      %784 = vmatpush1.msra.mxu0 %v383
      %785 = vmatprep.subr.mxu0 0.0
      %786 = vmatpush1.msra.mxu0 0.0
      %787 = vmatprep.subr.mxu0 0.0
      %788 = vmatpush1.msra.mxu0 0.0
      %789 = vmatprep.subr.mxu0 0.0
      %790 = vmatpush1.msra.mxu0 0.0
      %791 = vmatprep.subr.mxu0 0.0
      %792 = vmatpush1.msra.mxu0 0.0
      %793 = vmatprep.subr.mxu0 0.0
      %794 = vmatpush1.msra.mxu0 0.0
      %795 = vmatprep.subr.mxu0 0.0
      %796 = vmatpush1.msra.mxu0 0.0
      %797 = vmatprep.subr.mxu0 0.0
      %798 = vmatpush1.msra.mxu0 0.0
      %799 = vmatprep.subr.mxu0 0.0
      %800 = vmatpush1.msra.mxu0 0.0
      %801 = vmatprep.subr.mxu0 0.0
      %802 = vmatpush1.msra.mxu0 0.0
      %803 = vmatprep.subr.mxu0 0.0
      %804 = vmatpush1.msra.mxu0 0.0
      %805 = vmatprep.subr.mxu0 0.0
      %806 = vmatpush1.msra.mxu0 0.0
      %807 = vmatprep.subr.mxu0 0.0
      %808 = vmatpush1.msra.mxu0 0.0
      %809 = vmatprep.subr.mxu0 0.0
      %810 = vmatpush1.msra.mxu0 0.0
      %811 = vmatprep.subr.mxu0 0.0
      %812 = vmatpush1.msra.mxu0 0.0
      %813 = vmatprep.subr.mxu0 0.0
      %814 = vmatpush1.msra.mxu0 0.0
      %815 = vmatprep.subr.mxu0 0.0
      %816 = vmatpush1.msra.mxu0 0.0
      %817 = vmatprep.subr.mxu0 0.0
      %818 = vmatpush1.msra.mxu0 0.0
      %819 = vmatprep.subr.mxu0 0.0
      %820 = vmatpush1.msra.mxu0 0.0
      %821 = vmatprep.subr.mxu0 0.0
      %822 = vmatpush1.msra.mxu0 0.0
      %823 = vmatprep.subr.mxu0 0.0
      %824 = vmatpush1.msra.mxu0 0.0
      %825 = vmatprep.subr.mxu0 0.0
      %826 = vmatpush1.msra.mxu0 0.0
      %827 = vmatprep.subr.mxu0 0.0
      %828 = vmatpush1.msra.mxu0 0.0
      %829 = vmatprep.subr.mxu0 0.0
      %830 = vmatpush1.msra.mxu0 0.0
      %831 = vmatprep.subr.mxu0 0.0
      %832 = vmatpush1.msra.mxu0 0.0
      %833 = vmatprep.subr.mxu0 0.0
      %834 = vmatpush1.msra.mxu0 0.0
      %835 = vmatprep.subr.mxu0 0.0
      %836 = vmatpush1.msra.mxu0 0.0
      %837 = vmatprep.subr.mxu0 0.0
      %838 = vmatpush1.msra.mxu0 0.0
      %839 = vmatprep.subr.mxu0 0.0
      %840 = vmatpush1.msra.mxu0 0.0
      %841 = vmatprep.mubr.f32.mxu0 0.0
      %842 = vmatmul.mubr.f32.gmra.mrb[0].mxu0 %v355
      %v843 = vpop.f32.mrb[0].mxu0
      %v844 = vadd.f32 0.0, %v843
      %v845 = vpop.f32.mrb[0].mxu0
      %v846 = vadd.f32 0.0, %v845
      %847 = vdwg.mxu0
      %848 = vmatprep.subr.mxu0 %v184
      %849 = vmatpush1.msra.mxu0 %v183
      %850 = vmatprep.subr.mxu0 %v229
      %851 = vmatpush1.msra.mxu0 %v228
      %852 = vmatprep.subr.mxu0 %v274
      %853 = vmatpush1.msra.mxu0 %v273
      %854 = vmatprep.subr.mxu0 %v392
      %855 = vmatpush1.msra.mxu0 %v389
      %856 = vmatprep.subr.mxu0 0.0
      %857 = vmatpush1.msra.mxu0 0.0
      %858 = vmatprep.subr.mxu0 0.0
      %859 = vmatpush1.msra.mxu0 0.0
      %860 = vmatprep.subr.mxu0 0.0
      %861 = vmatpush1.msra.mxu0 0.0
      %862 = vmatprep.subr.mxu0 0.0
      %863 = vmatpush1.msra.mxu0 0.0
      %864 = vmatprep.subr.mxu0 0.0
      %865 = vmatpush1.msra.mxu0 0.0
      %866 = vmatprep.subr.mxu0 0.0
      %867 = vmatpush1.msra.mxu0 0.0
      %868 = vmatprep.subr.mxu0 0.0
      %869 = vmatpush1.msra.mxu0 0.0
      %870 = vmatprep.subr.mxu0 0.0
      %871 = vmatpush1.msra.mxu0 0.0
      %872 = vmatprep.subr.mxu0 0.0
      %873 = vmatpush1.msra.mxu0 0.0
      %874 = vmatprep.subr.mxu0 0.0
      %875 = vmatpush1.msra.mxu0 0.0
      %876 = vmatprep.subr.mxu0 0.0
      %877 = vmatpush1.msra.mxu0 0.0
      %878 = vmatprep.subr.mxu0 0.0
      %879 = vmatpush1.msra.mxu0 0.0
      %880 = vmatprep.subr.mxu0 0.0
      %881 = vmatpush1.msra.mxu0 0.0
      %882 = vmatprep.subr.mxu0 0.0
      %883 = vmatpush1.msra.mxu0 0.0
      %884 = vmatprep.subr.mxu0 0.0
      %885 = vmatpush1.msra.mxu0 0.0
      %886 = vmatprep.subr.mxu0 0.0
      %887 = vmatpush1.msra.mxu0 0.0
      %888 = vmatprep.subr.mxu0 0.0
      %889 = vmatpush1.msra.mxu0 0.0
      %890 = vmatprep.subr.mxu0 0.0
      %891 = vmatpush1.msra.mxu0 0.0
      %892 = vmatprep.subr.mxu0 0.0
      %893 = vmatpush1.msra.mxu0 0.0
      %894 = vmatprep.subr.mxu0 0.0
      %895 = vmatpush1.msra.mxu0 0.0
      %896 = vmatprep.subr.mxu0 0.0
      %897 = vmatpush1.msra.mxu0 0.0
      %898 = vmatprep.subr.mxu0 0.0
      %899 = vmatpush1.msra.mxu0 0.0
      %900 = vmatprep.subr.mxu0 0.0
      %901 = vmatpush1.msra.mxu0 0.0
      %902 = vmatprep.subr.mxu0 0.0
      %903 = vmatpush1.msra.mxu0 0.0
      %904 = vmatprep.subr.mxu0 0.0
      %905 = vmatpush1.msra.mxu0 0.0
      %906 = vmatprep.subr.mxu0 0.0
      %907 = vmatpush1.msra.mxu0 0.0
      %908 = vmatprep.subr.mxu0 0.0
      %909 = vmatpush1.msra.mxu0 0.0
      %910 = vmatprep.subr.mxu0 0.0
      %911 = vmatpush1.msra.mxu0 0.0
      %912 = vmatprep.mubr.f32.mxu0 0.0
      %913 = vmatmul.mubr.f32.gmra.mrb[0].mxu0 %v355
      %v914 = vpop.f32.mrb[0].mxu0
      %v915 = vadd.f32 0.0, %v914
      %v916 = vpop.f32.mrb[0].mxu0
      %v917 = vadd.f32 0.0, %v916
      %918 = vdwg.mxu0
      %919 = vmatprep.subr.mxu0 %v186
      %920 = vmatpush1.msra.mxu0 %v185
      %921 = vmatprep.subr.mxu0 %v231
      %922 = vmatpush1.msra.mxu0 %v230
      %923 = vmatprep.subr.mxu0 %v276
      %924 = vmatpush1.msra.mxu0 %v275
      %925 = vmatprep.subr.mxu0 %v398
      %926 = vmatpush1.msra.mxu0 %v395
      %927 = vmatprep.subr.mxu0 0.0
      %928 = vmatpush1.msra.mxu0 0.0
      %929 = vmatprep.subr.mxu0 0.0
      %930 = vmatpush1.msra.mxu0 0.0
      %931 = vmatprep.subr.mxu0 0.0
      %932 = vmatpush1.msra.mxu0 0.0
      %933 = vmatprep.subr.mxu0 0.0
      %934 = vmatpush1.msra.mxu0 0.0
      %935 = vmatprep.subr.mxu0 0.0
      %936 = vmatpush1.msra.mxu0 0.0
      %937 = vmatprep.subr.mxu0 0.0
      %938 = vmatpush1.msra.mxu0 0.0
      %939 = vmatprep.subr.mxu0 0.0
      %940 = vmatpush1.msra.mxu0 0.0
      %941 = vmatprep.subr.mxu0 0.0
      %942 = vmatpush1.msra.mxu0 0.0
      %943 = vmatprep.subr.mxu0 0.0
      %944 = vmatpush1.msra.mxu0 0.0
      %945 = vmatprep.subr.mxu0 0.0
      %946 = vmatpush1.msra.mxu0 0.0
      %947 = vmatprep.subr.mxu0 0.0
      %948 = vmatpush1.msra.mxu0 0.0
      %949 = vmatprep.subr.mxu0 0.0
      %950 = vmatpush1.msra.mxu0 0.0
      %951 = vmatprep.subr.mxu0 0.0
      %952 = vmatpush1.msra.mxu0 0.0
      %953 = vmatprep.subr.mxu0 0.0
      %954 = vmatpush1.msra.mxu0 0.0
      %955 = vmatprep.subr.mxu0 0.0
      %956 = vmatpush1.msra.mxu0 0.0
      %957 = vmatprep.subr.mxu0 0.0
      %958 = vmatpush1.msra.mxu0 0.0
      %959 = vmatprep.subr.mxu0 0.0
      %960 = vmatpush1.msra.mxu0 0.0
      %961 = vmatprep.subr.mxu0 0.0
      %962 = vmatpush1.msra.mxu0 0.0
      %963 = vmatprep.subr.mxu0 0.0
      %964 = vmatpush1.msra.mxu0 0.0
      %965 = vmatprep.subr.mxu0 0.0
      %966 = vmatpush1.msra.mxu0 0.0
      %967 = vmatprep.subr.mxu0 0.0
      %968 = vmatpush1.msra.mxu0 0.0
      %969 = vmatprep.subr.mxu0 0.0
      %970 = vmatpush1.msra.mxu0 0.0
      %971 = vmatprep.subr.mxu0 0.0
      %972 = vmatpush1.msra.mxu0 0.0
      %973 = vmatprep.subr.mxu0 0.0
      %974 = vmatpush1.msra.mxu0 0.0
      %975 = vmatprep.subr.mxu0 0.0
      %976 = vmatpush1.msra.mxu0 0.0
      %977 = vmatprep.subr.mxu0 0.0
      %978 = vmatpush1.msra.mxu0 0.0
      %979 = vmatprep.subr.mxu0 0.0
      %980 = vmatpush1.msra.mxu0 0.0
      %981 = vmatprep.subr.mxu0 0.0
      %982 = vmatpush1.msra.mxu0 0.0
      %983 = vmatprep.mubr.f32.mxu0 0.0
      %984 = vmatmul.mubr.f32.gmra.mrb[0].mxu0 %v355
      %v985 = vpop.f32.mrb[0].mxu0
      %v986 = vadd.f32 0.0, %v985
      %v987 = vpop.f32.mrb[0].mxu0
      %v988 = vadd.f32 0.0, %v987
      %989 = vdwg.mxu0
      %990 = vmatprep.subr.mxu0 %v188
      %991 = vmatpush1.msra.mxu0 %v187
      %992 = vmatprep.subr.mxu0 %v233
      %993 = vmatpush1.msra.mxu0 %v232
      %994 = vmatprep.subr.mxu0 %v278
      %995 = vmatpush1.msra.mxu0 %v277
      %996 = vmatprep.subr.mxu0 %v404
      %997 = vmatpush1.msra.mxu0 %v401
      %998 = vmatprep.subr.mxu0 0.0
      %999 = vmatpush1.msra.mxu0 0.0
      %1000 = vmatprep.subr.mxu0 0.0
      %1001 = vmatpush1.msra.mxu0 0.0
      %1002 = vmatprep.subr.mxu0 0.0
      %1003 = vmatpush1.msra.mxu0 0.0
      %1004 = vmatprep.subr.mxu0 0.0
      %1005 = vmatpush1.msra.mxu0 0.0
      %1006 = vmatprep.subr.mxu0 0.0
      %1007 = vmatpush1.msra.mxu0 0.0
      %1008 = vmatprep.subr.mxu0 0.0
      %1009 = vmatpush1.msra.mxu0 0.0
      %1010 = vmatprep.subr.mxu0 0.0
      %1011 = vmatpush1.msra.mxu0 0.0
      %1012 = vmatprep.subr.mxu0 0.0
      %1013 = vmatpush1.msra.mxu0 0.0
      %1014 = vmatprep.subr.mxu0 0.0
      %1015 = vmatpush1.msra.mxu0 0.0
      %1016 = vmatprep.subr.mxu0 0.0
      %1017 = vmatpush1.msra.mxu0 0.0
      %1018 = vmatprep.subr.mxu0 0.0
      %1019 = vmatpush1.msra.mxu0 0.0
      %1020 = vmatprep.subr.mxu0 0.0
      %1021 = vmatpush1.msra.mxu0 0.0
      %1022 = vmatprep.subr.mxu0 0.0
      %1023 = vmatpush1.msra.mxu0 0.0
      %1024 = vmatprep.subr.mxu0 0.0
      %1025 = vmatpush1.msra.mxu0 0.0
      %1026 = vmatprep.subr.mxu0 0.0
      %1027 = vmatpush1.msra.mxu0 0.0
      %1028 = vmatprep.subr.mxu0 0.0
      %1029 = vmatpush1.msra.mxu0 0.0
      %1030 = vmatprep.subr.mxu0 0.0
      %1031 = vmatpush1.msra.mxu0 0.0
      %1032 = vmatprep.subr.mxu0 0.0
      %1033 = vmatpush1.msra.mxu0 0.0
      %1034 = vmatprep.subr.mxu0 0.0
      %1035 = vmatpush1.msra.mxu0 0.0
      %1036 = vmatprep.subr.mxu0 0.0
      %1037 = vmatpush1.msra.mxu0 0.0
      %1038 = vmatprep.subr.mxu0 0.0
      %1039 = vmatpush1.msra.mxu0 0.0
      %1040 = vmatprep.subr.mxu0 0.0
      %1041 = vmatpush1.msra.mxu0 0.0
      %1042 = vmatprep.subr.mxu0 0.0
      %1043 = vmatpush1.msra.mxu0 0.0
      %1044 = vmatprep.subr.mxu0 0.0
      %1045 = vmatpush1.msra.mxu0 0.0
      %1046 = vmatprep.subr.mxu0 0.0
      %1047 = vmatpush1.msra.mxu0 0.0
      %1048 = vmatprep.subr.mxu0 0.0
      %1049 = vmatpush1.msra.mxu0 0.0
      %1050 = vmatprep.subr.mxu0 0.0
      %1051 = vmatpush1.msra.mxu0 0.0
      %1052 = vmatprep.subr.mxu0 0.0
      %1053 = vmatpush1.msra.mxu0 0.0
      %1054 = vmatprep.mubr.f32.mxu0 0.0
      %1055 = vmatmul.mubr.f32.gmra.mrb[0].mxu0 %v355
      %v1056 = vpop.f32.mrb[0].mxu0
      %v1057 = vadd.f32 0.0, %v1056
      %v1058 = vpop.f32.mrb[0].mxu0
      %v1059 = vadd.f32 0.0, %v1058
      %1060 = vdwg.mxu0
      %1061 = vmatprep.subr.mxu0 %v190
      %1062 = vmatpush1.msra.mxu0 %v189
      %1063 = vmatprep.subr.mxu0 %v235
      %1064 = vmatpush1.msra.mxu0 %v234
      %1065 = vmatprep.subr.mxu0 %v280
      %1066 = vmatpush1.msra.mxu0 %v279
      %1067 = vmatprep.subr.mxu0 %v410
      %1068 = vmatpush1.msra.mxu0 %v407
      %1069 = vmatprep.subr.mxu0 0.0
      %1070 = vmatpush1.msra.mxu0 0.0
      %1071 = vmatprep.subr.mxu0 0.0
      %1072 = vmatpush1.msra.mxu0 0.0
      %1073 = vmatprep.subr.mxu0 0.0
      %1074 = vmatpush1.msra.mxu0 0.0
      %1075 = vmatprep.subr.mxu0 0.0
      %1076 = vmatpush1.msra.mxu0 0.0
      %1077 = vmatprep.subr.mxu0 0.0
      %1078 = vmatpush1.msra.mxu0 0.0
      %1079 = vmatprep.subr.mxu0 0.0
      %1080 = vmatpush1.msra.mxu0 0.0
      %1081 = vmatprep.subr.mxu0 0.0
      %1082 = vmatpush1.msra.mxu0 0.0
      %1083 = vmatprep.subr.mxu0 0.0
      %1084 = vmatpush1.msra.mxu0 0.0
      %1085 = vmatprep.subr.mxu0 0.0
      %1086 = vmatpush1.msra.mxu0 0.0
      %1087 = vmatprep.subr.mxu0 0.0
      %1088 = vmatpush1.msra.mxu0 0.0
      %1089 = vmatprep.subr.mxu0 0.0
      %1090 = vmatpush1.msra.mxu0 0.0
      %1091 = vmatprep.subr.mxu0 0.0
      %1092 = vmatpush1.msra.mxu0 0.0
      %1093 = vmatprep.subr.mxu0 0.0
      %1094 = vmatpush1.msra.mxu0 0.0
      %1095 = vmatprep.subr.mxu0 0.0
      %1096 = vmatpush1.msra.mxu0 0.0
      %1097 = vmatprep.subr.mxu0 0.0
      %1098 = vmatpush1.msra.mxu0 0.0
      %1099 = vmatprep.subr.mxu0 0.0
      %1100 = vmatpush1.msra.mxu0 0.0
      %1101 = vmatprep.subr.mxu0 0.0
      %1102 = vmatpush1.msra.mxu0 0.0
      %1103 = vmatprep.subr.mxu0 0.0
      %1104 = vmatpush1.msra.mxu0 0.0
      %1105 = vmatprep.subr.mxu0 0.0
      %1106 = vmatpush1.msra.mxu0 0.0
      %1107 = vmatprep.subr.mxu0 0.0
      %1108 = vmatpush1.msra.mxu0 0.0
      %1109 = vmatprep.subr.mxu0 0.0
      %1110 = vmatpush1.msra.mxu0 0.0
      %1111 = vmatprep.subr.mxu0 0.0
      %1112 = vmatpush1.msra.mxu0 0.0
      %1113 = vmatprep.subr.mxu0 0.0
      %1114 = vmatpush1.msra.mxu0 0.0
      %1115 = vmatprep.subr.mxu0 0.0
      %1116 = vmatpush1.msra.mxu0 0.0
      %1117 = vmatprep.subr.mxu0 0.0
      %1118 = vmatpush1.msra.mxu0 0.0
      %1119 = vmatprep.subr.mxu0 0.0
      %1120 = vmatpush1.msra.mxu0 0.0
      %1121 = vmatprep.subr.mxu0 0.0
      %1122 = vmatpush1.msra.mxu0 0.0
      %1123 = vmatprep.subr.mxu0 0.0
      %1124 = vmatpush1.msra.mxu0 0.0
      %1125 = vmatprep.mubr.f32.mxu0 0.0
      %1126 = vmatmul.mubr.f32.gmra.mrb[0].mxu0 %v355
      %v1127 = vpop.f32.mrb[0].mxu0
      %v1128 = vadd.f32 0.0, %v1127
      %v1129 = vpop.f32.mrb[0].mxu0
      %v1130 = vadd.f32 0.0, %v1129
      %1131 = vdwg.mxu0
      %1132 = vmatprep.subr.mxu0 %v192
      %1133 = vmatpush1.msra.mxu0 %v191
      %1134 = vmatprep.subr.mxu0 %v237
      %1135 = vmatpush1.msra.mxu0 %v236
      %1136 = vmatprep.subr.mxu0 %v282
      %1137 = vmatpush1.msra.mxu0 %v281
      %1138 = vmatprep.subr.mxu0 %v416
      %1139 = vmatpush1.msra.mxu0 %v413
      %1140 = vmatprep.subr.mxu0 0.0
      %1141 = vmatpush1.msra.mxu0 0.0
      %1142 = vmatprep.subr.mxu0 0.0
      %1143 = vmatpush1.msra.mxu0 0.0
      %1144 = vmatprep.subr.mxu0 0.0
      %1145 = vmatpush1.msra.mxu0 0.0
      %1146 = vmatprep.subr.mxu0 0.0
      %1147 = vmatpush1.msra.mxu0 0.0
      %1148 = vmatprep.subr.mxu0 0.0
      %1149 = vmatpush1.msra.mxu0 0.0
      %1150 = vmatprep.subr.mxu0 0.0
      %1151 = vmatpush1.msra.mxu0 0.0
      %1152 = vmatprep.subr.mxu0 0.0
      %1153 = vmatpush1.msra.mxu0 0.0
      %1154 = vmatprep.subr.mxu0 0.0
      %1155 = vmatpush1.msra.mxu0 0.0
      %1156 = vmatprep.subr.mxu0 0.0
      %1157 = vmatpush1.msra.mxu0 0.0
      %1158 = vmatprep.subr.mxu0 0.0
      %1159 = vmatpush1.msra.mxu0 0.0
      %1160 = vmatprep.subr.mxu0 0.0
      %1161 = vmatpush1.msra.mxu0 0.0
      %1162 = vmatprep.subr.mxu0 0.0
      %1163 = vmatpush1.msra.mxu0 0.0
      %1164 = vmatprep.subr.mxu0 0.0
      %1165 = vmatpush1.msra.mxu0 0.0
      %1166 = vmatprep.subr.mxu0 0.0
      %1167 = vmatpush1.msra.mxu0 0.0
      %1168 = vmatprep.subr.mxu0 0.0
      %1169 = vmatpush1.msra.mxu0 0.0
      %1170 = vmatprep.subr.mxu0 0.0
      %1171 = vmatpush1.msra.mxu0 0.0
      %1172 = vmatprep.subr.mxu0 0.0
      %1173 = vmatpush1.msra.mxu0 0.0
      %1174 = vmatprep.subr.mxu0 0.0
      %1175 = vmatpush1.msra.mxu0 0.0
      %1176 = vmatprep.subr.mxu0 0.0
      %1177 = vmatpush1.msra.mxu0 0.0
      %1178 = vmatprep.subr.mxu0 0.0
      %1179 = vmatpush1.msra.mxu0 0.0
      %1180 = vmatprep.subr.mxu0 0.0
      %1181 = vmatpush1.msra.mxu0 0.0
      %1182 = vmatprep.subr.mxu0 0.0
      %1183 = vmatpush1.msra.mxu0 0.0
      %1184 = vmatprep.subr.mxu0 0.0
      %1185 = vmatpush1.msra.mxu0 0.0
      %1186 = vmatprep.subr.mxu0 0.0
      %1187 = vmatpush1.msra.mxu0 0.0
      %1188 = vmatprep.subr.mxu0 0.0
      %1189 = vmatpush1.msra.mxu0 0.0
      %1190 = vmatprep.subr.mxu0 0.0
      %1191 = vmatpush1.msra.mxu0 0.0
      %1192 = vmatprep.subr.mxu0 0.0
      %1193 = vmatpush1.msra.mxu0 0.0
      %1194 = vmatprep.subr.mxu0 0.0
      %1195 = vmatpush1.msra.mxu0 0.0
      %1196 = vmatprep.mubr.f32.mxu0 0.0
      %1197 = vmatmul.mubr.f32.gmra.mrb[0].mxu0 %v355
      %v1198 = vpop.f32.mrb[0].mxu0
      %v1199 = vadd.f32 0.0, %v1198
      %v1200 = vpop.f32.mrb[0].mxu0
      %v1201 = vadd.f32 0.0, %v1200
      %1202 = vdwg.mxu0
      %1203 = vmatprep.subr.mxu0 %v194
      %1204 = vmatpush1.msra.mxu0 %v193
      %1205 = vmatprep.subr.mxu0 %v239
      %1206 = vmatpush1.msra.mxu0 %v238
      %1207 = vmatprep.subr.mxu0 %v284
      %1208 = vmatpush1.msra.mxu0 %v283
      %1209 = vmatprep.subr.mxu0 %v422
      %1210 = vmatpush1.msra.mxu0 %v419
      %1211 = vmatprep.subr.mxu0 0.0
      %1212 = vmatpush1.msra.mxu0 0.0
      %1213 = vmatprep.subr.mxu0 0.0
      %1214 = vmatpush1.msra.mxu0 0.0
      %1215 = vmatprep.subr.mxu0 0.0
      %1216 = vmatpush1.msra.mxu0 0.0
      %1217 = vmatprep.subr.mxu0 0.0
      %1218 = vmatpush1.msra.mxu0 0.0
      %1219 = vmatprep.subr.mxu0 0.0
      %1220 = vmatpush1.msra.mxu0 0.0
      %1221 = vmatprep.subr.mxu0 0.0
      %1222 = vmatpush1.msra.mxu0 0.0
      %1223 = vmatprep.subr.mxu0 0.0
      %1224 = vmatpush1.msra.mxu0 0.0
      %1225 = vmatprep.subr.mxu0 0.0
      %1226 = vmatpush1.msra.mxu0 0.0
      %1227 = vmatprep.subr.mxu0 0.0
      %1228 = vmatpush1.msra.mxu0 0.0
      %1229 = vmatprep.subr.mxu0 0.0
      %1230 = vmatpush1.msra.mxu0 0.0
      %1231 = vmatprep.subr.mxu0 0.0
      %1232 = vmatpush1.msra.mxu0 0.0
      %1233 = vmatprep.subr.mxu0 0.0
      %1234 = vmatpush1.msra.mxu0 0.0
      %1235 = vmatprep.subr.mxu0 0.0
      %1236 = vmatpush1.msra.mxu0 0.0
      %1237 = vmatprep.subr.mxu0 0.0
      %1238 = vmatpush1.msra.mxu0 0.0
      %1239 = vmatprep.subr.mxu0 0.0
      %1240 = vmatpush1.msra.mxu0 0.0
      %1241 = vmatprep.subr.mxu0 0.0
      %1242 = vmatpush1.msra.mxu0 0.0
      %1243 = vmatprep.subr.mxu0 0.0
      %1244 = vmatpush1.msra.mxu0 0.0
      %1245 = vmatprep.subr.mxu0 0.0
      %1246 = vmatpush1.msra.mxu0 0.0
      %1247 = vmatprep.subr.mxu0 0.0
      %1248 = vmatpush1.msra.mxu0 0.0
      %1249 = vmatprep.subr.mxu0 0.0
      %1250 = vmatpush1.msra.mxu0 0.0
      %1251 = vmatprep.subr.mxu0 0.0
      %1252 = vmatpush1.msra.mxu0 0.0
      %1253 = vmatprep.subr.mxu0 0.0
      %1254 = vmatpush1.msra.mxu0 0.0
      %1255 = vmatprep.subr.mxu0 0.0
      %1256 = vmatpush1.msra.mxu0 0.0
      %1257 = vmatprep.subr.mxu0 0.0
      %1258 = vmatpush1.msra.mxu0 0.0
      %1259 = vmatprep.subr.mxu0 0.0
      %1260 = vmatpush1.msra.mxu0 0.0
      %1261 = vmatprep.subr.mxu0 0.0
      %1262 = vmatpush1.msra.mxu0 0.0
      %1263 = vmatprep.subr.mxu0 0.0
      %1264 = vmatpush1.msra.mxu0 0.0
      %1265 = vmatprep.subr.mxu0 0.0
      %1266 = vmatpush1.msra.mxu0 0.0
      %1267 = vmatprep.mubr.f32.mxu0 0.0
      %1268 = vmatmul.mubr.f32.gmra.mrb[0].mxu0 %v355
      %v1269 = vpop.f32.mrb[0].mxu0
      %v1270 = vadd.f32 0.0, %v1269
      %v1271 = vpop.f32.mrb[0].mxu0
      %v1272 = vadd.f32 0.0, %v1271
      %1273 = vdwg.mxu0
      %1274 = vmatprep.subr.mxu0 %v196
      %1275 = vmatpush1.msra.mxu0 %v195
      %1276 = vmatprep.subr.mxu0 %v241
      %1277 = vmatpush1.msra.mxu0 %v240
      %1278 = vmatprep.subr.mxu0 %v286
      %1279 = vmatpush1.msra.mxu0 %v285
      %1280 = vmatprep.subr.mxu0 %v428
      %1281 = vmatpush1.msra.mxu0 %v425
      %1282 = vmatprep.subr.mxu0 0.0
      %1283 = vmatpush1.msra.mxu0 0.0
      %1284 = vmatprep.subr.mxu0 0.0
      %1285 = vmatpush1.msra.mxu0 0.0
      %1286 = vmatprep.subr.mxu0 0.0
      %1287 = vmatpush1.msra.mxu0 0.0
      %1288 = vmatprep.subr.mxu0 0.0
      %1289 = vmatpush1.msra.mxu0 0.0
      %1290 = vmatprep.subr.mxu0 0.0
      %1291 = vmatpush1.msra.mxu0 0.0
      %1292 = vmatprep.subr.mxu0 0.0
      %1293 = vmatpush1.msra.mxu0 0.0
      %1294 = vmatprep.subr.mxu0 0.0
      %1295 = vmatpush1.msra.mxu0 0.0
      %1296 = vmatprep.subr.mxu0 0.0
      %1297 = vmatpush1.msra.mxu0 0.0
      %1298 = vmatprep.subr.mxu0 0.0
      %1299 = vmatpush1.msra.mxu0 0.0
      %1300 = vmatprep.subr.mxu0 0.0
      %1301 = vmatpush1.msra.mxu0 0.0
      %1302 = vmatprep.subr.mxu0 0.0
      %1303 = vmatpush1.msra.mxu0 0.0
      %1304 = vmatprep.subr.mxu0 0.0
      %1305 = vmatpush1.msra.mxu0 0.0
      %1306 = vmatprep.subr.mxu0 0.0
      %1307 = vmatpush1.msra.mxu0 0.0
      %1308 = vmatprep.subr.mxu0 0.0
      %1309 = vmatpush1.msra.mxu0 0.0
      %1310 = vmatprep.subr.mxu0 0.0
      %1311 = vmatpush1.msra.mxu0 0.0
      %1312 = vmatprep.subr.mxu0 0.0
      %1313 = vmatpush1.msra.mxu0 0.0
      %1314 = vmatprep.subr.mxu0 0.0
      %1315 = vmatpush1.msra.mxu0 0.0
      %1316 = vmatprep.subr.mxu0 0.0
      %1317 = vmatpush1.msra.mxu0 0.0
      %1318 = vmatprep.subr.mxu0 0.0
      %1319 = vmatpush1.msra.mxu0 0.0
      %1320 = vmatprep.subr.mxu0 0.0
      %1321 = vmatpush1.msra.mxu0 0.0
      %1322 = vmatprep.subr.mxu0 0.0
      %1323 = vmatpush1.msra.mxu0 0.0
      %1324 = vmatprep.subr.mxu0 0.0
      %1325 = vmatpush1.msra.mxu0 0.0
      %1326 = vmatprep.subr.mxu0 0.0
      %1327 = vmatpush1.msra.mxu0 0.0
      %1328 = vmatprep.subr.mxu0 0.0
      %1329 = vmatpush1.msra.mxu0 0.0
      %1330 = vmatprep.subr.mxu0 0.0
      %1331 = vmatpush1.msra.mxu0 0.0
      %1332 = vmatprep.subr.mxu0 0.0
      %1333 = vmatpush1.msra.mxu0 0.0
      %1334 = vmatprep.subr.mxu0 0.0
      %1335 = vmatpush1.msra.mxu0 0.0
      %1336 = vmatprep.subr.mxu0 0.0
      %1337 = vmatpush1.msra.mxu0 0.0
      %1338 = vmatprep.mubr.f32.mxu0 0.0
      %1339 = vmatmul.mubr.f32.gmra.mrb[0].mxu0 %v355
      %v1340 = vpop.f32.mrb[0].mxu0
      %v1341 = vadd.f32 0.0, %v1340
      %v1342 = vpop.f32.mrb[0].mxu0
      %v1343 = vadd.f32 0.0, %v1342
      %1344 = vdwg.mxu0
      %1345 = vmatprep.subr.mxu0 %v198
      %1346 = vmatpush1.msra.mxu0 %v197
      %1347 = vmatprep.subr.mxu0 %v243
      %1348 = vmatpush1.msra.mxu0 %v242
      %1349 = vmatprep.subr.mxu0 %v288
      %1350 = vmatpush1.msra.mxu0 %v287
      %1351 = vmatprep.subr.mxu0 %v434
      %1352 = vmatpush1.msra.mxu0 %v431
      %1353 = vmatprep.subr.mxu0 0.0
      %1354 = vmatpush1.msra.mxu0 0.0
      %1355 = vmatprep.subr.mxu0 0.0
      %1356 = vmatpush1.msra.mxu0 0.0
      %1357 = vmatprep.subr.mxu0 0.0
      %1358 = vmatpush1.msra.mxu0 0.0
      %1359 = vmatprep.subr.mxu0 0.0
      %1360 = vmatpush1.msra.mxu0 0.0
      %1361 = vmatprep.subr.mxu0 0.0
      %1362 = vmatpush1.msra.mxu0 0.0
      %1363 = vmatprep.subr.mxu0 0.0
      %1364 = vmatpush1.msra.mxu0 0.0
      %1365 = vmatprep.subr.mxu0 0.0
      %1366 = vmatpush1.msra.mxu0 0.0
      %1367 = vmatprep.subr.mxu0 0.0
      %1368 = vmatpush1.msra.mxu0 0.0
      %1369 = vmatprep.subr.mxu0 0.0
      %1370 = vmatpush1.msra.mxu0 0.0
      %1371 = vmatprep.subr.mxu0 0.0
      %1372 = vmatpush1.msra.mxu0 0.0
      %1373 = vmatprep.subr.mxu0 0.0
      %1374 = vmatpush1.msra.mxu0 0.0
      %1375 = vmatprep.subr.mxu0 0.0
      %1376 = vmatpush1.msra.mxu0 0.0
      %1377 = vmatprep.subr.mxu0 0.0
      %1378 = vmatpush1.msra.mxu0 0.0
      %1379 = vmatprep.subr.mxu0 0.0
      %1380 = vmatpush1.msra.mxu0 0.0
      %1381 = vmatprep.subr.mxu0 0.0
      %1382 = vmatpush1.msra.mxu0 0.0
      %1383 = vmatprep.subr.mxu0 0.0
      %1384 = vmatpush1.msra.mxu0 0.0
      %1385 = vmatprep.subr.mxu0 0.0
      %1386 = vmatpush1.msra.mxu0 0.0
      %1387 = vmatprep.subr.mxu0 0.0
      %1388 = vmatpush1.msra.mxu0 0.0
      %1389 = vmatprep.subr.mxu0 0.0
      %1390 = vmatpush1.msra.mxu0 0.0
      %1391 = vmatprep.subr.mxu0 0.0
      %1392 = vmatpush1.msra.mxu0 0.0
      %1393 = vmatprep.subr.mxu0 0.0
      %1394 = vmatpush1.msra.mxu0 0.0
      %1395 = vmatprep.subr.mxu0 0.0
      %1396 = vmatpush1.msra.mxu0 0.0
      %1397 = vmatprep.subr.mxu0 0.0
      %1398 = vmatpush1.msra.mxu0 0.0
      %1399 = vmatprep.subr.mxu0 0.0
      %1400 = vmatpush1.msra.mxu0 0.0
      %1401 = vmatprep.subr.mxu0 0.0
      %1402 = vmatpush1.msra.mxu0 0.0
      %1403 = vmatprep.subr.mxu0 0.0
      %1404 = vmatpush1.msra.mxu0 0.0
      %1405 = vmatprep.subr.mxu0 0.0
      %1406 = vmatpush1.msra.mxu0 0.0
      %1407 = vmatprep.subr.mxu0 0.0
      %1408 = vmatpush1.msra.mxu0 0.0
      %1409 = vmatprep.mubr.f32.mxu0 0.0
      %1410 = vmatmul.mubr.f32.gmra.mrb[0].mxu0 %v355
      %v1411 = vpop.f32.mrb[0].mxu0
      %v1412 = vadd.f32 0.0, %v1411
      %v1413 = vpop.f32.mrb[0].mxu0
      %v1414 = vadd.f32 0.0, %v1413
      %1415 = vdwg.mxu0
      %1416 = vmatprep.subr.mxu0 %v200
      %1417 = vmatpush1.msra.mxu0 %v199
      %1418 = vmatprep.subr.mxu0 %v245
      %1419 = vmatpush1.msra.mxu0 %v244
      %1420 = vmatprep.subr.mxu0 %v290
      %1421 = vmatpush1.msra.mxu0 %v289
      %1422 = vmatprep.subr.mxu0 %v440
      %1423 = vmatpush1.msra.mxu0 %v437
      %1424 = vmatprep.subr.mxu0 0.0
      %1425 = vmatpush1.msra.mxu0 0.0
      %1426 = vmatprep.subr.mxu0 0.0
      %1427 = vmatpush1.msra.mxu0 0.0
      %1428 = vmatprep.subr.mxu0 0.0
      %1429 = vmatpush1.msra.mxu0 0.0
      %1430 = vmatprep.subr.mxu0 0.0
      %1431 = vmatpush1.msra.mxu0 0.0
      %1432 = vmatprep.subr.mxu0 0.0
      %1433 = vmatpush1.msra.mxu0 0.0
      %1434 = vmatprep.subr.mxu0 0.0
      %1435 = vmatpush1.msra.mxu0 0.0
      %1436 = vmatprep.subr.mxu0 0.0
      %1437 = vmatpush1.msra.mxu0 0.0
      %1438 = vmatprep.subr.mxu0 0.0
      %1439 = vmatpush1.msra.mxu0 0.0
      %1440 = vmatprep.subr.mxu0 0.0
      %1441 = vmatpush1.msra.mxu0 0.0
      %1442 = vmatprep.subr.mxu0 0.0
      %1443 = vmatpush1.msra.mxu0 0.0
      %1444 = vmatprep.subr.mxu0 0.0
      %1445 = vmatpush1.msra.mxu0 0.0
      %1446 = vmatprep.subr.mxu0 0.0
      %1447 = vmatpush1.msra.mxu0 0.0
      %1448 = vmatprep.subr.mxu0 0.0
      %1449 = vmatpush1.msra.mxu0 0.0
      %1450 = vmatprep.subr.mxu0 0.0
      %1451 = vmatpush1.msra.mxu0 0.0
      %1452 = vmatprep.subr.mxu0 0.0
      %1453 = vmatpush1.msra.mxu0 0.0
      %1454 = vmatprep.subr.mxu0 0.0
      %1455 = vmatpush1.msra.mxu0 0.0
      %1456 = vmatprep.subr.mxu0 0.0
      %1457 = vmatpush1.msra.mxu0 0.0
      %1458 = vmatprep.subr.mxu0 0.0
      %1459 = vmatpush1.msra.mxu0 0.0
      %1460 = vmatprep.subr.mxu0 0.0
      %1461 = vmatpush1.msra.mxu0 0.0
      %1462 = vmatprep.subr.mxu0 0.0
      %1463 = vmatpush1.msra.mxu0 0.0
      %1464 = vmatprep.subr.mxu0 0.0
      %1465 = vmatpush1.msra.mxu0 0.0
      %1466 = vmatprep.subr.mxu0 0.0
      %1467 = vmatpush1.msra.mxu0 0.0
      %1468 = vmatprep.subr.mxu0 0.0
      %1469 = vmatpush1.msra.mxu0 0.0
      %1470 = vmatprep.subr.mxu0 0.0
      %1471 = vmatpush1.msra.mxu0 0.0
      %1472 = vmatprep.subr.mxu0 0.0
      %1473 = vmatpush1.msra.mxu0 0.0
      %1474 = vmatprep.subr.mxu0 0.0
      %1475 = vmatpush1.msra.mxu0 0.0
      %1476 = vmatprep.subr.mxu0 0.0
      %1477 = vmatpush1.msra.mxu0 0.0
      %1478 = vmatprep.subr.mxu0 0.0
      %1479 = vmatpush1.msra.mxu0 0.0
      %1480 = vmatprep.mubr.f32.mxu0 0.0
      %1481 = vmatmul.mubr.f32.gmra.mrb[0].mxu0 %v355
      %v1482 = vpop.f32.mrb[0].mxu0
      %v1483 = vadd.f32 0.0, %v1482
      %v1484 = vpop.f32.mrb[0].mxu0
      %v1485 = vadd.f32 0.0, %v1484
      %1486 = vdwg.mxu0
      %1487 = vmatprep.subr.mxu0 %v202
      %1488 = vmatpush1.msra.mxu0 %v201
      %1489 = vmatprep.subr.mxu0 %v247
      %1490 = vmatpush1.msra.mxu0 %v246
      %1491 = vmatprep.subr.mxu0 %v292
      %1492 = vmatpush1.msra.mxu0 %v291
      %1493 = vmatprep.subr.mxu0 %v446
      %1494 = vmatpush1.msra.mxu0 %v443
      %1495 = vmatprep.subr.mxu0 0.0
      %1496 = vmatpush1.msra.mxu0 0.0
      %1497 = vmatprep.subr.mxu0 0.0
      %1498 = vmatpush1.msra.mxu0 0.0
      %1499 = vmatprep.subr.mxu0 0.0
      %1500 = vmatpush1.msra.mxu0 0.0
      %1501 = vmatprep.subr.mxu0 0.0
      %1502 = vmatpush1.msra.mxu0 0.0
      %1503 = vmatprep.subr.mxu0 0.0
      %1504 = vmatpush1.msra.mxu0 0.0
      %1505 = vmatprep.subr.mxu0 0.0
      %1506 = vmatpush1.msra.mxu0 0.0
      %1507 = vmatprep.subr.mxu0 0.0
      %1508 = vmatpush1.msra.mxu0 0.0
      %1509 = vmatprep.subr.mxu0 0.0
      %1510 = vmatpush1.msra.mxu0 0.0
      %1511 = vmatprep.subr.mxu0 0.0
      %1512 = vmatpush1.msra.mxu0 0.0
      %1513 = vmatprep.subr.mxu0 0.0
      %1514 = vmatpush1.msra.mxu0 0.0
      %1515 = vmatprep.subr.mxu0 0.0
      %1516 = vmatpush1.msra.mxu0 0.0
      %1517 = vmatprep.subr.mxu0 0.0
      %1518 = vmatpush1.msra.mxu0 0.0
      %1519 = vmatprep.subr.mxu0 0.0
      %1520 = vmatpush1.msra.mxu0 0.0
      %1521 = vmatprep.subr.mxu0 0.0
      %1522 = vmatpush1.msra.mxu0 0.0
      %1523 = vmatprep.subr.mxu0 0.0
      %1524 = vmatpush1.msra.mxu0 0.0
      %1525 = vmatprep.subr.mxu0 0.0
      %1526 = vmatpush1.msra.mxu0 0.0
      %1527 = vmatprep.subr.mxu0 0.0
      %1528 = vmatpush1.msra.mxu0 0.0
      %1529 = vmatprep.subr.mxu0 0.0
      %1530 = vmatpush1.msra.mxu0 0.0
      %1531 = vmatprep.subr.mxu0 0.0
      %1532 = vmatpush1.msra.mxu0 0.0
      %1533 = vmatprep.subr.mxu0 0.0
      %1534 = vmatpush1.msra.mxu0 0.0
      %1535 = vmatprep.subr.mxu0 0.0
      %1536 = vmatpush1.msra.mxu0 0.0
      %1537 = vmatprep.subr.mxu0 0.0
      %1538 = vmatpush1.msra.mxu0 0.0
      %1539 = vmatprep.subr.mxu0 0.0
      %1540 = vmatpush1.msra.mxu0 0.0
      %1541 = vmatprep.subr.mxu0 0.0
      %1542 = vmatpush1.msra.mxu0 0.0
      %1543 = vmatprep.subr.mxu0 0.0
      %1544 = vmatpush1.msra.mxu0 0.0
      %1545 = vmatprep.subr.mxu0 0.0
      %1546 = vmatpush1.msra.mxu0 0.0
      %1547 = vmatprep.subr.mxu0 0.0
      %1548 = vmatpush1.msra.mxu0 0.0
      %1549 = vmatprep.subr.mxu0 0.0
      %1550 = vmatpush1.msra.mxu0 0.0
      %1551 = vmatprep.mubr.f32.mxu0 0.0
      %1552 = vmatmul.mubr.f32.gmra.mrb[0].mxu0 %v355
      %v1553 = vpop.f32.mrb[0].mxu0
      %v1554 = vadd.f32 0.0, %v1553
      %v1555 = vpop.f32.mrb[0].mxu0
      %v1556 = vadd.f32 0.0, %v1555
      %1557 = vdwg.mxu0
      %1558 = vmatprep.subr.mxu0 %v204
      %1559 = vmatpush1.msra.mxu0 %v203
      %1560 = vmatprep.subr.mxu0 %v249
      %1561 = vmatpush1.msra.mxu0 %v248
      %1562 = vmatprep.subr.mxu0 %v294
      %1563 = vmatpush1.msra.mxu0 %v293
      %1564 = vmatprep.subr.mxu0 %v452
      %1565 = vmatpush1.msra.mxu0 %v449
      %1566 = vmatprep.subr.mxu0 0.0
      %1567 = vmatpush1.msra.mxu0 0.0
      %1568 = vmatprep.subr.mxu0 0.0
      %1569 = vmatpush1.msra.mxu0 0.0
      %1570 = vmatprep.subr.mxu0 0.0
      %1571 = vmatpush1.msra.mxu0 0.0
      %1572 = vmatprep.subr.mxu0 0.0
      %1573 = vmatpush1.msra.mxu0 0.0
      %1574 = vmatprep.subr.mxu0 0.0
      %1575 = vmatpush1.msra.mxu0 0.0
      %1576 = vmatprep.subr.mxu0 0.0
      %1577 = vmatpush1.msra.mxu0 0.0
      %1578 = vmatprep.subr.mxu0 0.0
      %1579 = vmatpush1.msra.mxu0 0.0
      %1580 = vmatprep.subr.mxu0 0.0
      %1581 = vmatpush1.msra.mxu0 0.0
      %1582 = vmatprep.subr.mxu0 0.0
      %1583 = vmatpush1.msra.mxu0 0.0
      %1584 = vmatprep.subr.mxu0 0.0
      %1585 = vmatpush1.msra.mxu0 0.0
      %1586 = vmatprep.subr.mxu0 0.0
      %1587 = vmatpush1.msra.mxu0 0.0
      %1588 = vmatprep.subr.mxu0 0.0
      %1589 = vmatpush1.msra.mxu0 0.0
      %1590 = vmatprep.subr.mxu0 0.0
      %1591 = vmatpush1.msra.mxu0 0.0
      %1592 = vmatprep.subr.mxu0 0.0
      %1593 = vmatpush1.msra.mxu0 0.0
      %1594 = vmatprep.subr.mxu0 0.0
      %1595 = vmatpush1.msra.mxu0 0.0
      %1596 = vmatprep.subr.mxu0 0.0
      %1597 = vmatpush1.msra.mxu0 0.0
      %1598 = vmatprep.subr.mxu0 0.0
      %1599 = vmatpush1.msra.mxu0 0.0
      %1600 = vmatprep.subr.mxu0 0.0
      %1601 = vmatpush1.msra.mxu0 0.0
      %1602 = vmatprep.subr.mxu0 0.0
      %1603 = vmatpush1.msra.mxu0 0.0
      %1604 = vmatprep.subr.mxu0 0.0
      %1605 = vmatpush1.msra.mxu0 0.0
      %1606 = vmatprep.subr.mxu0 0.0
      %1607 = vmatpush1.msra.mxu0 0.0
      %1608 = vmatprep.subr.mxu0 0.0
      %1609 = vmatpush1.msra.mxu0 0.0
      %1610 = vmatprep.subr.mxu0 0.0
      %1611 = vmatpush1.msra.mxu0 0.0
      %1612 = vmatprep.subr.mxu0 0.0
      %1613 = vmatpush1.msra.mxu0 0.0
      %1614 = vmatprep.subr.mxu0 0.0
      %1615 = vmatpush1.msra.mxu0 0.0
      %1616 = vmatprep.subr.mxu0 0.0
      %1617 = vmatpush1.msra.mxu0 0.0
      %1618 = vmatprep.subr.mxu0 0.0
      %1619 = vmatpush1.msra.mxu0 0.0
      %1620 = vmatprep.subr.mxu0 0.0
      %1621 = vmatpush1.msra.mxu0 0.0
      %1622 = vmatprep.mubr.f32.mxu0 0.0
      %1623 = vmatmul.mubr.f32.gmra.mrb[0].mxu0 %v355
      %v1624 = vpop.f32.mrb[0].mxu0
      %v1625 = vadd.f32 0.0, %v1624
      %v1626 = vpop.f32.mrb[0].mxu0
      %v1627 = vadd.f32 0.0, %v1626
      %1628 = vdwg.mxu0
      %1629 = vmatprep.subr.mxu0 %v206
      %1630 = vmatpush1.msra.mxu0 %v205
      %1631 = vmatprep.subr.mxu0 %v251
      %1632 = vmatpush1.msra.mxu0 %v250
      %1633 = vmatprep.subr.mxu0 %v296
      %1634 = vmatpush1.msra.mxu0 %v295
      %1635 = vmatprep.subr.mxu0 %v458
      %1636 = vmatpush1.msra.mxu0 %v455
      %1637 = vmatprep.subr.mxu0 0.0
      %1638 = vmatpush1.msra.mxu0 0.0
      %1639 = vmatprep.subr.mxu0 0.0
      %1640 = vmatpush1.msra.mxu0 0.0
      %1641 = vmatprep.subr.mxu0 0.0
      %1642 = vmatpush1.msra.mxu0 0.0
      %1643 = vmatprep.subr.mxu0 0.0
      %1644 = vmatpush1.msra.mxu0 0.0
      %1645 = vmatprep.subr.mxu0 0.0
      %1646 = vmatpush1.msra.mxu0 0.0
      %1647 = vmatprep.subr.mxu0 0.0
      %1648 = vmatpush1.msra.mxu0 0.0
      %1649 = vmatprep.subr.mxu0 0.0
      %1650 = vmatpush1.msra.mxu0 0.0
      %1651 = vmatprep.subr.mxu0 0.0
      %1652 = vmatpush1.msra.mxu0 0.0
      %1653 = vmatprep.subr.mxu0 0.0
      %1654 = vmatpush1.msra.mxu0 0.0
      %1655 = vmatprep.subr.mxu0 0.0
      %1656 = vmatpush1.msra.mxu0 0.0
      %1657 = vmatprep.subr.mxu0 0.0
      %1658 = vmatpush1.msra.mxu0 0.0
      %1659 = vmatprep.subr.mxu0 0.0
      %1660 = vmatpush1.msra.mxu0 0.0
      %1661 = vmatprep.subr.mxu0 0.0
      %1662 = vmatpush1.msra.mxu0 0.0
      %1663 = vmatprep.subr.mxu0 0.0
      %1664 = vmatpush1.msra.mxu0 0.0
      %1665 = vmatprep.subr.mxu0 0.0
      %1666 = vmatpush1.msra.mxu0 0.0
      %1667 = vmatprep.subr.mxu0 0.0
      %1668 = vmatpush1.msra.mxu0 0.0
      %1669 = vmatprep.subr.mxu0 0.0
      %1670 = vmatpush1.msra.mxu0 0.0
      %1671 = vmatprep.subr.mxu0 0.0
      %1672 = vmatpush1.msra.mxu0 0.0
      %1673 = vmatprep.subr.mxu0 0.0
      %1674 = vmatpush1.msra.mxu0 0.0
      %1675 = vmatprep.subr.mxu0 0.0
      %1676 = vmatpush1.msra.mxu0 0.0
      %1677 = vmatprep.subr.mxu0 0.0
      %1678 = vmatpush1.msra.mxu0 0.0
      %1679 = vmatprep.subr.mxu0 0.0
      %1680 = vmatpush1.msra.mxu0 0.0
      %1681 = vmatprep.subr.mxu0 0.0
      %1682 = vmatpush1.msra.mxu0 0.0
      %1683 = vmatprep.subr.mxu0 0.0
      %1684 = vmatpush1.msra.mxu0 0.0
      %1685 = vmatprep.subr.mxu0 0.0
      %1686 = vmatpush1.msra.mxu0 0.0
      %1687 = vmatprep.subr.mxu0 0.0
      %1688 = vmatpush1.msra.mxu0 0.0
      %1689 = vmatprep.subr.mxu0 0.0
      %1690 = vmatpush1.msra.mxu0 0.0
      %1691 = vmatprep.subr.mxu0 0.0
      %1692 = vmatpush1.msra.mxu0 0.0
      %1693 = vmatprep.mubr.f32.mxu0 0.0
      %1694 = vmatmul.mubr.f32.gmra.mrb[0].mxu0 %v355
      %v1695 = vpop.f32.mrb[0].mxu0
      %v1696 = vadd.f32 0.0, %v1695
      %v1697 = vpop.f32.mrb[0].mxu0
      %v1698 = vadd.f32 0.0, %v1697
      %1699 = vdwg.mxu0
      %1700 = vmatprep.subr.mxu0 %v208
      %1701 = vmatpush1.msra.mxu0 %v207
      %1702 = vmatprep.subr.mxu0 %v253
      %1703 = vmatpush1.msra.mxu0 %v252
      %1704 = vmatprep.subr.mxu0 %v298
      %1705 = vmatpush1.msra.mxu0 %v297
      %1706 = vmatprep.subr.mxu0 %v464
      %1707 = vmatpush1.msra.mxu0 %v461
      %1708 = vmatprep.subr.mxu0 0.0
      %1709 = vmatpush1.msra.mxu0 0.0
      %1710 = vmatprep.subr.mxu0 0.0
      %1711 = vmatpush1.msra.mxu0 0.0
      %1712 = vmatprep.subr.mxu0 0.0
      %1713 = vmatpush1.msra.mxu0 0.0
      %1714 = vmatprep.subr.mxu0 0.0
      %1715 = vmatpush1.msra.mxu0 0.0
      %1716 = vmatprep.subr.mxu0 0.0
      %1717 = vmatpush1.msra.mxu0 0.0
      %1718 = vmatprep.subr.mxu0 0.0
      %1719 = vmatpush1.msra.mxu0 0.0
      %1720 = vmatprep.subr.mxu0 0.0
      %1721 = vmatpush1.msra.mxu0 0.0
      %1722 = vmatprep.subr.mxu0 0.0
      %1723 = vmatpush1.msra.mxu0 0.0
      %1724 = vmatprep.subr.mxu0 0.0
      %1725 = vmatpush1.msra.mxu0 0.0
      %1726 = vmatprep.subr.mxu0 0.0
      %1727 = vmatpush1.msra.mxu0 0.0
      %1728 = vmatprep.subr.mxu0 0.0
      %1729 = vmatpush1.msra.mxu0 0.0
      %1730 = vmatprep.subr.mxu0 0.0
      %1731 = vmatpush1.msra.mxu0 0.0
      %1732 = vmatprep.subr.mxu0 0.0
      %1733 = vmatpush1.msra.mxu0 0.0
      %1734 = vmatprep.subr.mxu0 0.0
      %1735 = vmatpush1.msra.mxu0 0.0
      %1736 = vmatprep.subr.mxu0 0.0
      %1737 = vmatpush1.msra.mxu0 0.0
      %1738 = vmatprep.subr.mxu0 0.0
      %1739 = vmatpush1.msra.mxu0 0.0
      %1740 = vmatprep.subr.mxu0 0.0
      %1741 = vmatpush1.msra.mxu0 0.0
      %1742 = vmatprep.subr.mxu0 0.0
      %1743 = vmatpush1.msra.mxu0 0.0
      %1744 = vmatprep.subr.mxu0 0.0
      %1745 = vmatpush1.msra.mxu0 0.0
      %1746 = vmatprep.subr.mxu0 0.0
      %1747 = vmatpush1.msra.mxu0 0.0
      %1748 = vmatprep.subr.mxu0 0.0
      %1749 = vmatpush1.msra.mxu0 0.0
      %1750 = vmatprep.subr.mxu0 0.0
      %1751 = vmatpush1.msra.mxu0 0.0
      %1752 = vmatprep.subr.mxu0 0.0
      %1753 = vmatpush1.msra.mxu0 0.0
      %1754 = vmatprep.subr.mxu0 0.0
      %1755 = vmatpush1.msra.mxu0 0.0
      %1756 = vmatprep.subr.mxu0 0.0
      %1757 = vmatpush1.msra.mxu0 0.0
      %1758 = vmatprep.subr.mxu0 0.0
      %1759 = vmatpush1.msra.mxu0 0.0
      %1760 = vmatprep.subr.mxu0 0.0
      %1761 = vmatpush1.msra.mxu0 0.0
      %1762 = vmatprep.subr.mxu0 0.0
      %1763 = vmatpush1.msra.mxu0 0.0
      %1764 = vmatprep.mubr.f32.mxu0 0.0
      %1765 = vmatmul.mubr.f32.gmra.mrb[0].mxu0 %v355
      %v1766 = vpop.f32.mrb[0].mxu0
      %v1767 = vadd.f32 0.0, %v1766
      %v1768 = vpop.f32.mrb[0].mxu0
      %v1769 = vadd.f32 0.0, %v1768
      %1770 = vdwg.mxu0
      %1771 = vmatprep.subr.mxu0 %v210
      %1772 = vmatpush1.msra.mxu0 %v209
      %1773 = vmatprep.subr.mxu0 %v255
      %1774 = vmatpush1.msra.mxu0 %v254
      %1775 = vmatprep.subr.mxu0 %v300
      %1776 = vmatpush1.msra.mxu0 %v299
      %1777 = vmatprep.subr.mxu0 %v470
      %1778 = vmatpush1.msra.mxu0 %v467
      %1779 = vmatprep.subr.mxu0 0.0
      %1780 = vmatpush1.msra.mxu0 0.0
      %1781 = vmatprep.subr.mxu0 0.0
      %1782 = vmatpush1.msra.mxu0 0.0
      %1783 = vmatprep.subr.mxu0 0.0
      %1784 = vmatpush1.msra.mxu0 0.0
      %1785 = vmatprep.subr.mxu0 0.0
      %1786 = vmatpush1.msra.mxu0 0.0
      %1787 = vmatprep.subr.mxu0 0.0
      %1788 = vmatpush1.msra.mxu0 0.0
      %1789 = vmatprep.subr.mxu0 0.0
      %1790 = vmatpush1.msra.mxu0 0.0
      %1791 = vmatprep.subr.mxu0 0.0
      %1792 = vmatpush1.msra.mxu0 0.0
      %1793 = vmatprep.subr.mxu0 0.0
      %1794 = vmatpush1.msra.mxu0 0.0
      %1795 = vmatprep.subr.mxu0 0.0
      %1796 = vmatpush1.msra.mxu0 0.0
      %1797 = vmatprep.subr.mxu0 0.0
      %1798 = vmatpush1.msra.mxu0 0.0
      %1799 = vmatprep.subr.mxu0 0.0
      %1800 = vmatpush1.msra.mxu0 0.0
      %1801 = vmatprep.subr.mxu0 0.0
      %1802 = vmatpush1.msra.mxu0 0.0
      %1803 = vmatprep.subr.mxu0 0.0
      %1804 = vmatpush1.msra.mxu0 0.0
      %1805 = vmatprep.subr.mxu0 0.0
      %1806 = vmatpush1.msra.mxu0 0.0
      %1807 = vmatprep.subr.mxu0 0.0
      %1808 = vmatpush1.msra.mxu0 0.0
      %1809 = vmatprep.subr.mxu0 0.0
      %1810 = vmatpush1.msra.mxu0 0.0
      %1811 = vmatprep.subr.mxu0 0.0
      %1812 = vmatpush1.msra.mxu0 0.0
      %1813 = vmatprep.subr.mxu0 0.0
      %1814 = vmatpush1.msra.mxu0 0.0
      %1815 = vmatprep.subr.mxu0 0.0
      %1816 = vmatpush1.msra.mxu0 0.0
      %1817 = vmatprep.subr.mxu0 0.0
      %1818 = vmatpush1.msra.mxu0 0.0
      %1819 = vmatprep.subr.mxu0 0.0
      %1820 = vmatpush1.msra.mxu0 0.0
      %1821 = vmatprep.subr.mxu0 0.0
      %1822 = vmatpush1.msra.mxu0 0.0
      %1823 = vmatprep.subr.mxu0 0.0
      %1824 = vmatpush1.msra.mxu0 0.0
      %1825 = vmatprep.subr.mxu0 0.0
      %1826 = vmatpush1.msra.mxu0 0.0
      %1827 = vmatprep.subr.mxu0 0.0
      %1828 = vmatpush1.msra.mxu0 0.0
      %1829 = vmatprep.subr.mxu0 0.0
      %1830 = vmatpush1.msra.mxu0 0.0
      %1831 = vmatprep.subr.mxu0 0.0
      %1832 = vmatpush1.msra.mxu0 0.0
      %1833 = vmatprep.subr.mxu0 0.0
      %1834 = vmatpush1.msra.mxu0 0.0
      %1835 = vmatprep.mubr.f32.mxu0 0.0
      %1836 = vmatmul.mubr.f32.gmra.mrb[0].mxu0 %v355
      %v1837 = vpop.f32.mrb[0].mxu0
      %v1838 = vadd.f32 0.0, %v1837
      %v1839 = vpop.f32.mrb[0].mxu0
      %v1840 = vadd.f32 0.0, %v1839
      %1841 = vdwg.mxu0
      %1842 = vmatprep.subr.mxu0 %v212
      %1843 = vmatpush1.msra.mxu0 %v211
      %1844 = vmatprep.subr.mxu0 %v257
      %1845 = vmatpush1.msra.mxu0 %v256
      %1846 = vmatprep.subr.mxu0 %v302
      %1847 = vmatpush1.msra.mxu0 %v301
      %1848 = vmatprep.subr.mxu0 %v476
      %1849 = vmatpush1.msra.mxu0 %v473
      %1850 = vmatprep.subr.mxu0 0.0
      %1851 = vmatpush1.msra.mxu0 0.0
      %1852 = vmatprep.subr.mxu0 0.0
      %1853 = vmatpush1.msra.mxu0 0.0
      %1854 = vmatprep.subr.mxu0 0.0
      %1855 = vmatpush1.msra.mxu0 0.0
      %1856 = vmatprep.subr.mxu0 0.0
      %1857 = vmatpush1.msra.mxu0 0.0
      %1858 = vmatprep.subr.mxu0 0.0
      %1859 = vmatpush1.msra.mxu0 0.0
      %1860 = vmatprep.subr.mxu0 0.0
      %1861 = vmatpush1.msra.mxu0 0.0
      %1862 = vmatprep.subr.mxu0 0.0
      %1863 = vmatpush1.msra.mxu0 0.0
      %1864 = vmatprep.subr.mxu0 0.0
      %1865 = vmatpush1.msra.mxu0 0.0
      %1866 = vmatprep.subr.mxu0 0.0
      %1867 = vmatpush1.msra.mxu0 0.0
      %1868 = vmatprep.subr.mxu0 0.0
      %1869 = vmatpush1.msra.mxu0 0.0
      %1870 = vmatprep.subr.mxu0 0.0
      %1871 = vmatpush1.msra.mxu0 0.0
      %1872 = vmatprep.subr.mxu0 0.0
      %1873 = vmatpush1.msra.mxu0 0.0
      %1874 = vmatprep.subr.mxu0 0.0
      %1875 = vmatpush1.msra.mxu0 0.0
      %1876 = vmatprep.subr.mxu0 0.0
      %1877 = vmatpush1.msra.mxu0 0.0
      %1878 = vmatprep.subr.mxu0 0.0
      %1879 = vmatpush1.msra.mxu0 0.0
      %1880 = vmatprep.subr.mxu0 0.0
      %1881 = vmatpush1.msra.mxu0 0.0
      %1882 = vmatprep.subr.mxu0 0.0
      %1883 = vmatpush1.msra.mxu0 0.0
      %1884 = vmatprep.subr.mxu0 0.0
      %1885 = vmatpush1.msra.mxu0 0.0
      %1886 = vmatprep.subr.mxu0 0.0
      %1887 = vmatpush1.msra.mxu0 0.0
      %1888 = vmatprep.subr.mxu0 0.0
      %1889 = vmatpush1.msra.mxu0 0.0
      %1890 = vmatprep.subr.mxu0 0.0
      %1891 = vmatpush1.msra.mxu0 0.0
      %1892 = vmatprep.subr.mxu0 0.0
      %1893 = vmatpush1.msra.mxu0 0.0
      %1894 = vmatprep.subr.mxu0 0.0
      %1895 = vmatpush1.msra.mxu0 0.0
      %1896 = vmatprep.subr.mxu0 0.0
      %1897 = vmatpush1.msra.mxu0 0.0
      %1898 = vmatprep.subr.mxu0 0.0
      %1899 = vmatpush1.msra.mxu0 0.0
      %1900 = vmatprep.subr.mxu0 0.0
      %1901 = vmatpush1.msra.mxu0 0.0
      %1902 = vmatprep.subr.mxu0 0.0
      %1903 = vmatpush1.msra.mxu0 0.0
      %1904 = vmatprep.subr.mxu0 0.0
      %1905 = vmatpush1.msra.mxu0 0.0
      %1906 = vmatprep.mubr.f32.mxu0 0.0
      %1907 = vmatmul.mubr.f32.gmra.mrb[0].mxu0 %v355
      %v1908 = vpop.f32.mrb[0].mxu0
      %v1909 = vadd.f32 0.0, %v1908
      %v1910 = vpop.f32.mrb[0].mxu0
      %v1911 = vadd.f32 0.0, %v1910
      %1912 = vdwg.mxu0
      %1913 = vmatprep.subr.mxu0 %v214
      %1914 = vmatpush1.msra.mxu0 %v213
      %1915 = vmatprep.subr.mxu0 %v259
      %1916 = vmatpush1.msra.mxu0 %v258
      %1917 = vmatprep.subr.mxu0 %v304
      %1918 = vmatpush1.msra.mxu0 %v303
      %1919 = vmatprep.subr.mxu0 %v482
      %1920 = vmatpush1.msra.mxu0 %v479
      %1921 = vmatprep.subr.mxu0 0.0
      %1922 = vmatpush1.msra.mxu0 0.0
      %1923 = vmatprep.subr.mxu0 0.0
      %1924 = vmatpush1.msra.mxu0 0.0
      %1925 = vmatprep.subr.mxu0 0.0
      %1926 = vmatpush1.msra.mxu0 0.0
      %1927 = vmatprep.subr.mxu0 0.0
      %1928 = vmatpush1.msra.mxu0 0.0
      %1929 = vmatprep.subr.mxu0 0.0
      %1930 = vmatpush1.msra.mxu0 0.0
      %1931 = vmatprep.subr.mxu0 0.0
      %1932 = vmatpush1.msra.mxu0 0.0
      %1933 = vmatprep.subr.mxu0 0.0
      %1934 = vmatpush1.msra.mxu0 0.0
      %1935 = vmatprep.subr.mxu0 0.0
      %1936 = vmatpush1.msra.mxu0 0.0
      %1937 = vmatprep.subr.mxu0 0.0
      %1938 = vmatpush1.msra.mxu0 0.0
      %1939 = vmatprep.subr.mxu0 0.0
      %1940 = vmatpush1.msra.mxu0 0.0
      %1941 = vmatprep.subr.mxu0 0.0
      %1942 = vmatpush1.msra.mxu0 0.0
      %1943 = vmatprep.subr.mxu0 0.0
      %1944 = vmatpush1.msra.mxu0 0.0
      %1945 = vmatprep.subr.mxu0 0.0
      %1946 = vmatpush1.msra.mxu0 0.0
      %1947 = vmatprep.subr.mxu0 0.0
      %1948 = vmatpush1.msra.mxu0 0.0
      %1949 = vmatprep.subr.mxu0 0.0
      %1950 = vmatpush1.msra.mxu0 0.0
      %1951 = vmatprep.subr.mxu0 0.0
      %1952 = vmatpush1.msra.mxu0 0.0
      %1953 = vmatprep.subr.mxu0 0.0
      %1954 = vmatpush1.msra.mxu0 0.0
      %1955 = vmatprep.subr.mxu0 0.0
      %1956 = vmatpush1.msra.mxu0 0.0
      %1957 = vmatprep.subr.mxu0 0.0
      %1958 = vmatpush1.msra.mxu0 0.0
      %1959 = vmatprep.subr.mxu0 0.0
      %1960 = vmatpush1.msra.mxu0 0.0
      %1961 = vmatprep.subr.mxu0 0.0
      %1962 = vmatpush1.msra.mxu0 0.0
      %1963 = vmatprep.subr.mxu0 0.0
      %1964 = vmatpush1.msra.mxu0 0.0
      %1965 = vmatprep.subr.mxu0 0.0
      %1966 = vmatpush1.msra.mxu0 0.0
      %1967 = vmatprep.subr.mxu0 0.0
      %1968 = vmatpush1.msra.mxu0 0.0
      %1969 = vmatprep.subr.mxu0 0.0
      %1970 = vmatpush1.msra.mxu0 0.0
      %1971 = vmatprep.subr.mxu0 0.0
      %1972 = vmatpush1.msra.mxu0 0.0
      %1973 = vmatprep.subr.mxu0 0.0
      %1974 = vmatpush1.msra.mxu0 0.0
      %1975 = vmatprep.subr.mxu0 0.0
      %1976 = vmatpush1.msra.mxu0 0.0
      %1977 = vmatprep.mubr.f32.mxu0 0.0
      %1978 = vmatmul.mubr.f32.gmra.mrb[0].mxu0 %v355
      %v1979 = vpop.f32.mrb[0].mxu0
      %v1980 = vadd.f32 0.0, %v1979
      %v1981 = vpop.f32.mrb[0].mxu0
      %v1982 = vadd.f32 0.0, %v1981
      %1983 = vdwg.mxu0
      %1984 = vmatprep.subr.mxu0 %v216
      %1985 = vmatpush1.msra.mxu0 %v215
      %1986 = vmatprep.subr.mxu0 %v261
      %1987 = vmatpush1.msra.mxu0 %v260
      %1988 = vmatprep.subr.mxu0 %v306
      %1989 = vmatpush1.msra.mxu0 %v305
      %1990 = vmatprep.subr.mxu0 %v488
      %1991 = vmatpush1.msra.mxu0 %v485
      %1992 = vmatprep.subr.mxu0 0.0
      %1993 = vmatpush1.msra.mxu0 0.0
      %1994 = vmatprep.subr.mxu0 0.0
      %1995 = vmatpush1.msra.mxu0 0.0
      %1996 = vmatprep.subr.mxu0 0.0
      %1997 = vmatpush1.msra.mxu0 0.0
      %1998 = vmatprep.subr.mxu0 0.0
      %1999 = vmatpush1.msra.mxu0 0.0
      %2000 = vmatprep.subr.mxu0 0.0
      %2001 = vmatpush1.msra.mxu0 0.0
      %2002 = vmatprep.subr.mxu0 0.0
      %2003 = vmatpush1.msra.mxu0 0.0
      %2004 = vmatprep.subr.mxu0 0.0
      %2005 = vmatpush1.msra.mxu0 0.0
      %2006 = vmatprep.subr.mxu0 0.0
      %2007 = vmatpush1.msra.mxu0 0.0
      %2008 = vmatprep.subr.mxu0 0.0
      %2009 = vmatpush1.msra.mxu0 0.0
      %2010 = vmatprep.subr.mxu0 0.0
      %2011 = vmatpush1.msra.mxu0 0.0
      %2012 = vmatprep.subr.mxu0 0.0
      %2013 = vmatpush1.msra.mxu0 0.0
      %2014 = vmatprep.subr.mxu0 0.0
      %2015 = vmatpush1.msra.mxu0 0.0
      %2016 = vmatprep.subr.mxu0 0.0
      %2017 = vmatpush1.msra.mxu0 0.0
      %2018 = vmatprep.subr.mxu0 0.0
      %2019 = vmatpush1.msra.mxu0 0.0
      %2020 = vmatprep.subr.mxu0 0.0
      %2021 = vmatpush1.msra.mxu0 0.0
      %2022 = vmatprep.subr.mxu0 0.0
      %2023 = vmatpush1.msra.mxu0 0.0
      %2024 = vmatprep.subr.mxu0 0.0
      %2025 = vmatpush1.msra.mxu0 0.0
      %2026 = vmatprep.subr.mxu0 0.0
      %2027 = vmatpush1.msra.mxu0 0.0
      %2028 = vmatprep.subr.mxu0 0.0
      %2029 = vmatpush1.msra.mxu0 0.0
      %2030 = vmatprep.subr.mxu0 0.0
      %2031 = vmatpush1.msra.mxu0 0.0
      %2032 = vmatprep.subr.mxu0 0.0
      %2033 = vmatpush1.msra.mxu0 0.0
      %2034 = vmatprep.subr.mxu0 0.0
      %2035 = vmatpush1.msra.mxu0 0.0
      %2036 = vmatprep.subr.mxu0 0.0
      %2037 = vmatpush1.msra.mxu0 0.0
      %2038 = vmatprep.subr.mxu0 0.0
      %2039 = vmatpush1.msra.mxu0 0.0
      %2040 = vmatprep.subr.mxu0 0.0
      %2041 = vmatpush1.msra.mxu0 0.0
      %2042 = vmatprep.subr.mxu0 0.0
      %2043 = vmatpush1.msra.mxu0 0.0
      %2044 = vmatprep.subr.mxu0 0.0
      %2045 = vmatpush1.msra.mxu0 0.0
      %2046 = vmatprep.subr.mxu0 0.0
      %2047 = vmatpush1.msra.mxu0 0.0
      %2048 = vmatprep.mubr.f32.mxu0 0.0
      %2049 = vmatmul.mubr.f32.gmra.mrb[0].mxu0 %v355
      %v2050 = vpop.f32.mrb[0].mxu0
      %v2051 = vadd.f32 0.0, %v2050
      %v2052 = vpop.f32.mrb[0].mxu0
      %v2053 = vadd.f32 0.0, %v2052
      %2054 = vdwg.mxu0
      %2055 = vmatprep.subr.mxu0 0.0
      %2056 = vmatpush1.msra.mxu0 %v217
      %2057 = vmatprep.subr.mxu0 0.0
      %2058 = vmatpush1.msra.mxu0 %v262
      %2059 = vmatprep.subr.mxu0 0.0
      %2060 = vmatpush1.msra.mxu0 %v307
      %2061 = vmatprep.subr.mxu0 0.0
      %2062 = vmatpush1.msra.mxu0 %v491
      %2063 = vmatprep.subr.mxu0 0.0
      %2064 = vmatpush1.msra.mxu0 0.0
      %2065 = vmatprep.subr.mxu0 0.0
      %2066 = vmatpush1.msra.mxu0 0.0
      %2067 = vmatprep.subr.mxu0 0.0
      %2068 = vmatpush1.msra.mxu0 0.0
      %2069 = vmatprep.subr.mxu0 0.0
      %2070 = vmatpush1.msra.mxu0 0.0
      %2071 = vmatprep.subr.mxu0 0.0
      %2072 = vmatpush1.msra.mxu0 0.0
      %2073 = vmatprep.subr.mxu0 0.0
      %2074 = vmatpush1.msra.mxu0 0.0
      %2075 = vmatprep.subr.mxu0 0.0
      %2076 = vmatpush1.msra.mxu0 0.0
      %2077 = vmatprep.subr.mxu0 0.0
      %2078 = vmatpush1.msra.mxu0 0.0
      %2079 = vmatprep.subr.mxu0 0.0
      %2080 = vmatpush1.msra.mxu0 0.0
      %2081 = vmatprep.subr.mxu0 0.0
      %2082 = vmatpush1.msra.mxu0 0.0
      %2083 = vmatprep.subr.mxu0 0.0
      %2084 = vmatpush1.msra.mxu0 0.0
      %2085 = vmatprep.subr.mxu0 0.0
      %2086 = vmatpush1.msra.mxu0 0.0
      %2087 = vmatprep.subr.mxu0 0.0
      %2088 = vmatpush1.msra.mxu0 0.0
      %2089 = vmatprep.subr.mxu0 0.0
      %2090 = vmatpush1.msra.mxu0 0.0
      %2091 = vmatprep.subr.mxu0 0.0
      %2092 = vmatpush1.msra.mxu0 0.0
      %2093 = vmatprep.subr.mxu0 0.0
      %2094 = vmatpush1.msra.mxu0 0.0
      %2095 = vmatprep.subr.mxu0 0.0
      %2096 = vmatpush1.msra.mxu0 0.0
      %2097 = vmatprep.subr.mxu0 0.0
      %2098 = vmatpush1.msra.mxu0 0.0
      %2099 = vmatprep.subr.mxu0 0.0
      %2100 = vmatpush1.msra.mxu0 0.0
      %2101 = vmatprep.subr.mxu0 0.0
      %2102 = vmatpush1.msra.mxu0 0.0
      %2103 = vmatprep.subr.mxu0 0.0
      %2104 = vmatpush1.msra.mxu0 0.0
      %2105 = vmatprep.subr.mxu0 0.0
      %2106 = vmatpush1.msra.mxu0 0.0
      %2107 = vmatprep.subr.mxu0 0.0
      %2108 = vmatpush1.msra.mxu0 0.0
      %2109 = vmatprep.subr.mxu0 0.0
      %2110 = vmatpush1.msra.mxu0 0.0
      %2111 = vmatprep.subr.mxu0 0.0
      %2112 = vmatpush1.msra.mxu0 0.0
      %2113 = vmatprep.subr.mxu0 0.0
      %2114 = vmatpush1.msra.mxu0 0.0
      %2115 = vmatprep.subr.mxu0 0.0
      %2116 = vmatpush1.msra.mxu0 0.0
      %2117 = vmatprep.subr.mxu0 0.0
      %2118 = vmatpush1.msra.mxu0 0.0
      %2119 = vmatprep.mubr.f32.mxu0 0.0
      %2120 = vmatmul.mubr.f32.gmra.mrb[0].mxu0 %v355
      %v2121 = vpop.f32.mrb[0].mxu0
      %v2122 = vadd.f32 0.0, %v2121
      %v2123 = vpop.f32.mrb[0].mxu0
      %2124 = vdwg.mxu0
      %v2125 = vmax.f32 %v560, %v704
      %v2126 = vmax.f32 %v562, %v773
      %v2127 = vmax.f32 %v631, %v775
      %v2128 = vmax.f32 %v633, %v844
      %v2129 = vmax.f32 %v702, %v846
      %v2130 = vmax.f32 %v2125, %v915
      %v2131 = vmax.f32 %v2126, %v917
      %v2132 = vmax.f32 %v2127, %v986
      %v2133 = vmax.f32 %v2128, %v988
      %v2134 = vmax.f32 %v2129, %v1057
      %v2135 = vmax.f32 %v2130, %v1059
      %v2136 = vmax.f32 %v2131, %v1128
      %v2137 = vmax.f32 %v2132, %v1130
      %v2138 = vmax.f32 %v2133, %v1199
      %v2139 = vmax.f32 %v2134, %v1201
      %v2140 = vmax.f32 %v2135, %v1270
      %v2141 = vmax.f32 %v2136, %v1272
      %v2142 = vmax.f32 %v2137, %v1341
      %v2143 = vmax.f32 %v2138, %v1343
      %v2144 = vmax.f32 %v2139, %v1412
      %v2145 = vmax.f32 %v2140, %v1414
      %v2146 = vmax.f32 %v2141, %v1483
      %v2147 = vmax.f32 %v2142, %v1485
      %v2148 = vmax.f32 %v2143, %v1554
      %v2149 = vmax.f32 %v2144, %v1556
      %v2150 = vmax.f32 %v2145, %v1625
      %v2151 = vmax.f32 %v2146, %v1627
      %v2152 = vmax.f32 %v2147, %v1696
      %v2153 = vmax.f32 %v2148, %v1698
      %v2154 = vmax.f32 %v2149, %v1767
      %v2155 = vmax.f32 %v2150, %v1769
      %v2156 = vmax.f32 %v2151, %v1838
      %v2157 = vmax.f32 %v2152, %v1840
      %v2158 = vmax.f32 %v2153, %v1909
      %v2159 = vmax.f32 %v2154, %v1911
      %v2160 = vmax.f32 %v2155, %v1980
      %v2161 = vmax.f32 %v2156, %v1982
      %v2162 = vmax.f32 %v2157, %v2051
      %v2163 = vmax.f32 %v2158, %v2053
      %v2164 = vmax.f32 %v2159, %v2122
      %v2165 = vld [vmem:[%s2] sm:$0xff]
      %2167 = vset.pattern.permute.xlu0 0
      %2168 = vperm.xlu0 %2167, %v2165
      %v2169 = vpop.permute.xlu0 %2168
      %v2171 = vadd.f32 %v2160, %v2169
      %v2172 = vadd.f32 %v2161, %v2169
      %v2173 = vadd.f32 %v2162, %v2169
      %v2174 = vadd.f32 %v2163, %v2169
      %v2175 = vadd.f32 %v2164, %v2169
      %v2176 = vmax.f32 %v2171, 0.0
      %v2177 = vmax.f32 %v2172, 0.0
      %v2178 = vmax.f32 %v2173, 0.0
      %v2179 = vmax.f32 %v2174, 0.0
      %v2180 = vmax.f32 %v2175, 0.0
      %2181 = vst [vmem:[%s170] sm:$0xff] %v2176
      %2182 = vst [vmem:[%s170 + $0x8] sm:$0xff] %v2177
      %2183 = vst [vmem:[%s170 + $0x10] sm:$0xff] %v2178
      %2184 = vst [vmem:[%s170 + $0x18] sm:$0xff] %v2179
      %2185 = vst [vmem:[%s170 + $0x20] sm:$0xff] %v2180
      %s2186 = smul.u32 5, %s14
      %p2187 = scmp.lt.s32.totalorder %s2186, 19
      %s2188 = scalar_select %p2187, %s2186, 19
      %s2189 = smul.addr %s2188, 8
      %s2190 = scalar_lea.vmem %s3, %s2189
      // Predicated region
      $region33: #{forward_pallas.3} parent=31 // pred_check
        %p2191 = pneg %p100
      $region34: #{forward_pallas.3} parent=31 // pred_check_branch
        %2193 = sbr.rel (%p2191) target = $region36
      $region35: #{forward_pallas.3} parent=31 // pred_region
        %s2194 = smul.u32 5, %s14
      $region36: #{forward_pallas.3} parent=31 // pred_fallthru
        _
    $region32: #{forward_pallas.3} parent=5 // pred_fallthru
      _
    %p2195 = scmp.le.s32.totalorder 2, %s9
    // Predicated region
    $region37: #{forward_pallas.3} parent=5 // pred_check
      %p2196 = pneg %p2195
    $region38: #{forward_pallas.3} parent=5 // pred_check_branch
      %2198 = sbr.rel (%p2196) target = $region40
    $region39: #{forward_pallas.3} parent=5 // pred_region
      %s2199 = ssub.s32 %s9, 2
      // Predicated region
      $region41: #{forward_pallas.3} parent=39 // pred_check
        %p2200 = pneg %p106
      $region42: #{forward_pallas.3} parent=39 // pred_check_branch
        %2202 = sbr.rel (%p2200) target = $region44
      $region43: #{forward_pallas.3} parent=39 // pred_region
        %s2203 = smul.u32 5, %s15
        %p2204 = scmp.lt.s32.totalorder %s2203, 19
        %s2205 = scalar_select %p2204, %s2203, 19
        %s2206 = smul.addr %s2205, 8
        %s2207 = scalar_lea.vmem %s3, %s2206
      $region44: #{forward_pallas.3} parent=39 // pred_fallthru
        _
    $region40: #{forward_pallas.3} parent=5 // pred_fallthru
      _
  $region6: #{forward_pallas.3} parent=0 // loop_footer
    %s13 = sadd.s32 1, %s9
  $region7: #{forward_pallas.3} parent=0 // loop_footer_branch
    %8 = sbr.rel target = $region3
  $region8: #{forward_pallas.3} parent=0 // loop_exit
    _

// kernel: forward_pallas.4
$region0: #{forward_pallas.4}
  #allocation0 [shape = 'u32[]', space=smem, size = 0x4, offset = 0x4, fixed_abs, tag = 'smem constant byte address 0x4 - core index']
  #allocation1 [shape = 'u32[144,128]{1,0:T(1,128)}', space=vmem, size = 0x12000, scoped, tag = 'internal scratch']
  %s0 = inlined_call_operand.vmem [shape: f32[2,72,1152], index: 0, kind: input, shape index: {}]
  %s1 = inlined_call_operand.vmem [shape: f32[32,72], index: 1, kind: input, shape index: {}]
  %s2 = inlined_call_operand.vmem [shape: f32[32,1], index: 2, kind: input, shape index: {}]
  %s3 = inlined_call_operand.vmem [shape: f32[32,256], index: 3, kind: output, shape index: {}]
  %s4 = sld [smem:[#allocation0]]
  $region79: #{forward_pallas.4} parent=0
    _
  %s6 = ssub.s32 1, %s4
  %s7 = scalar_select 0, %s6, %s4
  $region1: #{forward_pallas.4} parent=0
    #allocation2 [shape = 'u8[32768]{0}', space=vmem, size = 0x8000, scoped, tag = 'output window, operand 0']
    loop: start=0, step=1, limit=4
    $region2: #{forward_pallas.4} parent=1 // loop_pre_header
      _
    $region3: #{forward_pallas.4} parent=1 // loop_header
      %s9 = sphi 0, %s13
      %p10 = scmp.ge.s32.totalorder %s9, 4
      %s19 = sphi 0, %s21
      %s22 = sphi 0, %s19
      %s23 = sphi 0, %s22
      %s39 = sphi 0, %s23
      %s43 = sphi 0, %s43
      %s45 = sphi 0, %s43
      %s46 = sphi 0, %s45
      %s60 = sphi 0, %s46
      %s64 = sphi 0, %s64
      %s66 = sphi 0, %s64
      %s67 = sphi 0, %s66
      %s81 = sphi 0, %s67
      %s87 = sphi 0, %s89
      %s90 = sphi 0, %s87
      %s91 = sphi 0, %s90
      %s107 = sphi 0, %s91
    $region4: #{forward_pallas.4} parent=1 // loop_header_branch
      %12 = sbr.rel (%p10) target = $region8
    $region5: #{forward_pallas.4} parent=1 // loop_body
      %s14 = ssub.s32 %s9, 1
      %s15 = ssub.s32 %s9, 2
      %s16 = sadd.s32 %s9, 1
      %s17 = ssub.s32 %s9, %s16
      %p18 = scmp.eq.s32.totalorder %s17, 0
      %s20 = sadd.s32 %s19, 1
      %s21 = scalar_select %p18, %s19, %s20
      %p24 = pneg %p18
      %p25 = scmp.eq.s32.totalorder %s9, 1
      %p26 = por %p24, %p25
      %p27 = scmp.ne.s32.totalorder %s19, %s22
      %p28 = scmp.eq.s32.totalorder %s9, 0
      %p29 = por %p27, %p28
      %p30 = scmp.ne.s32.totalorder %s19, %s22
      %p31 = scmp.eq.s32.totalorder %s14, 1
      %p32 = por %p30, %p31
      %p33 = scmp.ne.s32.totalorder %s22, %s23
      %p34 = scmp.eq.s32.totalorder %s14, 0
      %p35 = por %p33, %p34
      %p36 = scmp.ne.s32.totalorder %s22, %s23
      %p37 = scmp.eq.s32.totalorder %s15, 1
      %p38 = por %p36, %p37
      %p40 = scmp.ne.s32.totalorder %s23, %s39
      %p41 = scmp.eq.s32.totalorder %s15, 0
      %p42 = por %p40, %p41
      %s44 = sadd.s32 %s43, 1
      %p47 = scmp.eq.s32.totalorder %s9, 1
      %p48 = scmp.ne.s32.totalorder %s43, %s45
      %p49 = scmp.eq.s32.totalorder %s9, 0
      %p50 = por %p48, %p49
      %p51 = scmp.ne.s32.totalorder %s43, %s45
      %p52 = scmp.eq.s32.totalorder %s14, 1
      %p53 = por %p51, %p52
      %p54 = scmp.ne.s32.totalorder %s45, %s46
      %p55 = scmp.eq.s32.totalorder %s14, 0
      %p56 = por %p54, %p55
      %p57 = scmp.ne.s32.totalorder %s45, %s46
      %p58 = scmp.eq.s32.totalorder %s15, 1
      %p59 = por %p57, %p58
      %p61 = scmp.ne.s32.totalorder %s46, %s60
      %p62 = scmp.eq.s32.totalorder %s15, 0
      %p63 = por %p61, %p62
      %s65 = sadd.s32 %s64, 1
      %p68 = scmp.eq.s32.totalorder %s9, 1
      %p69 = scmp.ne.s32.totalorder %s64, %s66
      %p70 = scmp.eq.s32.totalorder %s9, 0
      %p71 = por %p69, %p70
      %p72 = scmp.ne.s32.totalorder %s64, %s66
      %p73 = scmp.eq.s32.totalorder %s14, 1
      %p74 = por %p72, %p73
      %p75 = scmp.ne.s32.totalorder %s66, %s67
      %p76 = scmp.eq.s32.totalorder %s14, 0
      %p77 = por %p75, %p76
      %p78 = scmp.ne.s32.totalorder %s66, %s67
      %p79 = scmp.eq.s32.totalorder %s15, 1
      %p80 = por %p78, %p79
      %p82 = scmp.ne.s32.totalorder %s67, %s81
      %p83 = scmp.eq.s32.totalorder %s15, 0
      %p84 = por %p82, %p83
      %s85 = ssub.s32 %s9, %s16
      %p86 = scmp.eq.s32.totalorder %s85, 0
      %s88 = sadd.s32 %s87, 1
      %s89 = scalar_select %p86, %s87, %s88
      %p92 = pneg %p86
      %p93 = scmp.eq.s32.totalorder %s9, 1
      %p94 = por %p92, %p93
      %p95 = scmp.ne.s32.totalorder %s87, %s90
      %p96 = scmp.eq.s32.totalorder %s9, 0
      %p97 = por %p95, %p96
      %p98 = scmp.ne.s32.totalorder %s87, %s90
      %p99 = scmp.eq.s32.totalorder %s14, 1
      %p100 = por %p98, %p99
      %p101 = scmp.ne.s32.totalorder %s90, %s91
      %p102 = scmp.eq.s32.totalorder %s14, 0
      %p103 = por %p101, %p102
      %p104 = scmp.ne.s32.totalorder %s90, %s91
      %p105 = scmp.eq.s32.totalorder %s15, 1
      %p106 = por %p104, %p105
      %p108 = scmp.ne.s32.totalorder %s91, %s107
      %p109 = scmp.eq.s32.totalorder %s15, 0
      %p110 = por %p108, %p109
      %p111 = scmp.le.s32.totalorder 1, %s9
      %p112 = scmp.lt.s32.totalorder %s9, 3
      %p113 = pnand %p111, %p112
      %p114 = pneg %p113
      // Predicated region
      $region9: #{forward_pallas.4} parent=5 // pred_check
        _
      $region10: #{forward_pallas.4} parent=5 // pred_check_branch
        %116 = sbr.rel (%p113) target = $region12
      $region11: #{forward_pallas.4} parent=5 // pred_region
        %s117 = ssub.s32 %s9, 1
        // Predicated region
        $region13: #{forward_pallas.4} parent=11 // pred_check
          %p118 = pneg %p56
        $region14: #{forward_pallas.4} parent=11 // pred_check_branch
          %120 = sbr.rel (%p118) target = $region16
        $region15: #{forward_pallas.4} parent=11 // pred_region
          _
        $region16: #{forward_pallas.4} parent=11 // pred_fallthru
          _
        // Predicated region
        $region17: #{forward_pallas.4} parent=11 // pred_check
          %p121 = pneg %p77
        $region18: #{forward_pallas.4} parent=11 // pred_check_branch
          %123 = sbr.rel (%p121) target = $region20
        $region19: #{forward_pallas.4} parent=11 // pred_region
          _
        $region20: #{forward_pallas.4} parent=11 // pred_fallthru
          _
      $region12: #{forward_pallas.4} parent=5 // pred_fallthru
        _
      %p124 = scmp.lt.s32.totalorder %s9, 2
      // Predicated region
      $region21: #{forward_pallas.4} parent=5 // pred_check
        %p125 = pneg %p124
      $region22: #{forward_pallas.4} parent=5 // pred_check_branch
        %127 = sbr.rel (%p125) target = $region24
      $region23: #{forward_pallas.4} parent=5 // pred_region
        // Predicated region
        $region25: #{forward_pallas.4} parent=23 // pred_check
          %p128 = pneg %p29
        $region26: #{forward_pallas.4} parent=23 // pred_check_branch
          %130 = sbr.rel (%p128) target = $region28
        $region27: #{forward_pallas.4} parent=23 // pred_region
          %p131 = scmp.lt.s32.totalorder %s9, 1
          %s132 = scalar_select %p131, %s9, 1
          %s133 = smul.addr %s132, 81
          %s134 = smul.addr %s133, 8
          %s135 = scalar_lea.vmem %s0, %s134
        $region28: #{forward_pallas.4} parent=23 // pred_fallthru
          _
      $region24: #{forward_pallas.4} parent=5 // pred_fallthru
        _
      %p136 = scmp.le.s32.totalorder 1, %s9
      %p137 = scmp.lt.s32.totalorder %s9, 3
      %p138 = pnand %p136, %p137
      %p139 = pneg %p138
      // Predicated region
      $region29: #{forward_pallas.4} parent=5 // pred_check
        _
      $region30: #{forward_pallas.4} parent=5 // pred_check_branch
        %141 = sbr.rel (%p138) target = $region32
      $region31: #{forward_pallas.4} parent=5 // pred_region
        %s142 = ssub.s32 %s9, 1
        %p143 = scmp.lt.s32.totalorder %s14, 1
        %s144 = scalar_select %p143, %s14, 1
        %s145 = smul.addr %s144, 81
        %s146 = smul.addr %s145, 8
        %s147 = scalar_lea.vmem %s0, %s146
        %p148 = pneg %p35
        %p149 = pneg %p32
        %p150 = pneg %p56
        %p151 = pneg %p53
        %p152 = pneg %p77
        %p153 = pneg %p74
        %p154 = pneg %p103
        %p155 = pneg %p100
        %s156 = sand.u32 %s90, 1
        %s157 = sand.u32 %s90, 1
        %s158 = smul.addr %s157, 32
        %s159 = scalar_lea.vmem [#allocation2], %s158
        %p160 = scmp.lt.s32.totalorder %s14, 1
        %s161 = scalar_select %p160, %s14, 1
        %s162 = smul.addr %s161, 81
        %s163 = smul.addr %s162, 8
        %s164 = scalar_lea.vmem %s0, %s163
        %v165 = vld [vmem:[%s1] sm:$0xff]
        %v166 = vld [vmem:[%s1 + $0x8] sm:$0xff]
        %v167 = vld [vmem:[%s1 + $0x10] sm:$0xff]
        %v168 = vld [vmem:[%s1 + $0x18] sm:$0xff]
        %v169 = vld [vmem:[%s164] sm:$0xff]
        %v170 = vld [vmem:[%s164 + $0x8] sm:$0xff]
        %v171 = vld [vmem:[%s164 + $0x10] sm:$0xff]
        %v172 = vld [vmem:[%s164 + $0x18] sm:$0xff]
        %v173 = vld [vmem:[%s164 + $0x20] sm:$0xff]
        %v174 = vld [vmem:[%s164 + $0x28] sm:$0xff]
        %v175 = vld [vmem:[%s164 + $0x30] sm:$0xff]
        %v176 = vld [vmem:[%s164 + $0x38] sm:$0xff]
        %v177 = vld [vmem:[%s164 + $0x40] sm:$0xff]
        %v178 = vld [vmem:[%s164 + $0x48] sm:$0xff]
        %v179 = vld [vmem:[%s164 + $0x50] sm:$0xff]
        %v180 = vld [vmem:[%s164 + $0x58] sm:$0xff]
        %v181 = vld [vmem:[%s164 + $0x60] sm:$0xff]
        %v182 = vld [vmem:[%s164 + $0x68] sm:$0xff]
        %v183 = vld [vmem:[%s164 + $0x70] sm:$0xff]
        %v184 = vld [vmem:[%s164 + $0x78] sm:$0xff]
        %v185 = vld [vmem:[%s164 + $0x80] sm:$0xff]
        %v186 = vld [vmem:[%s164 + $0x88] sm:$0xff]
        %v187 = vld [vmem:[%s164 + $0x90] sm:$0xff]
        %v188 = vld [vmem:[%s164 + $0x98] sm:$0xff]
        %v189 = vld [vmem:[%s164 + $0xa0] sm:$0xff]
        %v190 = vld [vmem:[%s164 + $0xa8] sm:$0xff]
        %v191 = vld [vmem:[%s164 + $0xb0] sm:$0xff]
        %v192 = vld [vmem:[%s164 + $0xb8] sm:$0xff]
        %v193 = vld [vmem:[%s164 + $0xc0] sm:$0xff]
        %v194 = vld [vmem:[%s164 + $0xc8] sm:$0xff]
        %v195 = vld [vmem:[%s164 + $0xd0] sm:$0xff]
        %v196 = vld [vmem:[%s164 + $0xd8] sm:$0xff]
        %v197 = vld [vmem:[%s164 + $0xe0] sm:$0xff]
        %v198 = vld [vmem:[%s164 + $0xe8] sm:$0xff]
        %v199 = vld [vmem:[%s164 + $0xf0] sm:$0xff]
        %v200 = vld [vmem:[%s164 + $0xf8] sm:$0xff]
        %v201 = vld [vmem:[%s164 + $0x100] sm:$0xff]
        %v202 = vld [vmem:[%s164 + $0x108] sm:$0xff]
        %v203 = vld [vmem:[%s164 + $0x110] sm:$0xff]
        %v204 = vld [vmem:[%s164 + $0x118] sm:$0xff]
        %v205 = vld [vmem:[%s164 + $0x120] sm:$0xff]
        %v206 = vld [vmem:[%s164 + $0x128] sm:$0xff]
        %v207 = vld [vmem:[%s164 + $0x130] sm:$0xff]
        %v208 = vld [vmem:[%s164 + $0x138] sm:$0xff]
        %v209 = vld [vmem:[%s164 + $0x140] sm:$0xff]
        %v210 = vld [vmem:[%s164 + $0x148] sm:$0xff]
        %v211 = vld [vmem:[%s164 + $0x150] sm:$0xff]
        %v212 = vld [vmem:[%s164 + $0x158] sm:$0xff]
        %v213 = vld [vmem:[%s164 + $0x160] sm:$0xff]
        %v214 = vld [vmem:[%s164 + $0x168] sm:$0xff]
        %v215 = vld [vmem:[%s164 + $0x170] sm:$0xff]
        %v216 = vld [vmem:[%s164 + $0x178] sm:$0xff]
        %v217 = vld [vmem:[%s164 + $0x180] sm:$0xff]
        %v218 = vld [vmem:[%s164 + $0x188] sm:$0xff]
        %v219 = vld [vmem:[%s164 + $0x190] sm:$0xff]
        %v220 = vld [vmem:[%s164 + $0x198] sm:$0xff]
        %v221 = vld [vmem:[%s164 + $0x1a0] sm:$0xff]
        %v222 = vld [vmem:[%s164 + $0x1a8] sm:$0xff]
        %v223 = vld [vmem:[%s164 + $0x1b0] sm:$0xff]
        %v224 = vld [vmem:[%s164 + $0x1b8] sm:$0xff]
        %v225 = vld [vmem:[%s164 + $0x1c0] sm:$0xff]
        %v226 = vld [vmem:[%s164 + $0x1c8] sm:$0xff]
        %v227 = vld [vmem:[%s164 + $0x1d0] sm:$0xff]
        %v228 = vld [vmem:[%s164 + $0x1d8] sm:$0xff]
        %v229 = vld [vmem:[%s164 + $0x1e0] sm:$0xff]
        %v230 = vld [vmem:[%s164 + $0x1e8] sm:$0xff]
        %v231 = vld [vmem:[%s164 + $0x1f0] sm:$0xff]
        %v232 = vld [vmem:[%s164 + $0x1f8] sm:$0xff]
        %v233 = vld [vmem:[%s164 + $0x200] sm:$0xff]
        %v234 = vld [vmem:[%s164 + $0x208] sm:$0xff]
        %v235 = vld [vmem:[%s164 + $0x210] sm:$0xff]
        %v236 = vld [vmem:[%s164 + $0x218] sm:$0xff]
        %v237 = vld [vmem:[%s164 + $0x220] sm:$0xff]
        %v238 = vld [vmem:[%s164 + $0x228] sm:$0xff]
        %v239 = vld [vmem:[%s164 + $0x230] sm:$0xff]
        %v240 = vld [vmem:[%s164 + $0x238] sm:$0xff]
        %v241 = vld [vmem:[%s164 + $0x240] sm:$0xff]
        %v242 = vld [vmem:[%s164 + $0x248] sm:$0xff]
        %v243 = vld [vmem:[%s164 + $0x250] sm:$0xff]
        %v244 = vld [vmem:[%s164 + $0x258] sm:$0xff]
        %v245 = vld [vmem:[%s164 + $0x260] sm:$0xff]
        %v246 = vld [vmem:[%s164 + $0x268] sm:$0xff]
        %v247 = vld [vmem:[%s164 + $0x270] sm:$0xff]
        %v248 = vld [vmem:[%s164 + $0x278] sm:$0xff]
        %v249 = vld [vmem:[%s164 + $0x280] sm:$0xff]
        %vm250 = vcmask 588800
        %v252 = vsel %vm250, %v165, 0
        %v255 = vsel %vm250, %v166, 0
        %v258 = vsel %vm250, %v167, 0
        %v261 = vsel %vm250, %v168, 0
        %263 = vmatprep.subr.mxu0 %v170
        %264 = vmatpush1.msra.mxu0 %v169
        %265 = vmatprep.subr.mxu0 %v179
        %266 = vmatpush1.msra.mxu0 %v178
        %267 = vmatprep.subr.mxu0 %v188
        %268 = vmatpush1.msra.mxu0 %v187
        %269 = vmatprep.subr.mxu0 %v197
        %270 = vmatpush1.msra.mxu0 %v196
        %271 = vmatprep.subr.mxu0 %v206
        %272 = vmatpush1.msra.mxu0 %v205
        %273 = vmatprep.subr.mxu0 %v215
        %274 = vmatpush1.msra.mxu0 %v214
        %275 = vmatprep.subr.mxu0 %v224
        %276 = vmatpush1.msra.mxu0 %v223
        %277 = vmatprep.subr.mxu0 %v233
        %278 = vmatpush1.msra.mxu0 %v232
        %279 = vmatprep.subr.mxu0 %v242
        %280 = vmatpush1.msra.mxu0 %v241
        %281 = vmatprep.subr.mxu0 0.0
        %282 = vmatpush1.msra.mxu0 0.0
        %283 = vmatprep.subr.mxu0 0.0
        %284 = vmatpush1.msra.mxu0 0.0
        %285 = vmatprep.subr.mxu0 0.0
        %286 = vmatpush1.msra.mxu0 0.0
        %287 = vmatprep.subr.mxu0 0.0
        %288 = vmatpush1.msra.mxu0 0.0
        %289 = vmatprep.subr.mxu0 0.0
        %290 = vmatpush1.msra.mxu0 0.0
        %291 = vmatprep.subr.mxu0 0.0
        %292 = vmatpush1.msra.mxu0 0.0
        %293 = vmatprep.subr.mxu0 0.0
        %294 = vmatpush1.msra.mxu0 0.0
        %295 = vmatprep.subr.mxu0 0.0
        %296 = vmatpush1.msra.mxu0 0.0
        %297 = vmatprep.subr.mxu0 0.0
        %298 = vmatpush1.msra.mxu0 0.0
        %299 = vmatprep.subr.mxu0 0.0
        %300 = vmatpush1.msra.mxu0 0.0
        %301 = vmatprep.subr.mxu0 0.0
        %302 = vmatpush1.msra.mxu0 0.0
        %303 = vmatprep.subr.mxu0 0.0
        %304 = vmatpush1.msra.mxu0 0.0
        %305 = vmatprep.subr.mxu0 0.0
        %306 = vmatpush1.msra.mxu0 0.0
        %307 = vmatprep.subr.mxu0 0.0
        %308 = vmatpush1.msra.mxu0 0.0
        %309 = vmatprep.subr.mxu0 0.0
        %310 = vmatpush1.msra.mxu0 0.0
        %311 = vmatprep.subr.mxu0 0.0
        %312 = vmatpush1.msra.mxu0 0.0
        %313 = vmatprep.subr.mxu0 0.0
        %314 = vmatpush1.msra.mxu0 0.0
        %315 = vmatprep.subr.mxu0 0.0
        %316 = vmatpush1.msra.mxu0 0.0
        %317 = vmatprep.subr.mxu0 0.0
        %318 = vmatpush1.msra.mxu0 0.0
        %319 = vmatprep.subr.mxu0 0.0
        %320 = vmatpush1.msra.mxu0 0.0
        %321 = vmatprep.subr.mxu0 0.0
        %322 = vmatpush1.msra.mxu0 0.0
        %323 = vmatprep.subr.mxu0 0.0
        %324 = vmatpush1.msra.mxu0 0.0
        %325 = vmatprep.subr.mxu0 0.0
        %326 = vmatpush1.msra.mxu0 0.0
        %327 = vmatprep.mubr.f32.mxu0 0.0
        %328 = vmatmul.mubr.f32.gmra.mrb[0].mxu0 %v252
        %v329 = vpop.f32.mrb[0].mxu0
        %v330 = vadd.f32 0.0, %v329
        %v331 = vpop.f32.mrb[0].mxu0
        %v332 = vadd.f32 0.0, %v331
        %333 = vmatprep.mubr.f32.mxu0 0.0
        %334 = vmatmul.mubr.f32.gmra.mrb[0].mxu0 %v255
        %v335 = vpop.f32.mrb[0].mxu0
        %v336 = vadd.f32 0.0, %v335
        %v337 = vpop.f32.mrb[0].mxu0
        %v338 = vadd.f32 0.0, %v337
        %339 = vmatprep.mubr.f32.mxu0 0.0
        %340 = vmatmul.mubr.f32.gmra.mrb[0].mxu0 %v258
        %v341 = vpop.f32.mrb[0].mxu0
        %v342 = vadd.f32 0.0, %v341
        %v343 = vpop.f32.mrb[0].mxu0
        %v344 = vadd.f32 0.0, %v343
        %345 = vmatprep.mubr.f32.mxu0 0.0
        %346 = vmatmul.mubr.f32.gmra.mrb[0].mxu0 %v261
        %v347 = vpop.f32.mrb[0].mxu0
        %v348 = vadd.f32 0.0, %v347
        %v349 = vpop.f32.mrb[0].mxu0
        %v350 = vadd.f32 0.0, %v349
        %351 = vdwg.mxu0
        %352 = vmatprep.subr.mxu0 %v172
        %353 = vmatpush1.msra.mxu0 %v171
        %354 = vmatprep.subr.mxu0 %v181
        %355 = vmatpush1.msra.mxu0 %v180
        %356 = vmatprep.subr.mxu0 %v190
        %357 = vmatpush1.msra.mxu0 %v189
        %358 = vmatprep.subr.mxu0 %v199
        %359 = vmatpush1.msra.mxu0 %v198
        %360 = vmatprep.subr.mxu0 %v208
        %361 = vmatpush1.msra.mxu0 %v207
        %362 = vmatprep.subr.mxu0 %v217
        %363 = vmatpush1.msra.mxu0 %v216
        %364 = vmatprep.subr.mxu0 %v226
        %365 = vmatpush1.msra.mxu0 %v225
        %366 = vmatprep.subr.mxu0 %v235
        %367 = vmatpush1.msra.mxu0 %v234
        %368 = vmatprep.subr.mxu0 %v244
        %369 = vmatpush1.msra.mxu0 %v243
        %370 = vmatprep.subr.mxu0 0.0
        %371 = vmatpush1.msra.mxu0 0.0
        %372 = vmatprep.subr.mxu0 0.0
        %373 = vmatpush1.msra.mxu0 0.0
        %374 = vmatprep.subr.mxu0 0.0
        %375 = vmatpush1.msra.mxu0 0.0
        %376 = vmatprep.subr.mxu0 0.0
        %377 = vmatpush1.msra.mxu0 0.0
        %378 = vmatprep.subr.mxu0 0.0
        %379 = vmatpush1.msra.mxu0 0.0
        %380 = vmatprep.subr.mxu0 0.0
        %381 = vmatpush1.msra.mxu0 0.0
        %382 = vmatprep.subr.mxu0 0.0
        %383 = vmatpush1.msra.mxu0 0.0
        %384 = vmatprep.subr.mxu0 0.0
        %385 = vmatpush1.msra.mxu0 0.0
        %386 = vmatprep.subr.mxu0 0.0
        %387 = vmatpush1.msra.mxu0 0.0
        %388 = vmatprep.subr.mxu0 0.0
        %389 = vmatpush1.msra.mxu0 0.0
        %390 = vmatprep.subr.mxu0 0.0
        %391 = vmatpush1.msra.mxu0 0.0
        %392 = vmatprep.subr.mxu0 0.0
        %393 = vmatpush1.msra.mxu0 0.0
        %394 = vmatprep.subr.mxu0 0.0
        %395 = vmatpush1.msra.mxu0 0.0
        %396 = vmatprep.subr.mxu0 0.0
        %397 = vmatpush1.msra.mxu0 0.0
        %398 = vmatprep.subr.mxu0 0.0
        %399 = vmatpush1.msra.mxu0 0.0
        %400 = vmatprep.subr.mxu0 0.0
        %401 = vmatpush1.msra.mxu0 0.0
        %402 = vmatprep.subr.mxu0 0.0
        %403 = vmatpush1.msra.mxu0 0.0
        %404 = vmatprep.subr.mxu0 0.0
        %405 = vmatpush1.msra.mxu0 0.0
        %406 = vmatprep.subr.mxu0 0.0
        %407 = vmatpush1.msra.mxu0 0.0
        %408 = vmatprep.subr.mxu0 0.0
        %409 = vmatpush1.msra.mxu0 0.0
        %410 = vmatprep.subr.mxu0 0.0
        %411 = vmatpush1.msra.mxu0 0.0
        %412 = vmatprep.subr.mxu0 0.0
        %413 = vmatpush1.msra.mxu0 0.0
        %414 = vmatprep.subr.mxu0 0.0
        %415 = vmatpush1.msra.mxu0 0.0
        %416 = vmatprep.mubr.f32.mxu0 0.0
        %417 = vmatmul.mubr.f32.gmra.mrb[0].mxu0 %v252
        %v418 = vpop.f32.mrb[0].mxu0
        %v419 = vadd.f32 0.0, %v418
        %v420 = vpop.f32.mrb[0].mxu0
        %v421 = vadd.f32 0.0, %v420
        %422 = vmatprep.mubr.f32.mxu0 0.0
        %423 = vmatmul.mubr.f32.gmra.mrb[0].mxu0 %v255
        %v424 = vpop.f32.mrb[0].mxu0
        %v425 = vadd.f32 0.0, %v424
        %v426 = vpop.f32.mrb[0].mxu0
        %v427 = vadd.f32 0.0, %v426
        %428 = vmatprep.mubr.f32.mxu0 0.0
        %429 = vmatmul.mubr.f32.gmra.mrb[0].mxu0 %v258
        %v430 = vpop.f32.mrb[0].mxu0
        %v431 = vadd.f32 0.0, %v430
        %v432 = vpop.f32.mrb[0].mxu0
        %v433 = vadd.f32 0.0, %v432
        %434 = vmatprep.mubr.f32.mxu0 0.0
        %435 = vmatmul.mubr.f32.gmra.mrb[0].mxu0 %v261
        %v436 = vpop.f32.mrb[0].mxu0
        %v437 = vadd.f32 0.0, %v436
        %v438 = vpop.f32.mrb[0].mxu0
        %v439 = vadd.f32 0.0, %v438
        %440 = vdwg.mxu0
        %441 = vmatprep.subr.mxu0 %v174
        %442 = vmatpush1.msra.mxu0 %v173
        %443 = vmatprep.subr.mxu0 %v183
        %444 = vmatpush1.msra.mxu0 %v182
        %445 = vmatprep.subr.mxu0 %v192
        %446 = vmatpush1.msra.mxu0 %v191
        %447 = vmatprep.subr.mxu0 %v201
        %448 = vmatpush1.msra.mxu0 %v200
        %449 = vmatprep.subr.mxu0 %v210
        %450 = vmatpush1.msra.mxu0 %v209
        %451 = vmatprep.subr.mxu0 %v219
        %452 = vmatpush1.msra.mxu0 %v218
        %453 = vmatprep.subr.mxu0 %v228
        %454 = vmatpush1.msra.mxu0 %v227
        %455 = vmatprep.subr.mxu0 %v237
        %456 = vmatpush1.msra.mxu0 %v236
        %457 = vmatprep.subr.mxu0 %v246
        %458 = vmatpush1.msra.mxu0 %v245
        %459 = vmatprep.subr.mxu0 0.0
        %460 = vmatpush1.msra.mxu0 0.0
        %461 = vmatprep.subr.mxu0 0.0
        %462 = vmatpush1.msra.mxu0 0.0
        %463 = vmatprep.subr.mxu0 0.0
        %464 = vmatpush1.msra.mxu0 0.0
        %465 = vmatprep.subr.mxu0 0.0
        %466 = vmatpush1.msra.mxu0 0.0
        %467 = vmatprep.subr.mxu0 0.0
        %468 = vmatpush1.msra.mxu0 0.0
        %469 = vmatprep.subr.mxu0 0.0
        %470 = vmatpush1.msra.mxu0 0.0
        %471 = vmatprep.subr.mxu0 0.0
        %472 = vmatpush1.msra.mxu0 0.0
        %473 = vmatprep.subr.mxu0 0.0
        %474 = vmatpush1.msra.mxu0 0.0
        %475 = vmatprep.subr.mxu0 0.0
        %476 = vmatpush1.msra.mxu0 0.0
        %477 = vmatprep.subr.mxu0 0.0
        %478 = vmatpush1.msra.mxu0 0.0
        %479 = vmatprep.subr.mxu0 0.0
        %480 = vmatpush1.msra.mxu0 0.0
        %481 = vmatprep.subr.mxu0 0.0
        %482 = vmatpush1.msra.mxu0 0.0
        %483 = vmatprep.subr.mxu0 0.0
        %484 = vmatpush1.msra.mxu0 0.0
        %485 = vmatprep.subr.mxu0 0.0
        %486 = vmatpush1.msra.mxu0 0.0
        %487 = vmatprep.subr.mxu0 0.0
        %488 = vmatpush1.msra.mxu0 0.0
        %489 = vmatprep.subr.mxu0 0.0
        %490 = vmatpush1.msra.mxu0 0.0
        %491 = vmatprep.subr.mxu0 0.0
        %492 = vmatpush1.msra.mxu0 0.0
        %493 = vmatprep.subr.mxu0 0.0
        %494 = vmatpush1.msra.mxu0 0.0
        %495 = vmatprep.subr.mxu0 0.0
        %496 = vmatpush1.msra.mxu0 0.0
        %497 = vmatprep.subr.mxu0 0.0
        %498 = vmatpush1.msra.mxu0 0.0
        %499 = vmatprep.subr.mxu0 0.0
        %500 = vmatpush1.msra.mxu0 0.0
        %501 = vmatprep.subr.mxu0 0.0
        %502 = vmatpush1.msra.mxu0 0.0
        %503 = vmatprep.subr.mxu0 0.0
        %504 = vmatpush1.msra.mxu0 0.0
        %505 = vmatprep.mubr.f32.mxu0 0.0
        %506 = vmatmul.mubr.f32.gmra.mrb[0].mxu0 %v252
        %v507 = vpop.f32.mrb[0].mxu0
        %v508 = vadd.f32 0.0, %v507
        %v509 = vpop.f32.mrb[0].mxu0
        %v510 = vadd.f32 0.0, %v509
        %511 = vmatprep.mubr.f32.mxu0 0.0
        %512 = vmatmul.mubr.f32.gmra.mrb[0].mxu0 %v255
        %v513 = vpop.f32.mrb[0].mxu0
        %v514 = vadd.f32 0.0, %v513
        %v515 = vpop.f32.mrb[0].mxu0
        %v516 = vadd.f32 0.0, %v515
        %517 = vmatprep.mubr.f32.mxu0 0.0
        %518 = vmatmul.mubr.f32.gmra.mrb[0].mxu0 %v258
        %v519 = vpop.f32.mrb[0].mxu0
        %v520 = vadd.f32 0.0, %v519
        %v521 = vpop.f32.mrb[0].mxu0
        %v522 = vadd.f32 0.0, %v521
        %523 = vmatprep.mubr.f32.mxu0 0.0
        %524 = vmatmul.mubr.f32.gmra.mrb[0].mxu0 %v261
        %v525 = vpop.f32.mrb[0].mxu0
        %v526 = vadd.f32 0.0, %v525
        %v527 = vpop.f32.mrb[0].mxu0
        %v528 = vadd.f32 0.0, %v527
        %529 = vdwg.mxu0
        %530 = vmatprep.subr.mxu0 %v176
        %531 = vmatpush1.msra.mxu0 %v175
        %532 = vmatprep.subr.mxu0 %v185
        %533 = vmatpush1.msra.mxu0 %v184
        %534 = vmatprep.subr.mxu0 %v194
        %535 = vmatpush1.msra.mxu0 %v193
        %536 = vmatprep.subr.mxu0 %v203
        %537 = vmatpush1.msra.mxu0 %v202
        %538 = vmatprep.subr.mxu0 %v212
        %539 = vmatpush1.msra.mxu0 %v211
        %540 = vmatprep.subr.mxu0 %v221
        %541 = vmatpush1.msra.mxu0 %v220
        %542 = vmatprep.subr.mxu0 %v230
        %543 = vmatpush1.msra.mxu0 %v229
        %544 = vmatprep.subr.mxu0 %v239
        %545 = vmatpush1.msra.mxu0 %v238
        %546 = vmatprep.subr.mxu0 %v248
        %547 = vmatpush1.msra.mxu0 %v247
        %548 = vmatprep.subr.mxu0 0.0
        %549 = vmatpush1.msra.mxu0 0.0
        %550 = vmatprep.subr.mxu0 0.0
        %551 = vmatpush1.msra.mxu0 0.0
        %552 = vmatprep.subr.mxu0 0.0
        %553 = vmatpush1.msra.mxu0 0.0
        %554 = vmatprep.subr.mxu0 0.0
        %555 = vmatpush1.msra.mxu0 0.0
        %556 = vmatprep.subr.mxu0 0.0
        %557 = vmatpush1.msra.mxu0 0.0
        %558 = vmatprep.subr.mxu0 0.0
        %559 = vmatpush1.msra.mxu0 0.0
        %560 = vmatprep.subr.mxu0 0.0
        %561 = vmatpush1.msra.mxu0 0.0
        %562 = vmatprep.subr.mxu0 0.0
        %563 = vmatpush1.msra.mxu0 0.0
        %564 = vmatprep.subr.mxu0 0.0
        %565 = vmatpush1.msra.mxu0 0.0
        %566 = vmatprep.subr.mxu0 0.0
        %567 = vmatpush1.msra.mxu0 0.0
        %568 = vmatprep.subr.mxu0 0.0
        %569 = vmatpush1.msra.mxu0 0.0
        %570 = vmatprep.subr.mxu0 0.0
        %571 = vmatpush1.msra.mxu0 0.0
        %572 = vmatprep.subr.mxu0 0.0
        %573 = vmatpush1.msra.mxu0 0.0
        %574 = vmatprep.subr.mxu0 0.0
        %575 = vmatpush1.msra.mxu0 0.0
        %576 = vmatprep.subr.mxu0 0.0
        %577 = vmatpush1.msra.mxu0 0.0
        %578 = vmatprep.subr.mxu0 0.0
        %579 = vmatpush1.msra.mxu0 0.0
        %580 = vmatprep.subr.mxu0 0.0
        %581 = vmatpush1.msra.mxu0 0.0
        %582 = vmatprep.subr.mxu0 0.0
        %583 = vmatpush1.msra.mxu0 0.0
        %584 = vmatprep.subr.mxu0 0.0
        %585 = vmatpush1.msra.mxu0 0.0
        %586 = vmatprep.subr.mxu0 0.0
        %587 = vmatpush1.msra.mxu0 0.0
        %588 = vmatprep.subr.mxu0 0.0
        %589 = vmatpush1.msra.mxu0 0.0
        %590 = vmatprep.subr.mxu0 0.0
        %591 = vmatpush1.msra.mxu0 0.0
        %592 = vmatprep.subr.mxu0 0.0
        %593 = vmatpush1.msra.mxu0 0.0
        %594 = vmatprep.mubr.f32.mxu0 0.0
        %595 = vmatmul.mubr.f32.gmra.mrb[0].mxu0 %v252
        %v596 = vpop.f32.mrb[0].mxu0
        %v597 = vadd.f32 0.0, %v596
        %v598 = vpop.f32.mrb[0].mxu0
        %v599 = vadd.f32 0.0, %v598
        %600 = vmatprep.mubr.f32.mxu0 0.0
        %601 = vmatmul.mubr.f32.gmra.mrb[0].mxu0 %v255
        %v602 = vpop.f32.mrb[0].mxu0
        %v603 = vadd.f32 0.0, %v602
        %v604 = vpop.f32.mrb[0].mxu0
        %v605 = vadd.f32 0.0, %v604
        %606 = vmatprep.mubr.f32.mxu0 0.0
        %607 = vmatmul.mubr.f32.gmra.mrb[0].mxu0 %v258
        %v608 = vpop.f32.mrb[0].mxu0
        %v609 = vadd.f32 0.0, %v608
        %v610 = vpop.f32.mrb[0].mxu0
        %v611 = vadd.f32 0.0, %v610
        %612 = vmatprep.mubr.f32.mxu0 0.0
        %613 = vmatmul.mubr.f32.gmra.mrb[0].mxu0 %v261
        %v614 = vpop.f32.mrb[0].mxu0
        %v615 = vadd.f32 0.0, %v614
        %v616 = vpop.f32.mrb[0].mxu0
        %v617 = vadd.f32 0.0, %v616
        %618 = vdwg.mxu0
        %619 = vmatprep.subr.mxu0 0.0
        %620 = vmatpush1.msra.mxu0 %v177
        %621 = vmatprep.subr.mxu0 0.0
        %622 = vmatpush1.msra.mxu0 %v186
        %623 = vmatprep.subr.mxu0 0.0
        %624 = vmatpush1.msra.mxu0 %v195
        %625 = vmatprep.subr.mxu0 0.0
        %626 = vmatpush1.msra.mxu0 %v204
        %627 = vmatprep.subr.mxu0 0.0
        %628 = vmatpush1.msra.mxu0 %v213
        %629 = vmatprep.subr.mxu0 0.0
        %630 = vmatpush1.msra.mxu0 %v222
        %631 = vmatprep.subr.mxu0 0.0
        %632 = vmatpush1.msra.mxu0 %v231
        %633 = vmatprep.subr.mxu0 0.0
        %634 = vmatpush1.msra.mxu0 %v240
        %635 = vmatprep.subr.mxu0 0.0
        %636 = vmatpush1.msra.mxu0 %v249
        %637 = vmatprep.subr.mxu0 0.0
        %638 = vmatpush1.msra.mxu0 0.0
        %639 = vmatprep.subr.mxu0 0.0
        %640 = vmatpush1.msra.mxu0 0.0
        %641 = vmatprep.subr.mxu0 0.0
        %642 = vmatpush1.msra.mxu0 0.0
        %643 = vmatprep.subr.mxu0 0.0
        %644 = vmatpush1.msra.mxu0 0.0
        %645 = vmatprep.subr.mxu0 0.0
        %646 = vmatpush1.msra.mxu0 0.0
        %647 = vmatprep.subr.mxu0 0.0
        %648 = vmatpush1.msra.mxu0 0.0
        %649 = vmatprep.subr.mxu0 0.0
        %650 = vmatpush1.msra.mxu0 0.0
        %651 = vmatprep.subr.mxu0 0.0
        %652 = vmatpush1.msra.mxu0 0.0
        %653 = vmatprep.subr.mxu0 0.0
        %654 = vmatpush1.msra.mxu0 0.0
        %655 = vmatprep.subr.mxu0 0.0
        %656 = vmatpush1.msra.mxu0 0.0
        %657 = vmatprep.subr.mxu0 0.0
        %658 = vmatpush1.msra.mxu0 0.0
        %659 = vmatprep.subr.mxu0 0.0
        %660 = vmatpush1.msra.mxu0 0.0
        %661 = vmatprep.subr.mxu0 0.0
        %662 = vmatpush1.msra.mxu0 0.0
        %663 = vmatprep.subr.mxu0 0.0
        %664 = vmatpush1.msra.mxu0 0.0
        %665 = vmatprep.subr.mxu0 0.0
        %666 = vmatpush1.msra.mxu0 0.0
        %667 = vmatprep.subr.mxu0 0.0
        %668 = vmatpush1.msra.mxu0 0.0
        %669 = vmatprep.subr.mxu0 0.0
        %670 = vmatpush1.msra.mxu0 0.0
        %671 = vmatprep.subr.mxu0 0.0
        %672 = vmatpush1.msra.mxu0 0.0
        %673 = vmatprep.subr.mxu0 0.0
        %674 = vmatpush1.msra.mxu0 0.0
        %675 = vmatprep.subr.mxu0 0.0
        %676 = vmatpush1.msra.mxu0 0.0
        %677 = vmatprep.subr.mxu0 0.0
        %678 = vmatpush1.msra.mxu0 0.0
        %679 = vmatprep.subr.mxu0 0.0
        %680 = vmatpush1.msra.mxu0 0.0
        %681 = vmatprep.subr.mxu0 0.0
        %682 = vmatpush1.msra.mxu0 0.0
        %683 = vmatprep.mubr.f32.mxu0 0.0
        %684 = vmatmul.mubr.f32.gmra.mrb[0].mxu0 %v252
        %v685 = vpop.f32.mrb[0].mxu0
        %v686 = vadd.f32 0.0, %v685
        %v687 = vpop.f32.mrb[0].mxu0
        %688 = vmatprep.mubr.f32.mxu0 0.0
        %689 = vmatmul.mubr.f32.gmra.mrb[0].mxu0 %v255
        %v690 = vpop.f32.mrb[0].mxu0
        %v691 = vadd.f32 0.0, %v690
        %v692 = vpop.f32.mrb[0].mxu0
        %693 = vmatprep.mubr.f32.mxu0 0.0
        %694 = vmatmul.mubr.f32.gmra.mrb[0].mxu0 %v258
        %v695 = vpop.f32.mrb[0].mxu0
        %v696 = vadd.f32 0.0, %v695
        %v697 = vpop.f32.mrb[0].mxu0
        %698 = vmatprep.mubr.f32.mxu0 0.0
        %699 = vmatmul.mubr.f32.gmra.mrb[0].mxu0 %v261
        %v700 = vpop.f32.mrb[0].mxu0
        %v701 = vadd.f32 0.0, %v700
        %v702 = vpop.f32.mrb[0].mxu0
        %703 = vdwg.mxu0
        %v704 = vmax.f32 %v330, %v332
        %v705 = vmax.f32 %v336, %v338
        %v706 = vmax.f32 %v342, %v344
        %v707 = vmax.f32 %v348, %v350
        %v708 = vmax.f32 %v704, %v419
        %v709 = vmax.f32 %v705, %v425
        %v710 = vmax.f32 %v706, %v431
        %v711 = vmax.f32 %v707, %v437
        %v712 = vmax.f32 %v708, %v421
        %v713 = vmax.f32 %v709, %v427
        %v714 = vmax.f32 %v710, %v433
        %v715 = vmax.f32 %v711, %v439
        %v716 = vmax.f32 %v712, %v508
        %v717 = vmax.f32 %v713, %v514
        %v718 = vmax.f32 %v714, %v520
        %v719 = vmax.f32 %v715, %v526
        %v720 = vmax.f32 %v716, %v510
        %v721 = vmax.f32 %v717, %v516
        %v722 = vmax.f32 %v718, %v522
        %v723 = vmax.f32 %v719, %v528
        %v724 = vmax.f32 %v720, %v597
        %v725 = vmax.f32 %v721, %v603
        %v726 = vmax.f32 %v722, %v609
        %v727 = vmax.f32 %v723, %v615
        %v728 = vmax.f32 %v724, %v599
        %v729 = vmax.f32 %v725, %v605
        %v730 = vmax.f32 %v726, %v611
        %v731 = vmax.f32 %v727, %v617
        %v732 = vmax.f32 %v728, %v686
        %v733 = vmax.f32 %v729, %v691
        %v734 = vmax.f32 %v730, %v696
        %v735 = vmax.f32 %v731, %v701
        %v736 = vld [vmem:[%s2] sm:$0xff]
        %v737 = vld [vmem:[%s2 + $0x8] sm:$0xff]
        %v738 = vld [vmem:[%s2 + $0x10] sm:$0xff]
        %v739 = vld [vmem:[%s2 + $0x18] sm:$0xff]
        %741 = vset.pattern.permute.xlu0 0
        %742 = vperm.xlu0 %741, %v736
        %v743 = vpop.permute.xlu0 %742
        %746 = vset.pattern.permute.xlu0 0
        %747 = vperm.xlu0 %746, %v737
        %v748 = vpop.permute.xlu0 %747
        %751 = vset.pattern.permute.xlu0 0
        %752 = vperm.xlu0 %751, %v738
        %v753 = vpop.permute.xlu0 %752
        %756 = vset.pattern.permute.xlu0 0
        %757 = vperm.xlu0 %756, %v739
        %v758 = vpop.permute.xlu0 %757
        %v760 = vadd.f32 %v732, %v743
        %v761 = vadd.f32 %v733, %v748
        %v762 = vadd.f32 %v734, %v753
        %v763 = vadd.f32 %v735, %v758
        %v764 = vmax.f32 %v760, 0.0
        %v765 = vmax.f32 %v761, 0.0
        %v766 = vmax.f32 %v762, 0.0
        %v767 = vmax.f32 %v763, 0.0
        %768 = vst [vmem:[%s159] sm:$0xff] %v764
        %769 = vst [vmem:[%s159 + $0x8] sm:$0xff] %v765
        %770 = vst [vmem:[%s159 + $0x10] sm:$0xff] %v766
        %771 = vst [vmem:[%s159 + $0x18] sm:$0xff] %v767
        %s772 = sand.u32 %s90, 1
        %s773 = sand.u32 %s90, 1
        %s774 = smul.addr %s773, 32
        %s775 = scalar_lea.vmem [#allocation2], %s774
        // Predicated region
        $region33: #{forward_pallas.4} parent=31 // pred_check
          %p776 = pneg %p100
        $region34: #{forward_pallas.4} parent=31 // pred_check_branch
          %778 = sbr.rel (%p776) target = $region36
        $region35: #{forward_pallas.4} parent=31 // pred_region
          %s779 = smul.addr %s14, 8
          %s780 = scalar_lea.vmem %s3, %s779
          // Predicated region
          $region37: #{forward_pallas.4} parent=35 // pred_check
            _
          $region38: #{forward_pallas.4} parent=35 // pred_check_branch
            %782 = sbr.rel (0) target = $region40
          $region39: #{forward_pallas.4} parent=35 // pred_region
            // Predicated region
            $region41: #{forward_pallas.4} parent=39 // pred_check
              _
            $region42: #{forward_pallas.4} parent=39 // pred_check_branch
              %784 = sbr.rel (0) target = $region44
            $region43: #{forward_pallas.4} parent=39 // pred_region
              // Predicated region
              $region56: #{forward_pallas.4} parent=43 // pred_check
                _
              $region57: #{forward_pallas.4} parent=43 // pred_check_branch
                %805 = sbr.rel (0) target = $region59
              $region58: #{forward_pallas.4} parent=43 // pred_region
                loop: start=0, step=1, limit=1
                $region60: #{forward_pallas.4} parent=58 // loop_pre_header
                  _
                $region61: #{forward_pallas.4} parent=58 // loop_header
                  %s807 = sphi 0, %s811
                  %p808 = scmp.ge.s32.totalorder %s807, 1
                  %s812 = sphi %s775, %s775
                  %s813 = sphi %s780, %s780
                $region62: #{forward_pallas.4} parent=58 // loop_header_branch
                  %810 = sbr.rel (%p808) target = $region66
                $region63: #{forward_pallas.4} parent=58 // loop_body
                  %v814 = vld [vmem:[%s812] sm:$0xff]
                  %815 = vst [vmem:[%s813] sm:$0xff] %v814
                  %v816 = vld [vmem:[%s812 + $0x8] sm:$0xff]
                  %817 = vst [vmem:[%s813 + $0x10] sm:$0xff] %v816
                  %v818 = vld [vmem:[%s812 + $0x10] sm:$0xff]
                  %819 = vst [vmem:[%s813 + $0x20] sm:$0xff] %v818
                  %v820 = vld [vmem:[%s812 + $0x18] sm:$0xff]
                  %821 = vst [vmem:[%s813 + $0x30] sm:$0xff] %v820
                $region64: #{forward_pallas.4} parent=58 // loop_footer
                  %s811 = sadd.s32 1, %s807
                $region65: #{forward_pallas.4} parent=58 // loop_footer_branch
                  %806 = sbr.rel target = $region61
                $region66: #{forward_pallas.4} parent=58 // loop_exit
                  _
              $region59: #{forward_pallas.4} parent=43 // pred_fallthru
                _
              // Predicated region
              $region67: #{forward_pallas.4} parent=43 // pred_check
                _
              $region68: #{forward_pallas.4} parent=43 // pred_check_branch
                %823 = sbr.rel target = $region70
              $region69: #{forward_pallas.4} parent=43 // pred_region
                _
              $region70: #{forward_pallas.4} parent=43 // pred_fallthru
                _
            $region44: #{forward_pallas.4} parent=39 // pred_fallthru
              _
            // Predicated region
            $region45: #{forward_pallas.4} parent=39 // pred_check
              _
            $region46: #{forward_pallas.4} parent=39 // pred_check_branch
              %786 = sbr.rel target = $region48
            $region47: #{forward_pallas.4} parent=39 // pred_region
              loop: start=0, step=1, limit=1
              $region49: #{forward_pallas.4} parent=47 // loop_pre_header
                _
              $region50: #{forward_pallas.4} parent=47 // loop_header
                %s789 = sphi 0, %s793
                %p790 = scmp.ge.s32.totalorder %s789, 1
                %s794 = sphi %s775, %s775
                %s795 = sphi %s780, %s780
              $region51: #{forward_pallas.4} parent=47 // loop_header_branch
                %792 = sbr.rel (%p790) target = $region55
              $region52: #{forward_pallas.4} parent=47 // loop_body
                %v796 = vld [vmem:[%s794] sm:$0xff]
                %797 = vst [vmem:[%s795] sm:$0xff] %v796
                %v798 = vld [vmem:[%s794 + $0x8] sm:$0xff]
                %799 = vst [vmem:[%s795 + $0x10] sm:$0xff] %v798
                %v800 = vld [vmem:[%s794 + $0x10] sm:$0xff]
                %801 = vst [vmem:[%s795 + $0x20] sm:$0xff] %v800
                %v802 = vld [vmem:[%s794 + $0x18] sm:$0xff]
                %803 = vst [vmem:[%s795 + $0x30] sm:$0xff] %v802
              $region53: #{forward_pallas.4} parent=47 // loop_footer
                %s793 = sadd.s32 1, %s789
              $region54: #{forward_pallas.4} parent=47 // loop_footer_branch
                %788 = sbr.rel target = $region50
              $region55: #{forward_pallas.4} parent=47 // loop_exit
                _
            $region48: #{forward_pallas.4} parent=39 // pred_fallthru
              _
          $region40: #{forward_pallas.4} parent=35 // pred_fallthru
            _
          %824 = vnop
        $region36: #{forward_pallas.4} parent=31 // pred_fallthru
          _
      $region32: #{forward_pallas.4} parent=5 // pred_fallthru
        _
      %p825 = scmp.le.s32.totalorder 2, %s9
      // Predicated region
      $region71: #{forward_pallas.4} parent=5 // pred_check
        %p826 = pneg %p825
      $region72: #{forward_pallas.4} parent=5 // pred_check_branch
        %828 = sbr.rel (%p826) target = $region74
      $region73: #{forward_pallas.4} parent=5 // pred_region
        %s829 = ssub.s32 %s9, 2
        // Predicated region
        $region75: #{forward_pallas.4} parent=73 // pred_check
          %p830 = pneg %p106
        $region76: #{forward_pallas.4} parent=73 // pred_check_branch
          %832 = sbr.rel (%p830) target = $region78
        $region77: #{forward_pallas.4} parent=73 // pred_region
          %s833 = sand.u32 %s91, 1
          %s834 = sand.u32 %s91, 1
          %s835 = smul.addr %s834, 32
          %s836 = scalar_lea.vmem [#allocation2], %s835
        $region78: #{forward_pallas.4} parent=73 // pred_fallthru
          _
      $region74: #{forward_pallas.4} parent=5 // pred_fallthru
        _
    $region6: #{forward_pallas.4} parent=1 // loop_footer
      %s13 = sadd.s32 1, %s9
    $region7: #{forward_pallas.4} parent=1 // loop_footer_branch
      %8 = sbr.rel target = $region3
    $region8: #{forward_pallas.4} parent=1 // loop_exit
      _

// kernel: forward_pallas.5
$region0: #{forward_pallas.5}
  #allocation0 [shape = 'u32[]', space=smem, size = 0x4, offset = 0x4, fixed_abs, tag = 'smem constant byte address 0x4 - core index']
  #allocation1 [shape = 'u32[144,128]{1,0:T(1,128)}', space=vmem, size = 0x12000, scoped, tag = 'internal scratch']
  %s0 = inlined_call_operand.vmem [shape: f32[162,288], index: 0, kind: input, shape index: {}]
  %s1 = inlined_call_operand.vmem [shape: f32[288,64], index: 1, kind: input, shape index: {}]
  %s2 = inlined_call_operand.vmem [shape: f32[1,64], index: 2, kind: input, shape index: {}]
  %s3 = inlined_call_operand.vmem [shape: f32[576,10], index: 3, kind: input, shape index: {}]
  %s4 = inlined_call_operand.vmem [shape: f32[1,10], index: 4, kind: input, shape index: {}]
  %s5 = inlined_call_operand.hbm [shape: f32[2,10], index: 5, kind: output, shape index: {}]
  %s6 = sld [smem:[#allocation0]]
  $region30: #{forward_pallas.5} parent=0
    _
  %s8 = ssub.s32 1, %s6
  %s9 = scalar_select 0, %s8, %s6
  $region1: #{forward_pallas.5} parent=0
    #allocation2 [shape = 'u8[1024]{0}', space=vmem, size = 0x400, scoped, tag = 'output window, operand 0, single buffered']
    #allocation3 [shape = 's32[1]{0}', space=sflag, size = 0x4, scoped, tag = 'scoped memory for forward_pallas.5']
    %10 = vsyncpa [#allocation3], 0
    // Predicated region
    $region2: #{forward_pallas.5} parent=1 // pred_check
      _
    $region3: #{forward_pallas.5} parent=1 // pred_check_branch
      %12 = sbr.rel (0) target = $region5
    $region4: #{forward_pallas.5} parent=1 // pred_region
      _
    $region5: #{forward_pallas.5} parent=1 // pred_fallthru
      _
    // Predicated region
    $region6: #{forward_pallas.5} parent=1 // pred_check
      _
    $region7: #{forward_pallas.5} parent=1 // pred_check_branch
      %14 = sbr.rel (0) target = $region9
    $region8: #{forward_pallas.5} parent=1 // pred_region
      _
    $region9: #{forward_pallas.5} parent=1 // pred_fallthru
      _
    // Predicated region
    $region10: #{forward_pallas.5} parent=1 // pred_check
      _
    $region11: #{forward_pallas.5} parent=1 // pred_check_branch
      %16 = sbr.rel (0) target = $region13
    $region12: #{forward_pallas.5} parent=1 // pred_region
      _
    $region13: #{forward_pallas.5} parent=1 // pred_fallthru
      _
    // Predicated region
    $region14: #{forward_pallas.5} parent=1 // pred_check
      _
    $region15: #{forward_pallas.5} parent=1 // pred_check_branch
      %18 = sbr.rel (0) target = $region17
    $region16: #{forward_pallas.5} parent=1 // pred_region
      _
    $region17: #{forward_pallas.5} parent=1 // pred_fallthru
      _
    // Predicated region
    $region18: #{forward_pallas.5} parent=1 // pred_check
      _
    $region19: #{forward_pallas.5} parent=1 // pred_check_branch
      %20 = sbr.rel (0) target = $region21
    $region20: #{forward_pallas.5} parent=1 // pred_region
      _
    $region21: #{forward_pallas.5} parent=1 // pred_fallthru
      _
    %v21 = vld [vmem:[%s0] sm:$0xff]
    %v22 = vld [vmem:[%s0 + $0x8] sm:$0xff]
    %v23 = vld [vmem:[%s0 + $0x10] sm:$0xff]
    %v24 = vld [vmem:[%s0 + $0x18] sm:$0xff]
    %v25 = vld [vmem:[%s0 + $0x20] sm:$0xff]
    %v26 = vld [vmem:[%s0 + $0x28] sm:$0xff]
    %v27 = vld [vmem:[%s0 + $0x30] sm:$0xff]
    %v28 = vld [vmem:[%s0 + $0x38] sm:$0xff]
    %v29 = vld [vmem:[%s0 + $0x40] sm:$0xff]
    %v30 = vld [vmem:[%s0 + $0x48] sm:$0xff]
    %v31 = vld [vmem:[%s0 + $0x50] sm:$0xff]
    %v32 = vld [vmem:[%s0 + $0x58] sm:$0xff]
    %v33 = vld [vmem:[%s0 + $0x60] sm:$0xff]
    %v34 = vld [vmem:[%s0 + $0x68] sm:$0xff]
    %v35 = vld [vmem:[%s0 + $0x70] sm:$0xff]
    %v36 = vld [vmem:[%s0 + $0x78] sm:$0xff]
    %v37 = vld [vmem:[%s0 + $0x80] sm:$0xff]
    %v38 = vld [vmem:[%s0 + $0x88] sm:$0xff]
    %v39 = vld [vmem:[%s0 + $0x90] sm:$0xff]
    %v40 = vld [vmem:[%s0 + $0x98] sm:$0xff]
    %v41 = vld [vmem:[%s0 + $0xa0] sm:$0xff]
    %v42 = vld [vmem:[%s0 + $0xa8] sm:$0xff]
    %v43 = vld [vmem:[%s0 + $0xb0] sm:$0xff]
    %v44 = vld [vmem:[%s0 + $0xb8] sm:$0xff]
    %v45 = vld [vmem:[%s0 + $0xc0] sm:$0xff]
    %v46 = vld [vmem:[%s0 + $0xc8] sm:$0xff]
    %v47 = vld [vmem:[%s0 + $0xd0] sm:$0xff]
    %v48 = vld [vmem:[%s0 + $0xd8] sm:$0xff]
    %v49 = vld [vmem:[%s0 + $0xe0] sm:$0xff]
    %v50 = vld [vmem:[%s0 + $0xe8] sm:$0xff]
    %v51 = vld [vmem:[%s0 + $0xf0] sm:$0xff]
    %v52 = vld [vmem:[%s0 + $0xf8] sm:$0xff]
    %v53 = vld [vmem:[%s0 + $0x100] sm:$0xff]
    %v54 = vld [vmem:[%s0 + $0x108] sm:$0xff]
    %v55 = vld [vmem:[%s0 + $0x110] sm:$0xff]
    %v56 = vld [vmem:[%s0 + $0x118] sm:$0xff]
    %v57 = vld [vmem:[%s0 + $0x120] sm:$0xff]
    %v58 = vld [vmem:[%s0 + $0x128] sm:$0xff]
    %v59 = vld [vmem:[%s0 + $0x130] sm:$0xff]
    %v60 = vld [vmem:[%s0 + $0x138] sm:$0xff]
    %v61 = vld [vmem:[%s0 + $0x140] sm:$0xff]
    %v62 = vld [vmem:[%s0 + $0x148] sm:$0xff]
    %v63 = vld [vmem:[%s0 + $0x150] sm:$0xff]
    %v64 = vld [vmem:[%s0 + $0x158] sm:$0xff]
    %v65 = vld [vmem:[%s0 + $0x160] sm:$0xff]
    %v66 = vld [vmem:[%s0 + $0x168] sm:$0xff]
    %v67 = vld [vmem:[%s0 + $0x170] sm:$0xff]
    %v68 = vld [vmem:[%s0 + $0x178] sm:$0xff]
    %v69 = vld [vmem:[%s0 + $0x180] sm:$0xff]
    %v70 = vld [vmem:[%s0 + $0x188] sm:$0xff]
    %v71 = vld [vmem:[%s0 + $0x190] sm:$0xff]
    %v72 = vld [vmem:[%s0 + $0x198] sm:$0xff]
    %v73 = vld [vmem:[%s0 + $0x1a0] sm:$0xff]
    %v74 = vld [vmem:[%s0 + $0x1a8] sm:$0xff]
    %v75 = vld [vmem:[%s0 + $0x1b0] sm:$0xff]
    %v76 = vld [vmem:[%s0 + $0x1b8] sm:$0xff]
    %v77 = vld [vmem:[%s0 + $0x1c0] sm:$0xff]
    %v78 = vld [vmem:[%s0 + $0x1c8] sm:$0xff]
    %v79 = vld [vmem:[%s0 + $0x1d0] sm:$0xff]
    %v80 = vld [vmem:[%s0 + $0x1d8] sm:$0xff]
    %v81 = vld [vmem:[%s0 + $0x1e0] sm:$0x3]
    %v82 = vld [vmem:[%s0 + $0x1e8] sm:$0x3]
    %v83 = vld [vmem:[%s0 + $0x1f0] sm:$0x3]
    %v84 = vld [vmem:[%s1] sm:$0xff]
    %v85 = vld [vmem:[%s1 + $0x8] sm:$0xff]
    %v86 = vld [vmem:[%s1 + $0x10] sm:$0xff]
    %v87 = vld [vmem:[%s1 + $0x18] sm:$0xff]
    %v88 = vld [vmem:[%s1 + $0x20] sm:$0xff]
    %v89 = vld [vmem:[%s1 + $0x28] sm:$0xff]
    %v90 = vld [vmem:[%s1 + $0x30] sm:$0xff]
    %v91 = vld [vmem:[%s1 + $0x38] sm:$0xff]
    %v92 = vld [vmem:[%s1 + $0x40] sm:$0xff]
    %v93 = vld [vmem:[%s1 + $0x48] sm:$0xff]
    %v94 = vld [vmem:[%s1 + $0x50] sm:$0xff]
    %v95 = vld [vmem:[%s1 + $0x58] sm:$0xff]
    %v96 = vld [vmem:[%s1 + $0x60] sm:$0xff]
    %v97 = vld [vmem:[%s1 + $0x68] sm:$0xff]
    %v98 = vld [vmem:[%s1 + $0x70] sm:$0xff]
    %v99 = vld [vmem:[%s1 + $0x78] sm:$0xff]
    %v100 = vld [vmem:[%s1 + $0x80] sm:$0xff]
    %v101 = vld [vmem:[%s1 + $0x88] sm:$0xff]
    %v102 = vld [vmem:[%s1 + $0x90] sm:$0xff]
    %v103 = vld [vmem:[%s1 + $0x98] sm:$0xff]
    %v104 = vld [vmem:[%s1 + $0xa0] sm:$0xff]
    %v105 = vld [vmem:[%s1 + $0xa8] sm:$0xff]
    %v106 = vld [vmem:[%s1 + $0xb0] sm:$0xff]
    %v107 = vld [vmem:[%s1 + $0xb8] sm:$0xff]
    %v108 = vld [vmem:[%s1 + $0xc0] sm:$0xff]
    %v109 = vld [vmem:[%s1 + $0xc8] sm:$0xff]
    %v110 = vld [vmem:[%s1 + $0xd0] sm:$0xff]
    %v111 = vld [vmem:[%s1 + $0xd8] sm:$0xff]
    %v112 = vld [vmem:[%s1 + $0xe0] sm:$0xff]
    %v113 = vld [vmem:[%s1 + $0xe8] sm:$0xff]
    %v114 = vld [vmem:[%s1 + $0xf0] sm:$0xff]
    %v115 = vld [vmem:[%s1 + $0xf8] sm:$0xff]
    %v116 = vld [vmem:[%s1 + $0x100] sm:$0xff]
    %v117 = vld [vmem:[%s1 + $0x108] sm:$0xff]
    %v118 = vld [vmem:[%s1 + $0x110] sm:$0xff]
    %v119 = vld [vmem:[%s1 + $0x118] sm:$0xff]
    %vm120 = vcmask 261120
    %v122 = vsel %vm120, %v23, 0
    %v125 = vsel %vm120, %v26, 0
    %v128 = vsel %vm120, %v29, 0
    %v131 = vsel %vm120, %v32, 0
    %v134 = vsel %vm120, %v35, 0
    %v137 = vsel %vm120, %v38, 0
    %v140 = vsel %vm120, %v41, 0
    %v143 = vsel %vm120, %v44, 0
    %v146 = vsel %vm120, %v47, 0
    %v149 = vsel %vm120, %v50, 0
    %v152 = vsel %vm120, %v53, 0
    %v155 = vsel %vm120, %v56, 0
    %v158 = vsel %vm120, %v59, 0
    %v161 = vsel %vm120, %v62, 0
    %v164 = vsel %vm120, %v65, 0
    %v167 = vsel %vm120, %v68, 0
    %v170 = vsel %vm120, %v71, 0
    %v173 = vsel %vm120, %v74, 0
    %v176 = vsel %vm120, %v77, 0
    %v179 = vsel %vm120, %v80, 0
    %v182 = vsel %vm120, %v83, 0
    %184 = vmatprep.subr.mxu0 0.0
    %185 = vmatpush1.msra.mxu0 %v84
    %186 = vmatprep.subr.mxu0 0.0
    %187 = vmatpush1.msra.mxu0 %v85
    %188 = vmatprep.subr.mxu0 0.0
    %189 = vmatpush1.msra.mxu0 %v86
    %190 = vmatprep.subr.mxu0 0.0
    %191 = vmatpush1.msra.mxu0 %v87
    %192 = vmatprep.subr.mxu0 0.0
    %193 = vmatpush1.msra.mxu0 %v88
    %194 = vmatprep.subr.mxu0 0.0
    %195 = vmatpush1.msra.mxu0 %v89
    %196 = vmatprep.subr.mxu0 0.0
    %197 = vmatpush1.msra.mxu0 %v90
    %198 = vmatprep.subr.mxu0 0.0
    %199 = vmatpush1.msra.mxu0 %v91
    %200 = vmatprep.subr.mxu0 0.0
    %201 = vmatpush1.msra.mxu0 %v92
    %202 = vmatprep.subr.mxu0 0.0
    %203 = vmatpush1.msra.mxu0 %v93
    %204 = vmatprep.subr.mxu0 0.0
    %205 = vmatpush1.msra.mxu0 %v94
    %206 = vmatprep.subr.mxu0 0.0
    %207 = vmatpush1.msra.mxu0 %v95
    %208 = vmatprep.subr.mxu0 0.0
    %209 = vmatpush1.msra.mxu0 %v96
    %210 = vmatprep.subr.mxu0 0.0
    %211 = vmatpush1.msra.mxu0 %v97
    %212 = vmatprep.subr.mxu0 0.0
    %213 = vmatpush1.msra.mxu0 %v98
    %214 = vmatprep.subr.mxu0 0.0
    %215 = vmatpush1.msra.mxu0 %v99
    %216 = vmatprep.subr.mxu0 0.0
    %217 = vmatpush1.msra.mxu0 %v100
    %218 = vmatprep.subr.mxu0 0.0
    %219 = vmatpush1.msra.mxu0 %v101
    %220 = vmatprep.subr.mxu0 0.0
    %221 = vmatpush1.msra.mxu0 %v102
    %222 = vmatprep.subr.mxu0 0.0
    %223 = vmatpush1.msra.mxu0 %v103
    %224 = vmatprep.subr.mxu0 0.0
    %225 = vmatpush1.msra.mxu0 %v104
    %226 = vmatprep.subr.mxu0 0.0
    %227 = vmatpush1.msra.mxu0 %v105
    %228 = vmatprep.subr.mxu0 0.0
    %229 = vmatpush1.msra.mxu0 %v106
    %230 = vmatprep.subr.mxu0 0.0
    %231 = vmatpush1.msra.mxu0 %v107
    %232 = vmatprep.subr.mxu0 0.0
    %233 = vmatpush1.msra.mxu0 %v108
    %234 = vmatprep.subr.mxu0 0.0
    %235 = vmatpush1.msra.mxu0 %v109
    %236 = vmatprep.subr.mxu0 0.0
    %237 = vmatpush1.msra.mxu0 %v110
    %238 = vmatprep.subr.mxu0 0.0
    %239 = vmatpush1.msra.mxu0 %v111
    %240 = vmatprep.subr.mxu0 0.0
    %241 = vmatpush1.msra.mxu0 %v112
    %242 = vmatprep.subr.mxu0 0.0
    %243 = vmatpush1.msra.mxu0 %v113
    %244 = vmatprep.subr.mxu0 0.0
    %245 = vmatpush1.msra.mxu0 %v114
    %246 = vmatprep.subr.mxu0 0.0
    %247 = vmatpush1.msra.mxu0 %v115
    %248 = vmatprep.mubr.f32.mxu0 %v22
    %249 = vmatmul.mubr.f32.gmra.mrb[0].mxu0 %v21
    %v250 = vpop.f32.mrb[0].mxu0
    %v251 = vadd.f32 0.0, %v250
    %v252 = vpop.f32.mrb[0].mxu0
    %253 = vmatprep.mubr.f32.mxu0 %v25
    %254 = vmatmul.mubr.f32.gmra.mrb[0].mxu0 %v24
    %v255 = vpop.f32.mrb[0].mxu0
    %v256 = vadd.f32 0.0, %v255
    %v257 = vpop.f32.mrb[0].mxu0
    %258 = vmatprep.mubr.f32.mxu0 %v28
    %259 = vmatmul.mubr.f32.gmra.mrb[0].mxu0 %v27
    %v260 = vpop.f32.mrb[0].mxu0
    %v261 = vadd.f32 0.0, %v260
    %v262 = vpop.f32.mrb[0].mxu0
    %263 = vmatprep.mubr.f32.mxu0 %v31
    %264 = vmatmul.mubr.f32.gmra.mrb[0].mxu0 %v30
    %v265 = vpop.f32.mrb[0].mxu0
    %v266 = vadd.f32 0.0, %v265
    %v267 = vpop.f32.mrb[0].mxu0
    %268 = vmatprep.mubr.f32.mxu0 %v34
    %269 = vmatmul.mubr.f32.gmra.mrb[0].mxu0 %v33
    %v270 = vpop.f32.mrb[0].mxu0
    %v271 = vadd.f32 0.0, %v270
    %v272 = vpop.f32.mrb[0].mxu0
    %273 = vmatprep.mubr.f32.mxu0 %v37
    %274 = vmatmul.mubr.f32.gmra.mrb[0].mxu0 %v36
    %v275 = vpop.f32.mrb[0].mxu0
    %v276 = vadd.f32 0.0, %v275
    %v277 = vpop.f32.mrb[0].mxu0
    %278 = vmatprep.mubr.f32.mxu0 %v40
    %279 = vmatmul.mubr.f32.gmra.mrb[0].mxu0 %v39
    %v280 = vpop.f32.mrb[0].mxu0
    %v281 = vadd.f32 0.0, %v280
    %v282 = vpop.f32.mrb[0].mxu0
    %283 = vmatprep.mubr.f32.mxu0 %v43
    %284 = vmatmul.mubr.f32.gmra.mrb[0].mxu0 %v42
    %v285 = vpop.f32.mrb[0].mxu0
    %v286 = vadd.f32 0.0, %v285
    %v287 = vpop.f32.mrb[0].mxu0
    %288 = vmatprep.mubr.f32.mxu0 %v46
    %289 = vmatmul.mubr.f32.gmra.mrb[0].mxu0 %v45
    %v290 = vpop.f32.mrb[0].mxu0
    %v291 = vadd.f32 0.0, %v290
    %v292 = vpop.f32.mrb[0].mxu0
    %293 = vmatprep.mubr.f32.mxu0 %v49
    %294 = vmatmul.mubr.f32.gmra.mrb[0].mxu0 %v48
    %v295 = vpop.f32.mrb[0].mxu0
    %v296 = vadd.f32 0.0, %v295
    %v297 = vpop.f32.mrb[0].mxu0
    %298 = vmatprep.mubr.f32.mxu0 %v52
    %299 = vmatmul.mubr.f32.gmra.mrb[0].mxu0 %v51
    %v300 = vpop.f32.mrb[0].mxu0
    %v301 = vadd.f32 0.0, %v300
    %v302 = vpop.f32.mrb[0].mxu0
    %303 = vmatprep.mubr.f32.mxu0 %v55
    %304 = vmatmul.mubr.f32.gmra.mrb[0].mxu0 %v54
    %v305 = vpop.f32.mrb[0].mxu0
    %v306 = vadd.f32 0.0, %v305
    %v307 = vpop.f32.mrb[0].mxu0
    %308 = vmatprep.mubr.f32.mxu0 %v58
    %309 = vmatmul.mubr.f32.gmra.mrb[0].mxu0 %v57
    %v310 = vpop.f32.mrb[0].mxu0
    %v311 = vadd.f32 0.0, %v310
    %v312 = vpop.f32.mrb[0].mxu0
    %313 = vmatprep.mubr.f32.mxu0 %v61
    %314 = vmatmul.mubr.f32.gmra.mrb[0].mxu0 %v60
    %v315 = vpop.f32.mrb[0].mxu0
    %v316 = vadd.f32 0.0, %v315
    %v317 = vpop.f32.mrb[0].mxu0
    %318 = vmatprep.mubr.f32.mxu0 %v64
    %319 = vmatmul.mubr.f32.gmra.mrb[0].mxu0 %v63
    %v320 = vpop.f32.mrb[0].mxu0
    %v321 = vadd.f32 0.0, %v320
    %v322 = vpop.f32.mrb[0].mxu0
    %323 = vmatprep.mubr.f32.mxu0 %v67
    %324 = vmatmul.mubr.f32.gmra.mrb[0].mxu0 %v66
    %v325 = vpop.f32.mrb[0].mxu0
    %v326 = vadd.f32 0.0, %v325
    %v327 = vpop.f32.mrb[0].mxu0
    %328 = vmatprep.mubr.f32.mxu0 %v70
    %329 = vmatmul.mubr.f32.gmra.mrb[0].mxu0 %v69
    %v330 = vpop.f32.mrb[0].mxu0
    %v331 = vadd.f32 0.0, %v330
    %v332 = vpop.f32.mrb[0].mxu0
    %333 = vmatprep.mubr.f32.mxu0 %v73
    %334 = vmatmul.mubr.f32.gmra.mrb[0].mxu0 %v72
    %v335 = vpop.f32.mrb[0].mxu0
    %v336 = vadd.f32 0.0, %v335
    %v337 = vpop.f32.mrb[0].mxu0
    %338 = vmatprep.mubr.f32.mxu0 %v76
    %339 = vmatmul.mubr.f32.gmra.mrb[0].mxu0 %v75
    %v340 = vpop.f32.mrb[0].mxu0
    %v341 = vadd.f32 0.0, %v340
    %v342 = vpop.f32.mrb[0].mxu0
    %343 = vmatprep.mubr.f32.mxu0 %v79
    %344 = vmatmul.mubr.f32.gmra.mrb[0].mxu0 %v78
    %v345 = vpop.f32.mrb[0].mxu0
    %v346 = vadd.f32 0.0, %v345
    %v347 = vpop.f32.mrb[0].mxu0
    %348 = vmatprep.mubr.f32.mxu0 %v82
    %349 = vmatmul.mubr.f32.gmra.mrb[0].mxu0 %v81
    %v350 = vpop.f32.mrb[0].mxu0
    %v351 = vadd.f32 0.0, %v350
    %v352 = vpop.f32.mrb[0].mxu0
    %353 = vdwg.mxu0
    %354 = vmatprep.subr.mxu0 0.0
    %355 = vmatpush1.msra.mxu0 %v116
    %356 = vmatprep.subr.mxu0 0.0
    %357 = vmatpush1.msra.mxu0 %v117
    %358 = vmatprep.subr.mxu0 0.0
    %359 = vmatpush1.msra.mxu0 %v118
    %360 = vmatprep.subr.mxu0 0.0
    %361 = vmatpush1.msra.mxu0 %v119
    %362 = vmatprep.subr.mxu0 0.0
    %363 = vmatpush1.msra.mxu0 0.0
    %364 = vmatprep.subr.mxu0 0.0
    %365 = vmatpush1.msra.mxu0 0.0
    %366 = vmatprep.subr.mxu0 0.0
    %367 = vmatpush1.msra.mxu0 0.0
    %368 = vmatprep.subr.mxu0 0.0
    %369 = vmatpush1.msra.mxu0 0.0
    %370 = vmatprep.subr.mxu0 0.0
    %371 = vmatpush1.msra.mxu0 0.0
    %372 = vmatprep.subr.mxu0 0.0
    %373 = vmatpush1.msra.mxu0 0.0
    %374 = vmatprep.subr.mxu0 0.0
    %375 = vmatpush1.msra.mxu0 0.0
    %376 = vmatprep.subr.mxu0 0.0
    %377 = vmatpush1.msra.mxu0 0.0
    %378 = vmatprep.subr.mxu0 0.0
    %379 = vmatpush1.msra.mxu0 0.0
    %380 = vmatprep.subr.mxu0 0.0
    %381 = vmatpush1.msra.mxu0 0.0
    %382 = vmatprep.subr.mxu0 0.0
    %383 = vmatpush1.msra.mxu0 0.0
    %384 = vmatprep.subr.mxu0 0.0
    %385 = vmatpush1.msra.mxu0 0.0
    %386 = vmatprep.subr.mxu0 0.0
    %387 = vmatpush1.msra.mxu0 0.0
    %388 = vmatprep.subr.mxu0 0.0
    %389 = vmatpush1.msra.mxu0 0.0
    %390 = vmatprep.subr.mxu0 0.0
    %391 = vmatpush1.msra.mxu0 0.0
    %392 = vmatprep.subr.mxu0 0.0
    %393 = vmatpush1.msra.mxu0 0.0
    %394 = vmatprep.subr.mxu0 0.0
    %395 = vmatpush1.msra.mxu0 0.0
    %396 = vmatprep.subr.mxu0 0.0
    %397 = vmatpush1.msra.mxu0 0.0
    %398 = vmatprep.subr.mxu0 0.0
    %399 = vmatpush1.msra.mxu0 0.0
    %400 = vmatprep.subr.mxu0 0.0
    %401 = vmatpush1.msra.mxu0 0.0
    %402 = vmatprep.subr.mxu0 0.0
    %403 = vmatpush1.msra.mxu0 0.0
    %404 = vmatprep.subr.mxu0 0.0
    %405 = vmatpush1.msra.mxu0 0.0
    %406 = vmatprep.subr.mxu0 0.0
    %407 = vmatpush1.msra.mxu0 0.0
    %408 = vmatprep.subr.mxu0 0.0
    %409 = vmatpush1.msra.mxu0 0.0
    %410 = vmatprep.subr.mxu0 0.0
    %411 = vmatpush1.msra.mxu0 0.0
    %412 = vmatprep.subr.mxu0 0.0
    %413 = vmatpush1.msra.mxu0 0.0
    %414 = vmatprep.subr.mxu0 0.0
    %415 = vmatpush1.msra.mxu0 0.0
    %416 = vmatprep.subr.mxu0 0.0
    %417 = vmatpush1.msra.mxu0 0.0
    %418 = vmatprep.mubr.f32.mxu0 0.0
    %419 = vmatmul.mubr.f32.gmra.mrb[0].mxu0 %v122
    %v420 = vpop.f32.mrb[0].mxu0
    %v421 = vadd.f32 %v251, %v420
    %v422 = vpop.f32.mrb[0].mxu0
    %423 = vmatprep.mubr.f32.mxu0 0.0
    %424 = vmatmul.mubr.f32.gmra.mrb[0].mxu0 %v125
    %v425 = vpop.f32.mrb[0].mxu0
    %v426 = vadd.f32 %v256, %v425
    %v427 = vpop.f32.mrb[0].mxu0
    %428 = vmatprep.mubr.f32.mxu0 0.0
    %429 = vmatmul.mubr.f32.gmra.mrb[0].mxu0 %v128
    %v430 = vpop.f32.mrb[0].mxu0
    %v431 = vadd.f32 %v261, %v430
    %v432 = vpop.f32.mrb[0].mxu0
    %433 = vmatprep.mubr.f32.mxu0 0.0
    %434 = vmatmul.mubr.f32.gmra.mrb[0].mxu0 %v131
    %v435 = vpop.f32.mrb[0].mxu0
    %v436 = vadd.f32 %v266, %v435
    %v437 = vpop.f32.mrb[0].mxu0
    %438 = vmatprep.mubr.f32.mxu0 0.0
    %439 = vmatmul.mubr.f32.gmra.mrb[0].mxu0 %v134
    %v440 = vpop.f32.mrb[0].mxu0
    %v441 = vadd.f32 %v271, %v440
    %v442 = vpop.f32.mrb[0].mxu0
    %443 = vmatprep.mubr.f32.mxu0 0.0
    %444 = vmatmul.mubr.f32.gmra.mrb[0].mxu0 %v137
    %v445 = vpop.f32.mrb[0].mxu0
    %v446 = vadd.f32 %v276, %v445
    %v447 = vpop.f32.mrb[0].mxu0
    %448 = vmatprep.mubr.f32.mxu0 0.0
    %449 = vmatmul.mubr.f32.gmra.mrb[0].mxu0 %v140
    %v450 = vpop.f32.mrb[0].mxu0
    %v451 = vadd.f32 %v281, %v450
    %v452 = vpop.f32.mrb[0].mxu0
    %453 = vmatprep.mubr.f32.mxu0 0.0
    %454 = vmatmul.mubr.f32.gmra.mrb[0].mxu0 %v143
    %v455 = vpop.f32.mrb[0].mxu0
    %v456 = vadd.f32 %v286, %v455
    %v457 = vpop.f32.mrb[0].mxu0
    %458 = vmatprep.mubr.f32.mxu0 0.0
    %459 = vmatmul.mubr.f32.gmra.mrb[0].mxu0 %v146
    %v460 = vpop.f32.mrb[0].mxu0
    %v461 = vadd.f32 %v291, %v460
    %v462 = vpop.f32.mrb[0].mxu0
    %463 = vmatprep.mubr.f32.mxu0 0.0
    %464 = vmatmul.mubr.f32.gmra.mrb[0].mxu0 %v149
    %v465 = vpop.f32.mrb[0].mxu0
    %v466 = vadd.f32 %v296, %v465
    %v467 = vpop.f32.mrb[0].mxu0
    %468 = vmatprep.mubr.f32.mxu0 0.0
    %469 = vmatmul.mubr.f32.gmra.mrb[0].mxu0 %v152
    %v470 = vpop.f32.mrb[0].mxu0
    %v471 = vadd.f32 %v301, %v470
    %v472 = vpop.f32.mrb[0].mxu0
    %473 = vmatprep.mubr.f32.mxu0 0.0
    %474 = vmatmul.mubr.f32.gmra.mrb[0].mxu0 %v155
    %v475 = vpop.f32.mrb[0].mxu0
    %v476 = vadd.f32 %v306, %v475
    %v477 = vpop.f32.mrb[0].mxu0
    %478 = vmatprep.mubr.f32.mxu0 0.0
    %479 = vmatmul.mubr.f32.gmra.mrb[0].mxu0 %v158
    %v480 = vpop.f32.mrb[0].mxu0
    %v481 = vadd.f32 %v311, %v480
    %v482 = vpop.f32.mrb[0].mxu0
    %483 = vmatprep.mubr.f32.mxu0 0.0
    %484 = vmatmul.mubr.f32.gmra.mrb[0].mxu0 %v161
    %v485 = vpop.f32.mrb[0].mxu0
    %v486 = vadd.f32 %v316, %v485
    %v487 = vpop.f32.mrb[0].mxu0
    %488 = vmatprep.mubr.f32.mxu0 0.0
    %489 = vmatmul.mubr.f32.gmra.mrb[0].mxu0 %v164
    %v490 = vpop.f32.mrb[0].mxu0
    %v491 = vadd.f32 %v321, %v490
    %v492 = vpop.f32.mrb[0].mxu0
    %493 = vmatprep.mubr.f32.mxu0 0.0
    %494 = vmatmul.mubr.f32.gmra.mrb[0].mxu0 %v167
    %v495 = vpop.f32.mrb[0].mxu0
    %v496 = vadd.f32 %v326, %v495
    %v497 = vpop.f32.mrb[0].mxu0
    %498 = vmatprep.mubr.f32.mxu0 0.0
    %499 = vmatmul.mubr.f32.gmra.mrb[0].mxu0 %v170
    %v500 = vpop.f32.mrb[0].mxu0
    %v501 = vadd.f32 %v331, %v500
    %v502 = vpop.f32.mrb[0].mxu0
    %503 = vmatprep.mubr.f32.mxu0 0.0
    %504 = vmatmul.mubr.f32.gmra.mrb[0].mxu0 %v173
    %v505 = vpop.f32.mrb[0].mxu0
    %v506 = vadd.f32 %v336, %v505
    %v507 = vpop.f32.mrb[0].mxu0
    %508 = vmatprep.mubr.f32.mxu0 0.0
    %509 = vmatmul.mubr.f32.gmra.mrb[0].mxu0 %v176
    %v510 = vpop.f32.mrb[0].mxu0
    %v511 = vadd.f32 %v341, %v510
    %v512 = vpop.f32.mrb[0].mxu0
    %513 = vmatprep.mubr.f32.mxu0 0.0
    %514 = vmatmul.mubr.f32.gmra.mrb[0].mxu0 %v179
    %v515 = vpop.f32.mrb[0].mxu0
    %v516 = vadd.f32 %v346, %v515
    %v517 = vpop.f32.mrb[0].mxu0
    %518 = vmatprep.mubr.f32.mxu0 0.0
    %519 = vmatmul.mubr.f32.gmra.mrb[0].mxu0 %v182
    %v520 = vpop.f32.mrb[0].mxu0
    %v521 = vadd.f32 %v351, %v520
    %v522 = vpop.f32.mrb[0].mxu0
    %523 = vdwg.mxu0
    %vm527 = vcmask 1045504
    %v528 = vrot.slane %v431, 2
    %v529 = vrot.slane %v436, 2
    %v530 = vsel %vm527, %v528, %v529
    %v531 = vrot.slane %v441, 2
    %v532 = vsel %vm527, %v529, %v531
    %v536 = vmax.f32 %v421, %v530
    %v537 = vmax.f32 %v426, %v532
    %v538 = vmax.f32 %v431, %v531
    %vm541 = vcmask 1043456
    %v542 = vrot.slane %v441, 4
    %v543 = vrot.slane %v446, 4
    %v544 = vsel %vm541, %v542, %v543
    %v545 = vrot.slane %v451, 4
    %v546 = vsel %vm541, %v543, %v545
    %v550 = vmax.f32 %v536, %v544
    %v551 = vmax.f32 %v537, %v546
    %v552 = vmax.f32 %v538, %v545
    %vm555 = vcmask 1041408
    %v556 = vrot.slane %v451, 6
    %v557 = vrot.slane %v456, 6
    %v558 = vsel %vm555, %v556, %v557
    %v559 = vrot.slane %v461, 6
    %v560 = vsel %vm555, %v557, %v559
    %v564 = vmax.f32 %v550, %v558
    %v565 = vmax.f32 %v551, %v560
    %v566 = vmax.f32 %v552, %v559
    %v567 = vmax.f32 %v564, %v466
    %v568 = vmax.f32 %v565, %v471
    %v569 = vmax.f32 %v566, %v476
    %v573 = vrot.slane %v476, 2
    %v574 = vrot.slane %v481, 2
    %v575 = vsel %vm527, %v573, %v574
    %v576 = vrot.slane %v486, 2
    %v577 = vsel %vm527, %v574, %v576
    %v581 = vmax.f32 %v567, %v575
    %v582 = vmax.f32 %v568, %v577
    %v583 = vmax.f32 %v569, %v576
    %v586 = vrot.slane %v486, 4
    %v587 = vrot.slane %v491, 4
    %v588 = vsel %vm541, %v586, %v587
    %v589 = vrot.slane %v496, 4
    %v590 = vsel %vm541, %v587, %v589
    %v594 = vmax.f32 %v581, %v588
    %v595 = vmax.f32 %v582, %v590
    %v596 = vmax.f32 %v583, %v589
    %v599 = vrot.slane %v496, 6
    %v600 = vrot.slane %v501, 6
    %v601 = vsel %vm555, %v599, %v600
    %v602 = vrot.slane %v506, 6
    %v603 = vsel %vm555, %v600, %v602
    %v607 = vmax.f32 %v594, %v601
    %v608 = vmax.f32 %v595, %v603
    %v609 = vmax.f32 %v596, %v602
    %v610 = vmax.f32 %v607, %v511
    %v611 = vmax.f32 %v608, %v516
    %v612 = vmax.f32 %v609, %v521
    %v613 = vld [vmem:[%s2] sm:$0x1]
    %v615 = vlaneseq
    %v616 = vshrl.u32 %v615, 7
    %v617 = vsub.s32 0, %v616
    %v618 = vrot.slane %v613, %v617
    %v620 = vadd.f32 %v610, %v618
    %v621 = vadd.f32 %v611, %v618
    %v622 = vadd.f32 %v612, %v618
    %v623 = vmax.f32 %v620, 0.0
    %v624 = vmax.f32 %v621, 0.0
    %v625 = vmax.f32 %v622, 0.0
    %v627 = vrot.slane %v623, 2
    %628 = vrot.lane.b32.xlu0 %v627, 64
    %v629 = vpop.permute.xlu0 %628
    %v631 = vrot.slane %v623, 4
    %v633 = vrot.slane %v623, 6
    %634 = vrot.lane.b32.xlu0 %v633, 64
    %v635 = vpop.permute.xlu0 %634
    %v638 = vrot.slane %v624, 2
    %639 = vrot.lane.b32.xlu0 %v638, 64
    %v640 = vpop.permute.xlu0 %639
    %v642 = vrot.slane %v624, 4
    %v644 = vrot.slane %v624, 6
    %645 = vrot.lane.b32.xlu0 %v644, 64
    %v646 = vpop.permute.xlu0 %645
    %vm648 = vcmask 523264
    %v649 = vsel %vm648, %v623, %v629
    %v650 = vsel %vm648, %v631, %v635
    %v651 = vsel %vm648, %v624, %v640
    %v652 = vsel %vm648, %v642, %v646
    %v653 = vld [vmem:[%s3] sm:$0xff]
    %v654 = vld [vmem:[%s3 + $0x8] sm:$0xff]
    %v655 = vld [vmem:[%s3 + $0x10] sm:$0xff]
    %v656 = vld [vmem:[%s3 + $0x18] sm:$0xff]
    %v657 = vld [vmem:[%s3 + $0x20] sm:$0xff]
    %v658 = vld [vmem:[%s3 + $0x28] sm:$0xff]
    %v659 = vld [vmem:[%s3 + $0x30] sm:$0xff]
    %v660 = vld [vmem:[%s3 + $0x38] sm:$0xff]
    %v661 = vld [vmem:[%s3 + $0x40] sm:$0xff]
    %v662 = vld [vmem:[%s3 + $0x48] sm:$0xff]
    %v663 = vld [vmem:[%s3 + $0x50] sm:$0xff]
    %v664 = vld [vmem:[%s3 + $0x58] sm:$0xff]
    %v665 = vld [vmem:[%s3 + $0x60] sm:$0xff]
    %v666 = vld [vmem:[%s3 + $0x68] sm:$0xff]
    %v667 = vld [vmem:[%s3 + $0x70] sm:$0xff]
    %v668 = vld [vmem:[%s3 + $0x78] sm:$0xff]
    %v669 = vld [vmem:[%s3 + $0x80] sm:$0xff]
    %v670 = vld [vmem:[%s3 + $0x88] sm:$0xff]
    %v671 = vld [vmem:[%s3 + $0x90] sm:$0xff]
    %v672 = vld [vmem:[%s3 + $0x98] sm:$0xff]
    %v673 = vld [vmem:[%s3 + $0xa0] sm:$0xff]
    %v674 = vld [vmem:[%s3 + $0xa8] sm:$0xff]
    %v675 = vld [vmem:[%s3 + $0xb0] sm:$0xff]
    %v676 = vld [vmem:[%s3 + $0xb8] sm:$0xff]
    %v677 = vld [vmem:[%s3 + $0xc0] sm:$0xff]
    %v678 = vld [vmem:[%s3 + $0xc8] sm:$0xff]
    %v679 = vld [vmem:[%s3 + $0xd0] sm:$0xff]
    %v680 = vld [vmem:[%s3 + $0xd8] sm:$0xff]
    %v681 = vld [vmem:[%s3 + $0xe0] sm:$0xff]
    %v682 = vld [vmem:[%s3 + $0xe8] sm:$0xff]
    %v683 = vld [vmem:[%s3 + $0xf0] sm:$0xff]
    %v684 = vld [vmem:[%s3 + $0xf8] sm:$0xff]
    %v685 = vld [vmem:[%s3 + $0x100] sm:$0xff]
    %v686 = vld [vmem:[%s3 + $0x108] sm:$0xff]
    %v687 = vld [vmem:[%s3 + $0x110] sm:$0xff]
    %v688 = vld [vmem:[%s3 + $0x118] sm:$0xff]
    %v689 = vld [vmem:[%s3 + $0x120] sm:$0xff]
    %v690 = vld [vmem:[%s3 + $0x128] sm:$0xff]
    %v691 = vld [vmem:[%s3 + $0x130] sm:$0xff]
    %v692 = vld [vmem:[%s3 + $0x138] sm:$0xff]
    %v693 = vld [vmem:[%s3 + $0x140] sm:$0xff]
    %v694 = vld [vmem:[%s3 + $0x148] sm:$0xff]
    %v695 = vld [vmem:[%s3 + $0x150] sm:$0xff]
    %v696 = vld [vmem:[%s3 + $0x158] sm:$0xff]
    %v697 = vld [vmem:[%s3 + $0x160] sm:$0xff]
    %v698 = vld [vmem:[%s3 + $0x168] sm:$0xff]
    %v699 = vld [vmem:[%s3 + $0x170] sm:$0xff]
    %v700 = vld [vmem:[%s3 + $0x178] sm:$0xff]
    %v701 = vld [vmem:[%s3 + $0x180] sm:$0xff]
    %v702 = vld [vmem:[%s3 + $0x188] sm:$0xff]
    %v703 = vld [vmem:[%s3 + $0x190] sm:$0xff]
    %v704 = vld [vmem:[%s3 + $0x198] sm:$0xff]
    %v705 = vld [vmem:[%s3 + $0x1a0] sm:$0xff]
    %v706 = vld [vmem:[%s3 + $0x1a8] sm:$0xff]
    %v707 = vld [vmem:[%s3 + $0x1b0] sm:$0xff]
    %v708 = vld [vmem:[%s3 + $0x1b8] sm:$0xff]
    %v709 = vld [vmem:[%s3 + $0x1c0] sm:$0xff]
    %v710 = vld [vmem:[%s3 + $0x1c8] sm:$0xff]
    %v711 = vld [vmem:[%s3 + $0x1d0] sm:$0xff]
    %v712 = vld [vmem:[%s3 + $0x1d8] sm:$0xff]
    %v713 = vld [vmem:[%s3 + $0x1e0] sm:$0xff]
    %v714 = vld [vmem:[%s3 + $0x1e8] sm:$0xff]
    %v715 = vld [vmem:[%s3 + $0x1f0] sm:$0xff]
    %v716 = vld [vmem:[%s3 + $0x1f8] sm:$0xff]
    %v717 = vld [vmem:[%s3 + $0x200] sm:$0xff]
    %v718 = vld [vmem:[%s3 + $0x208] sm:$0xff]
    %v719 = vld [vmem:[%s3 + $0x210] sm:$0xff]
    %v720 = vld [vmem:[%s3 + $0x218] sm:$0xff]
    %v721 = vld [vmem:[%s3 + $0x220] sm:$0xff]
    %v722 = vld [vmem:[%s3 + $0x228] sm:$0xff]
    %v723 = vld [vmem:[%s3 + $0x230] sm:$0xff]
    %v724 = vld [vmem:[%s3 + $0x238] sm:$0xff]
    %v725 = vld [vmem:[%s4] sm:$0x1]
    %v727 = vlaneseq
    %v728 = vshrl.u32 %v727, 7
    %v729 = vsub.s32 0, %v728
    %v730 = vrot.slane %v725, %v729
    %v733 = vsel %vm648, %v625, 0
    %735 = vmatprep.subr.mxu0 0.0
    %736 = vmatpush1.msra.mxu0 %v653
    %737 = vmatprep.subr.mxu0 0.0
    %738 = vmatpush1.msra.mxu0 %v654
    %739 = vmatprep.subr.mxu0 0.0
    %740 = vmatpush1.msra.mxu0 %v655
    %741 = vmatprep.subr.mxu0 0.0
    %742 = vmatpush1.msra.mxu0 %v656
    %743 = vmatprep.subr.mxu0 0.0
    %744 = vmatpush1.msra.mxu0 %v657
    %745 = vmatprep.subr.mxu0 0.0
    %746 = vmatpush1.msra.mxu0 %v658
    %747 = vmatprep.subr.mxu0 0.0
    %748 = vmatpush1.msra.mxu0 %v659
    %749 = vmatprep.subr.mxu0 0.0
    %750 = vmatpush1.msra.mxu0 %v660
    %751 = vmatprep.subr.mxu0 0.0
    %752 = vmatpush1.msra.mxu0 %v661
    %753 = vmatprep.subr.mxu0 0.0
    %754 = vmatpush1.msra.mxu0 %v662
    %755 = vmatprep.subr.mxu0 0.0
    %756 = vmatpush1.msra.mxu0 %v663
    %757 = vmatprep.subr.mxu0 0.0
    %758 = vmatpush1.msra.mxu0 %v664
    %759 = vmatprep.subr.mxu0 0.0
    %760 = vmatpush1.msra.mxu0 %v665
    %761 = vmatprep.subr.mxu0 0.0
    %762 = vmatpush1.msra.mxu0 %v666
    %763 = vmatprep.subr.mxu0 0.0
    %764 = vmatpush1.msra.mxu0 %v667
    %765 = vmatprep.subr.mxu0 0.0
    %766 = vmatpush1.msra.mxu0 %v668
    %767 = vmatprep.subr.mxu0 0.0
    %768 = vmatpush1.msra.mxu0 %v669
    %769 = vmatprep.subr.mxu0 0.0
    %770 = vmatpush1.msra.mxu0 %v670
    %771 = vmatprep.subr.mxu0 0.0
    %772 = vmatpush1.msra.mxu0 %v671
    %773 = vmatprep.subr.mxu0 0.0
    %774 = vmatpush1.msra.mxu0 %v672
    %775 = vmatprep.subr.mxu0 0.0
    %776 = vmatpush1.msra.mxu0 %v673
    %777 = vmatprep.subr.mxu0 0.0
    %778 = vmatpush1.msra.mxu0 %v674
    %779 = vmatprep.subr.mxu0 0.0
    %780 = vmatpush1.msra.mxu0 %v675
    %781 = vmatprep.subr.mxu0 0.0
    %782 = vmatpush1.msra.mxu0 %v676
    %783 = vmatprep.subr.mxu0 0.0
    %784 = vmatpush1.msra.mxu0 %v677
    %785 = vmatprep.subr.mxu0 0.0
    %786 = vmatpush1.msra.mxu0 %v678
    %787 = vmatprep.subr.mxu0 0.0
    %788 = vmatpush1.msra.mxu0 %v679
    %789 = vmatprep.subr.mxu0 0.0
    %790 = vmatpush1.msra.mxu0 %v680
    %791 = vmatprep.subr.mxu0 0.0
    %792 = vmatpush1.msra.mxu0 %v681
    %793 = vmatprep.subr.mxu0 0.0
    %794 = vmatpush1.msra.mxu0 %v682
    %795 = vmatprep.subr.mxu0 0.0
    %796 = vmatpush1.msra.mxu0 %v683
    %797 = vmatprep.subr.mxu0 0.0
    %798 = vmatpush1.msra.mxu0 %v684
    %799 = vmatprep.mubr.f32.mxu0 %v650
    %800 = vmatmul.mubr.f32.gmra.mrb[0].mxu0 %v649
    %v801 = vpop.f32.mrb[0].mxu0
    %v802 = vadd.f32 %v730, %v801
    %v803 = vpop.f32.mrb[0].mxu0
    %804 = vdwg.mxu0
    %805 = vmatprep.subr.mxu0 0.0
    %806 = vmatpush1.msra.mxu0 %v685
    %807 = vmatprep.subr.mxu0 0.0
    %808 = vmatpush1.msra.mxu0 %v686
    %809 = vmatprep.subr.mxu0 0.0
    %810 = vmatpush1.msra.mxu0 %v687
    %811 = vmatprep.subr.mxu0 0.0
    %812 = vmatpush1.msra.mxu0 %v688
    %813 = vmatprep.subr.mxu0 0.0
    %814 = vmatpush1.msra.mxu0 %v689
    %815 = vmatprep.subr.mxu0 0.0
    %816 = vmatpush1.msra.mxu0 %v690
    %817 = vmatprep.subr.mxu0 0.0
    %818 = vmatpush1.msra.mxu0 %v691
    %819 = vmatprep.subr.mxu0 0.0
    %820 = vmatpush1.msra.mxu0 %v692
    %821 = vmatprep.subr.mxu0 0.0
    %822 = vmatpush1.msra.mxu0 %v693
    %823 = vmatprep.subr.mxu0 0.0
    %824 = vmatpush1.msra.mxu0 %v694
    %825 = vmatprep.subr.mxu0 0.0
    %826 = vmatpush1.msra.mxu0 %v695
    %827 = vmatprep.subr.mxu0 0.0
    %828 = vmatpush1.msra.mxu0 %v696
    %829 = vmatprep.subr.mxu0 0.0
    %830 = vmatpush1.msra.mxu0 %v697
    %831 = vmatprep.subr.mxu0 0.0
    %832 = vmatpush1.msra.mxu0 %v698
    %833 = vmatprep.subr.mxu0 0.0
    %834 = vmatpush1.msra.mxu0 %v699
    %835 = vmatprep.subr.mxu0 0.0
    %836 = vmatpush1.msra.mxu0 %v700
    %837 = vmatprep.subr.mxu0 0.0
    %838 = vmatpush1.msra.mxu0 %v701
    %839 = vmatprep.subr.mxu0 0.0
    %840 = vmatpush1.msra.mxu0 %v702
    %841 = vmatprep.subr.mxu0 0.0
    %842 = vmatpush1.msra.mxu0 %v703
    %843 = vmatprep.subr.mxu0 0.0
    %844 = vmatpush1.msra.mxu0 %v704
    %845 = vmatprep.subr.mxu0 0.0
    %846 = vmatpush1.msra.mxu0 %v705
    %847 = vmatprep.subr.mxu0 0.0
    %848 = vmatpush1.msra.mxu0 %v706
    %849 = vmatprep.subr.mxu0 0.0
    %850 = vmatpush1.msra.mxu0 %v707
    %851 = vmatprep.subr.mxu0 0.0
    %852 = vmatpush1.msra.mxu0 %v708
    %853 = vmatprep.subr.mxu0 0.0
    %854 = vmatpush1.msra.mxu0 %v709
    %855 = vmatprep.subr.mxu0 0.0
    %856 = vmatpush1.msra.mxu0 %v710
    %857 = vmatprep.subr.mxu0 0.0
    %858 = vmatpush1.msra.mxu0 %v711
    %859 = vmatprep.subr.mxu0 0.0
    %860 = vmatpush1.msra.mxu0 %v712
    %861 = vmatprep.subr.mxu0 0.0
    %862 = vmatpush1.msra.mxu0 %v713
    %863 = vmatprep.subr.mxu0 0.0
    %864 = vmatpush1.msra.mxu0 %v714
    %865 = vmatprep.subr.mxu0 0.0
    %866 = vmatpush1.msra.mxu0 %v715
    %867 = vmatprep.subr.mxu0 0.0
    %868 = vmatpush1.msra.mxu0 %v716
    %869 = vmatprep.mubr.f32.mxu0 %v652
    %870 = vmatmul.mubr.f32.gmra.mrb[0].mxu0 %v651
    %v871 = vpop.f32.mrb[0].mxu0
    %v872 = vadd.f32 %v802, %v871
    %v873 = vpop.f32.mrb[0].mxu0
    %874 = vdwg.mxu0
    %875 = vmatprep.subr.mxu0 0.0
    %876 = vmatpush1.msra.mxu0 %v717
    %877 = vmatprep.subr.mxu0 0.0
    %878 = vmatpush1.msra.mxu0 %v718
    %879 = vmatprep.subr.mxu0 0.0
    %880 = vmatpush1.msra.mxu0 %v719
    %881 = vmatprep.subr.mxu0 0.0
    %882 = vmatpush1.msra.mxu0 %v720
    %883 = vmatprep.subr.mxu0 0.0
    %884 = vmatpush1.msra.mxu0 %v721
    %885 = vmatprep.subr.mxu0 0.0
    %886 = vmatpush1.msra.mxu0 %v722
    %887 = vmatprep.subr.mxu0 0.0
    %888 = vmatpush1.msra.mxu0 %v723
    %889 = vmatprep.subr.mxu0 0.0
    %890 = vmatpush1.msra.mxu0 %v724
    %891 = vmatprep.subr.mxu0 0.0
    %892 = vmatpush1.msra.mxu0 0.0
    %893 = vmatprep.subr.mxu0 0.0
    %894 = vmatpush1.msra.mxu0 0.0
    %895 = vmatprep.subr.mxu0 0.0
    %896 = vmatpush1.msra.mxu0 0.0
    %897 = vmatprep.subr.mxu0 0.0
    %898 = vmatpush1.msra.mxu0 0.0
    %899 = vmatprep.subr.mxu0 0.0
    %900 = vmatpush1.msra.mxu0 0.0
    %901 = vmatprep.subr.mxu0 0.0
    %902 = vmatpush1.msra.mxu0 0.0
    %903 = vmatprep.subr.mxu0 0.0
    %904 = vmatpush1.msra.mxu0 0.0
    %905 = vmatprep.subr.mxu0 0.0
    %906 = vmatpush1.msra.mxu0 0.0
    %907 = vmatprep.subr.mxu0 0.0
    %908 = vmatpush1.msra.mxu0 0.0
    %909 = vmatprep.subr.mxu0 0.0
    %910 = vmatpush1.msra.mxu0 0.0
    %911 = vmatprep.subr.mxu0 0.0
    %912 = vmatpush1.msra.mxu0 0.0
    %913 = vmatprep.subr.mxu0 0.0
    %914 = vmatpush1.msra.mxu0 0.0
    %915 = vmatprep.subr.mxu0 0.0
    %916 = vmatpush1.msra.mxu0 0.0
    %917 = vmatprep.subr.mxu0 0.0
    %918 = vmatpush1.msra.mxu0 0.0
    %919 = vmatprep.subr.mxu0 0.0
    %920 = vmatpush1.msra.mxu0 0.0
    %921 = vmatprep.subr.mxu0 0.0
    %922 = vmatpush1.msra.mxu0 0.0
    %923 = vmatprep.subr.mxu0 0.0
    %924 = vmatpush1.msra.mxu0 0.0
    %925 = vmatprep.subr.mxu0 0.0
    %926 = vmatpush1.msra.mxu0 0.0
    %927 = vmatprep.subr.mxu0 0.0
    %928 = vmatpush1.msra.mxu0 0.0
    %929 = vmatprep.subr.mxu0 0.0
    %930 = vmatpush1.msra.mxu0 0.0
    %931 = vmatprep.subr.mxu0 0.0
    %932 = vmatpush1.msra.mxu0 0.0
    %933 = vmatprep.subr.mxu0 0.0
    %934 = vmatpush1.msra.mxu0 0.0
    %935 = vmatprep.subr.mxu0 0.0
    %936 = vmatpush1.msra.mxu0 0.0
    %937 = vmatprep.subr.mxu0 0.0
    %938 = vmatpush1.msra.mxu0 0.0
    %939 = vmatprep.mubr.f32.mxu0 0.0
    %940 = vmatmul.mubr.f32.gmra.mrb[0].mxu0 %v733
    %v941 = vpop.f32.mrb[0].mxu0
    %v942 = vadd.f32 %v872, %v941
    %v943 = vpop.f32.mrb[0].mxu0
    %944 = vdwg.mxu0
    %vm945 = vcmask 74752
    %v946 = vsel %vm945, %v942, -inf
    %947 = vmax.xlane.f32.xlu0 %v946
    %v948 = vpop.xlane.xlu0 %947
    %v949 = vsub.f32 %v942, %v948
    %v950 = vmul.f32 %v949, 1.442695
    %v951 = vpow.pop %v950
    %v952 = vsel %vm945, %v951, 0.0
    %953 = vadd.xlane.f32.xlu0 %v952
    %v954 = vpop.xlane.xlu0 %953
    %v955 = vrcp.pop %v954
    %v956 = vmul.f32 %v954, %v955
    %v957 = vsub.f32 2.0, %v956
    %v958 = vmul.f32 %v955, %v957
    %v959 = vmul.f32 %v951, %v958
    %960 = vst.msk [vmem:[#allocation2] sm:$0x3] %vm945, %v959
    // Predicated region
    $region22: #{forward_pallas.5} parent=1 // pred_check
      _
    $region23: #{forward_pallas.5} parent=1 // pred_check_branch
      %962 = sbr.rel (0) target = $region25
    $region24: #{forward_pallas.5} parent=1 // pred_region
      %s964 = ssub.s32 32, 32
      %965 = vsyncadd [#allocation3], %s964
      %s967 = sshll.u32 [#allocation2], 4
      %s968 = int_to_ptr.vmem [resolvable:$true] %s967
      %970 = dma.vmem_to_hbm [thread:$0]  %s968, 32, %s5, [#allocation3]
    $region25: #{forward_pallas.5} parent=1 // pred_fallthru
      _
    // Predicated region
    $region26: #{forward_pallas.5} parent=1 // pred_check
      _
    $region27: #{forward_pallas.5} parent=1 // pred_check_branch
      %972 = sbr.rel (0) target = $region29
    $region28: #{forward_pallas.5} parent=1 // pred_region
      %973 = dma.done [#allocation3], 32
    $region29: #{forward_pallas.5} parent=1 // pred_fallthru
      _
    %974 = vsyncpa [#allocation3], 1

</llo_original>
